<compile_context>
chip_gen: v6e
topology: v6e:2x2x1
jax: 0.10.0
libtpu: 0.0.40
codegen_flags: <defaults>
</compile_context>

<pallas_src>
import functools

import jax
import jax.numpy as jnp
from jax import lax
from jax.experimental import pallas as pl
from jax.experimental.pallas import tpu as pltpu


# ------------------------------ tiling helpers ------------------------------ #

def _round_up(x, m):
    return ((x + m - 1) // m) * m


def _pick_row_tile(H, W, Cin, Coutp, target_pixels=1024,
                   vmem_budget=20 * 1024 * 1024):
    """Pick the output-row strip height TR.

    Constraints:
      * TR divides H (strips tile the image exactly -> BN stats stay exact).
      * TR*W is a multiple of 128 (lane-dense output store) or TR == H.
      * estimated per-step VMEM footprint stays within a v7x-safe budget.
    Prefers the largest TR with TR*W <= target_pixels (good MXU M dimension,
    amortizes the ~0.35us/step grid overhead)."""
    K = 9 * Cin

    def footprint(tr):
        trw = tr * W
        strip = (tr + 2) * (W + 2) * Cin * 4
        patches = trw * K * 4
        acc = trw * Coutp * 4
        wts = K * Coutp * 4
        out = trw * Coutp * 4
        # double-buffered input/output blocks + in-VMEM temporaries + weights
        return 2 * strip + 2 * out + patches + acc + wts

    cands = [t for t in range(1, H + 1)
             if H % t == 0 and ((t * W) % 128 == 0 or t == H)]
    fitting = [t for t in cands if footprint(t) <= vmem_budget] or [min(cands)]
    good = [t for t in fitting if t * W <= target_pixels]
    tr = max(good) if good else min(fitting)
    return tr, footprint(tr)


# ------------------------------ Pallas kernels ------------------------------ #

def _make_kernels(TR, W, Cin, Cout):
    KH = KW = 3

    def assemble_patches(strip):
        # strip: (TR+2, W+2, Cin) -> im2col slab (TR*W, 9*Cin), fully in VMEM.
        cols = []
        for dy in range(KH):
            for dx in range(KW):
                s = strip[dy:dy + TR, dx:dx + W, :]            # (TR, W, Cin)
                cols.append(s.reshape(TR * W, Cin))
        return jnp.concatenate(cols, axis=-1)                  # (TR*W, 9*Cin)

    def stats_kernel(xh_ref, w_ref, stat_ref):
        """Per-strip conv matmul -> per-channel sum / sum-of-squares only."""
        patches = assemble_patches(xh_ref[...])
        acc = jnp.dot(patches, w_ref[...],
                      preferred_element_type=jnp.float32)      # (TR*W, Coutp)
        s1 = jnp.sum(acc, axis=0, keepdims=True)               # (1, Coutp)
        s2 = jnp.sum(acc * acc, axis=0, keepdims=True)         # (1, Coutp)
        stat_ref[...] = jnp.concatenate([s1, s2], axis=0)      # (2, Coutp)

    def fused_kernel(xh_ref, w_ref, scale_ref, shift_ref, out_ref):
        """Conv recompute + BN affine + tanh, stored NCHW-flat (Cout, TR*W)."""
        patches = assemble_patches(xh_ref[...])
        acc = jnp.dot(patches, w_ref[...],
                      preferred_element_type=jnp.float32)      # (TR*W, Coutp)
        # Channels -> sublanes; keep only the real Cout channels so tanh (EUP)
        # and the HBM store never touch padded lanes.
        acc_t = acc.T[:Cout, :]                                 # (Cout, TR*W)
        y = jnp.tanh(acc_t * scale_ref[...] + shift_ref[...])
        out_ref[...] = y.astype(out_ref.dtype)

    return stats_kernel, fused_kernel


# --------------------------------- Wrapper ----------------------------------- #

@jax.jit
def conv_block_tanh(x_nchw, w_oihw, bias, gamma, beta, eps=1e-5):
    """Forward pass of ConvBlock_Tanh (training-mode BatchNorm, as in the
    default-constructed PyTorch module).  `bias` is accepted for signature
    parity but cancels exactly under train-mode BN, so it is not applied."""
    del bias  # exact no-op: train-mode BN mean absorbs it, variance unchanged

    N, Cin, H, W = x_nchw.shape
    Cout, Cin_w, KH, KW = w_oihw.shape
    assert (KH, KW) == (3, 3) and Cin_w == Cin

    K = 9 * Cin
    Coutp = _round_up(Cout, 128)                 # lane-dense channel dim
    TR, footprint = _pick_row_tile(H, W, Cin, Coutp)
    Ht = H // TR
    Wp = W + 2
    TRW = TR * W
    M = H * W

    # Generation-aware VMEM limit: headroom over the estimated footprint but
    # never above v7x's 64 MiB physical VMEM (v5e/v6e have 128 MiB).
    vmem_limit = int(min(64 * 1024 * 1024,
                         max(32 * 1024 * 1024, 2 * footprint)))

    f32 = jnp.float32

    # ---- layout prep (single pass over the input) ---------------------------
    x_nhwc = jnp.transpose(x_nchw, (0, 2, 3, 1)).astype(f32)
    xp = jnp.pad(x_nhwc, ((0, 0), (1, 1), (1, 1), (0, 0)))     # (N, H+2, Wp, Cin)
    if Ht == 1:
        xh = xp[:, None]                                        # (N, 1, H+2, Wp, Cin)
    else:
        # halo'd row strips: ~1x copy (2/TR duplication); non-overlapping
        # blocks for the kernel, replaces the old 9x im2col patch tensor.
        xh = jnp.stack([xp[:, t * TR:t * TR + TR + 2] for t in range(Ht)],
                       axis=1)                                  # (N, Ht, TR+2, Wp, Cin)

    # weights: OIHW -> (ky, kx, cin, cout) -> (9*Cin, Cout), zero-pad lanes.
    w_mat = jnp.transpose(w_oihw, (2, 3, 1, 0)).reshape(K, Cout).astype(f32)
    w_mat = jnp.pad(w_mat, ((0, 0), (0, Coutp - Cout)))

    stats_kernel, fused_kernel = _make_kernels(TR, W, Cin, Cout)

    xh_spec = pl.BlockSpec((None, None, TR + 2, Wp, Cin),
                           lambda n, t: (n, t, 0, 0, 0))
    w_spec = pl.BlockSpec((K, Coutp), lambda n, t: (0, 0))

    matmul_flops = 2 * N * M * K * Coutp
    xh_bytes = xh.size * 4
    w_bytes = w_mat.size * 4

    # ---- Pass 1: stats only (no conv intermediate hits HBM) -----------------
    stats = pl.pallas_call(
        stats_kernel,
        out_shape=jax.ShapeDtypeStruct((N, Ht, 2, Coutp), f32),
        grid_spec=pltpu.PrefetchScalarGridSpec(
            num_scalar_prefetch=0,
            grid=(N, Ht),
            in_specs=[xh_spec, w_spec],
            out_specs=pl.BlockSpec((None, None, 2, Coutp),
                                   lambda n, t: (n, t, 0, 0)),
        ),
        compiler_params=pltpu.CompilerParams(
            dimension_semantics=("parallel", "parallel"),
            vmem_limit_bytes=vmem_limit),
        cost_estimate=pl.CostEstimate(
            flops=matmul_flops, transcendentals=0,
            bytes_accessed=xh_bytes + w_bytes + N * Ht * 2 * Coutp * 4),
    )(xh, w_mat)

    # ---- BatchNorm statistics (tiny wrapper glue, reduced over strips) ------
    # TODO(synk): E[x^2]-E[x]^2 in f32 loses precision when |mean| >> std;
    # switch to per-strip centered sums / Welford merge if that regime matters.
    count = jnp.asarray(N * M, f32)
    ssum = jnp.sum(stats[:, :, 0, :Cout], axis=(0, 1))          # (Cout,)
    ssq = jnp.sum(stats[:, :, 1, :Cout], axis=(0, 1))
    mean = ssum / count
    var = jnp.maximum(ssq / count - mean * mean, 0.0)           # clamp: no sqrt(<0)
    invstd = lax.rsqrt(var + jnp.asarray(eps, f32))
    g = gamma.astype(f32) * invstd
    scale = g.reshape(Cout, 1)
    shift = (beta.astype(f32) - mean * g).reshape(Cout, 1)

    # ---- Pass 2: fused conv recompute + BN affine + tanh, NCHW-flat output --
    y_flat = pl.pallas_call(
        fused_kernel,
        out_shape=jax.ShapeDtypeStruct((N, Cout, M), x_nchw.dtype),
        grid_spec=pltpu.PrefetchScalarGridSpec(
            num_scalar_prefetch=0,
            grid=(N, Ht),
            in_specs=[xh_spec, w_spec,
                      pl.BlockSpec((Cout, 1), lambda n, t: (0, 0)),
                      pl.BlockSpec((Cout, 1), lambda n, t: (0, 0))],
            out_specs=pl.BlockSpec((None, Cout, TRW), lambda n, t: (n, 0, t)),
        ),
        compiler_params=pltpu.CompilerParams(
            dimension_semantics=("parallel", "parallel"),
            vmem_limit_bytes=vmem_limit),
        cost_estimate=pl.CostEstimate(
            flops=matmul_flops + 3 * N * M * Cout,
            transcendentals=N * M * Cout,
            bytes_accessed=xh_bytes + w_bytes + N * M * Cout * 4),
    )(xh, w_mat, scale, shift)

    # metadata-only reshape: (N, Cout, H*W) -> (N, Cout, H, W)
    return y_flat.reshape(N, Cout, H, W)


# ----------------------------- Pure-JAX reference ---------------------------- #

def conv_block_tanh_ref(x_nchw, w_oihw, bias, gamma, beta, eps=1e-5):
    conv = lax.conv_general_dilated(
        x_nchw, w_oihw, window_strides=(1, 1),
        padding=((1, 1), (1, 1)),
        dimension_numbers=("NCHW", "OIHW", "NCHW"))
    conv = conv + bias[None, :, None, None]
    mean = conv.mean(axis=(0, 2, 3), keepdims=True)
    var = conv.var(axis=(0, 2, 3), keepdims=True)
    y = (conv - mean) / jnp.sqrt(var + eps)
    y = y * gamma[None, :, None, None] + beta[None, :, None, None]
    return jnp.tanh(y)


# ----------------------------------- Main ------------------------------------ #

if __name__ == "__main__":
    N, Cin, Cout, H, W = 2, 4, 8, 16, 16
    key = jax.random.PRNGKey(0)
    kx, kw, kb, kg, kbeta = jax.random.split(key, 5)

    x = jax.random.normal(kx, (N, Cin, H, W), jnp.float32)
    w = 0.1 * jax.random.normal(kw, (Cout, Cin, 3, 3), jnp.float32)
    b = 0.1 * jax.random.normal(kb, (Cout,), jnp.float32)
    gamma = 1.0 + 0.1 * jax.random.normal(kg, (Cout,), jnp.float32)
    beta = 0.1 * jax.random.normal(kbeta, (Cout,), jnp.float32)

    y = jax.block_until_ready(conv_block_tanh(x, w, b, gamma, beta))
    y_ref = jax.block_until_ready(conv_block_tanh_ref(x, w, b, gamma, beta))

    assert y.shape == (N, Cout, H, W)
    max_err = float(jnp.max(jnp.abs(y - y_ref)))
    assert jnp.allclose(y, y_ref, atol=1e-4, rtol=1e-4), max_err
    print("KERNEL_OK")
</pallas_src>

<mosaic_0001>
module attributes {stable_mosaic.version = 11 : i64} {
  func.func @stats_kernel(%arg0: i32, %arg1: i32, %arg2: memref<1x1x18x18x4xf32, #tpu.memory_space<vmem>>, %arg3: memref<36x128xf32, #tpu.memory_space<vmem>>, %arg4: memref<1x1x2x128xf32, #tpu.memory_space<vmem>>) attributes {dimension_semantics = [#tpu.dimension_semantics<parallel>, #tpu.dimension_semantics<parallel>], iteration_bounds = array<i64: 2, 1>, scalar_prefetch = 0 : i64, scratch_operands = 0 : i64, tpu.core_type = #tpu.core_type<tc>, window_params = [{transform_indices = @transform_0, window_bounds = array<i64: 1, 1, 18, 18, 4>}, {pipeline_mode = #tpu.pipeline_mode<synchronous>, transform_indices = @transform_1, window_bounds = array<i64: 36, 128>}, {transform_indices = @transform_2, window_bounds = array<i64: 1, 1, 2, 128>}]} {
    %c0 = arith.constant 0 : index
    %c0_0 = arith.constant 0 : index
    %c0_1 = arith.constant 0 : index
    %c0_2 = arith.constant 0 : index
    %c0_3 = arith.constant 0 : index
    %0 = vector.load %arg2[%c0, %c0_0, %c0_1, %c0_2, %c0_3] : memref<1x1x18x18x4xf32, #tpu.memory_space<vmem>>, vector<1x1x18x18x4xf32>
    %1 = vector.shape_cast %0 : vector<1x1x18x18x4xf32> to vector<18x18x4xf32>
    %2 = vector.extract_strided_slice %1 {offsets = [0, 0, 0], sizes = [16, 16, 4], strides = [1, 1, 1]} : vector<18x18x4xf32> to vector<16x16x4xf32>
    %3 = vector.shape_cast %2 : vector<16x16x4xf32> to vector<256x4xf32>
    %4 = vector.extract_strided_slice %1 {offsets = [0, 1, 0], sizes = [16, 16, 4], strides = [1, 1, 1]} : vector<18x18x4xf32> to vector<16x16x4xf32>
    %5 = vector.shape_cast %4 : vector<16x16x4xf32> to vector<256x4xf32>
    %6 = vector.extract_strided_slice %1 {offsets = [0, 2, 0], sizes = [16, 16, 4], strides = [1, 1, 1]} : vector<18x18x4xf32> to vector<16x16x4xf32>
    %7 = vector.shape_cast %6 : vector<16x16x4xf32> to vector<256x4xf32>
    %8 = vector.extract_strided_slice %1 {offsets = [1, 0, 0], sizes = [16, 16, 4], strides = [1, 1, 1]} : vector<18x18x4xf32> to vector<16x16x4xf32>
    %9 = vector.shape_cast %8 : vector<16x16x4xf32> to vector<256x4xf32>
    %10 = vector.extract_strided_slice %1 {offsets = [1, 1, 0], sizes = [16, 16, 4], strides = [1, 1, 1]} : vector<18x18x4xf32> to vector<16x16x4xf32>
    %11 = vector.shape_cast %10 : vector<16x16x4xf32> to vector<256x4xf32>
    %12 = vector.extract_strided_slice %1 {offsets = [1, 2, 0], sizes = [16, 16, 4], strides = [1, 1, 1]} : vector<18x18x4xf32> to vector<16x16x4xf32>
    %13 = vector.shape_cast %12 : vector<16x16x4xf32> to vector<256x4xf32>
    %14 = vector.extract_strided_slice %1 {offsets = [2, 0, 0], sizes = [16, 16, 4], strides = [1, 1, 1]} : vector<18x18x4xf32> to vector<16x16x4xf32>
    %15 = vector.shape_cast %14 : vector<16x16x4xf32> to vector<256x4xf32>
    %16 = vector.extract_strided_slice %1 {offsets = [2, 1, 0], sizes = [16, 16, 4], strides = [1, 1, 1]} : vector<18x18x4xf32> to vector<16x16x4xf32>
    %17 = vector.shape_cast %16 : vector<16x16x4xf32> to vector<256x4xf32>
    %18 = vector.extract_strided_slice %1 {offsets = [2, 2, 0], sizes = [16, 16, 4], strides = [1, 1, 1]} : vector<18x18x4xf32> to vector<16x16x4xf32>
    %19 = vector.shape_cast %18 : vector<16x16x4xf32> to vector<256x4xf32>
    %20 = tpu.concatenate %3, %5, %7, %9, %11, %13, %15, %17, %19 in 1 : vector<256x4xf32>, vector<256x4xf32>, vector<256x4xf32>, vector<256x4xf32>, vector<256x4xf32>, vector<256x4xf32>, vector<256x4xf32>, vector<256x4xf32>, vector<256x4xf32> -> vector<256x36xf32>
    %c0_4 = arith.constant 0 : index
    %c0_5 = arith.constant 0 : index
    %21 = vector.load %arg3[%c0_4, %c0_5] : memref<36x128xf32, #tpu.memory_space<vmem>>, vector<36x128xf32>
    %cst = arith.constant dense<0.000000e+00> : vector<256x128xf32>
    %22 = tpu.matmul %20, %21, %cst {dimension_numbers = #tpu.dot_dimension_numbers<[1], [0], [0], [1], [0, 0, 1, 1], [], []>} : vector<256x36xf32>, vector<36x128xf32>, vector<256x128xf32> -> vector<256x128xf32>
    %cst_6 = arith.constant dense<0.000000e+00> : vector<128xf32>
    %23 = vector.multi_reduction <add>, %22, %cst_6 [0] : vector<256x128xf32> to vector<128xf32>
    %24 = vector.shape_cast %23 : vector<128xf32> to vector<1x128xf32>
    %25 = arith.mulf %22, %22 : vector<256x128xf32>
    %cst_7 = arith.constant dense<0.000000e+00> : vector<128xf32>
    %26 = vector.multi_reduction <add>, %25, %cst_7 [0] : vector<256x128xf32> to vector<128xf32>
    %27 = vector.shape_cast %26 : vector<128xf32> to vector<1x128xf32>
    %28 = tpu.concatenate %24, %27 in 0 : vector<1x128xf32>, vector<1x128xf32> -> vector<2x128xf32>
    %c0_8 = arith.constant 0 : index
    %c0_9 = arith.constant 0 : index
    %c0_10 = arith.constant 0 : index
    %c0_11 = arith.constant 0 : index
    %29 = vector.load %arg4[%c0_8, %c0_9, %c0_10, %c0_11] : memref<1x1x2x128xf32, #tpu.memory_space<vmem>>, vector<1x1x2x128xf32>
    %30 = vector.shape_cast %29 : vector<1x1x2x128xf32> to vector<2x128xf32>
    %31 = vector.shape_cast %28 : vector<2x128xf32> to vector<1x1x2x128xf32>
    tpu.vector_store %arg4[%c0_8, %c0_9, %c0_10, %c0_11], %31 {strides = array<i32>} : memref<1x1x2x128xf32, #tpu.memory_space<vmem>>, vector<1x1x2x128xf32>,
    return
  }
  func.func @transform_0(%arg0: i32, %arg1: i32) -> (i32, i32, i32, i32, i32) {
    %c0_i32 = arith.constant 0 : i32
    %c0_i32_0 = arith.constant 0 : i32
    %c0_i32_1 = arith.constant 0 : i32
    %c0_i32_2 = arith.constant 0 : i32
    return %arg0, %arg1, %c0_i32, %c0_i32_0, %c0_i32_1 : i32, i32, i32, i32, i32
  }
  func.func @transform_1(%arg0: i32, %arg1: i32) -> (i32, i32) {
    %c0_i32 = arith.constant 0 : i32
    %c0_i32_0 = arith.constant 0 : i32
    %c0_i32_1 = arith.constant 0 : i32
    return %c0_i32, %c0_i32_0 : i32, i32
  }
  func.func @transform_2(%arg0: i32, %arg1: i32) -> (i32, i32, i32, i32) {
    %c0_i32 = arith.constant 0 : i32
    %c0_i32_0 = arith.constant 0 : i32
    %c0_i32_1 = arith.constant 0 : i32
    return %arg0, %arg1, %c0_i32, %c0_i32_0 : i32, i32, i32, i32
  }
}

module attributes {stable_mosaic.version = 11 : i64} {
  func.func @fused_kernel(%arg0: i32, %arg1: i32, %arg2: memref<1x1x18x18x4xf32, #tpu.memory_space<vmem>>, %arg3: memref<36x128xf32, #tpu.memory_space<vmem>>, %arg4: memref<8x1xf32, #tpu.memory_space<vmem>>, %arg5: memref<8x1xf32, #tpu.memory_space<vmem>>, %arg6: memref<1x8x256xf32, #tpu.memory_space<vmem>>) attributes {dimension_semantics = [#tpu.dimension_semantics<parallel>, #tpu.dimension_semantics<parallel>], iteration_bounds = array<i64: 2, 1>, scalar_prefetch = 0 : i64, scratch_operands = 0 : i64, tpu.core_type = #tpu.core_type<tc>, window_params = [{transform_indices = @transform_0, window_bounds = array<i64: 1, 1, 18, 18, 4>}, {pipeline_mode = #tpu.pipeline_mode<synchronous>, transform_indices = @transform_1, window_bounds = array<i64: 36, 128>}, {pipeline_mode = #tpu.pipeline_mode<synchronous>, transform_indices = @transform_2, window_bounds = array<i64: 8, 1>}, {pipeline_mode = #tpu.pipeline_mode<synchronous>, transform_indices = @transform_3, window_bounds = array<i64: 8, 1>}, {transform_indices = @transform_4, window_bounds = array<i64: 1, 8, 256>}]} {
    %c0 = arith.constant 0 : index
    %c0_0 = arith.constant 0 : index
    %c0_1 = arith.constant 0 : index
    %c0_2 = arith.constant 0 : index
    %c0_3 = arith.constant 0 : index
    %0 = vector.load %arg2[%c0, %c0_0, %c0_1, %c0_2, %c0_3] : memref<1x1x18x18x4xf32, #tpu.memory_space<vmem>>, vector<1x1x18x18x4xf32>
    %1 = vector.shape_cast %0 : vector<1x1x18x18x4xf32> to vector<18x18x4xf32>
    %2 = vector.extract_strided_slice %1 {offsets = [0, 0, 0], sizes = [16, 16, 4], strides = [1, 1, 1]} : vector<18x18x4xf32> to vector<16x16x4xf32>
    %3 = vector.shape_cast %2 : vector<16x16x4xf32> to vector<256x4xf32>
    %4 = vector.extract_strided_slice %1 {offsets = [0, 1, 0], sizes = [16, 16, 4], strides = [1, 1, 1]} : vector<18x18x4xf32> to vector<16x16x4xf32>
    %5 = vector.shape_cast %4 : vector<16x16x4xf32> to vector<256x4xf32>
    %6 = vector.extract_strided_slice %1 {offsets = [0, 2, 0], sizes = [16, 16, 4], strides = [1, 1, 1]} : vector<18x18x4xf32> to vector<16x16x4xf32>
    %7 = vector.shape_cast %6 : vector<16x16x4xf32> to vector<256x4xf32>
    %8 = vector.extract_strided_slice %1 {offsets = [1, 0, 0], sizes = [16, 16, 4], strides = [1, 1, 1]} : vector<18x18x4xf32> to vector<16x16x4xf32>
    %9 = vector.shape_cast %8 : vector<16x16x4xf32> to vector<256x4xf32>
    %10 = vector.extract_strided_slice %1 {offsets = [1, 1, 0], sizes = [16, 16, 4], strides = [1, 1, 1]} : vector<18x18x4xf32> to vector<16x16x4xf32>
    %11 = vector.shape_cast %10 : vector<16x16x4xf32> to vector<256x4xf32>
    %12 = vector.extract_strided_slice %1 {offsets = [1, 2, 0], sizes = [16, 16, 4], strides = [1, 1, 1]} : vector<18x18x4xf32> to vector<16x16x4xf32>
    %13 = vector.shape_cast %12 : vector<16x16x4xf32> to vector<256x4xf32>
    %14 = vector.extract_strided_slice %1 {offsets = [2, 0, 0], sizes = [16, 16, 4], strides = [1, 1, 1]} : vector<18x18x4xf32> to vector<16x16x4xf32>
    %15 = vector.shape_cast %14 : vector<16x16x4xf32> to vector<256x4xf32>
    %16 = vector.extract_strided_slice %1 {offsets = [2, 1, 0], sizes = [16, 16, 4], strides = [1, 1, 1]} : vector<18x18x4xf32> to vector<16x16x4xf32>
    %17 = vector.shape_cast %16 : vector<16x16x4xf32> to vector<256x4xf32>
    %18 = vector.extract_strided_slice %1 {offsets = [2, 2, 0], sizes = [16, 16, 4], strides = [1, 1, 1]} : vector<18x18x4xf32> to vector<16x16x4xf32>
    %19 = vector.shape_cast %18 : vector<16x16x4xf32> to vector<256x4xf32>
    %20 = tpu.concatenate %3, %5, %7, %9, %11, %13, %15, %17, %19 in 1 : vector<256x4xf32>, vector<256x4xf32>, vector<256x4xf32>, vector<256x4xf32>, vector<256x4xf32>, vector<256x4xf32>, vector<256x4xf32>, vector<256x4xf32>, vector<256x4xf32> -> vector<256x36xf32>
    %c0_4 = arith.constant 0 : index
    %c0_5 = arith.constant 0 : index
    %21 = vector.load %arg3[%c0_4, %c0_5] : memref<36x128xf32, #tpu.memory_space<vmem>>, vector<36x128xf32>
    %cst = arith.constant dense<0.000000e+00> : vector<256x128xf32>
    %22 = tpu.matmul %20, %21, %cst {dimension_numbers = #tpu.dot_dimension_numbers<[1], [0], [0], [1], [0, 0, 1, 1], [], []>} : vector<256x36xf32>, vector<36x128xf32>, vector<256x128xf32> -> vector<256x128xf32>
    %23 = tpu.transpose %22, [1, 0] : vector<256x128xf32> -> vector<128x256xf32>
    %24 = vector.extract_strided_slice %23 {offsets = [0, 0], sizes = [8, 256], strides = [1, 1]} : vector<128x256xf32> to vector<8x256xf32>
    %c0_6 = arith.constant 0 : index
    %c0_7 = arith.constant 0 : index
    %25 = vector.load %arg4[%c0_6, %c0_7] : memref<8x1xf32, #tpu.memory_space<vmem>>, vector<8x1xf32>
    %26 = vector.broadcast %25 : vector<8x1xf32> to vector<8x256xf32>
    %27 = arith.mulf %24, %26 : vector<8x256xf32>
    %c0_8 = arith.constant 0 : index
    %c0_9 = arith.constant 0 : index
    %28 = vector.load %arg5[%c0_8, %c0_9] : memref<8x1xf32, #tpu.memory_space<vmem>>, vector<8x1xf32>
    %29 = vector.broadcast %28 : vector<8x1xf32> to vector<8x256xf32>
    %30 = arith.addf %27, %29 : vector<8x256xf32>
    %31 = math.tanh %30 : vector<8x256xf32>
    %c0_10 = arith.constant 0 : index
    %c0_11 = arith.constant 0 : index
    %c0_12 = arith.constant 0 : index
    %32 = vector.load %arg6[%c0_10, %c0_11, %c0_12] : memref<1x8x256xf32, #tpu.memory_space<vmem>>, vector<1x8x256xf32>
    %33 = vector.shape_cast %32 : vector<1x8x256xf32> to vector<8x256xf32>
    %34 = vector.shape_cast %31 : vector<8x256xf32> to vector<1x8x256xf32>
    tpu.vector_store %arg6[%c0_10, %c0_11, %c0_12], %34 {strides = array<i32>} : memref<1x8x256xf32, #tpu.memory_space<vmem>>, vector<1x8x256xf32>,
    return
  }
  func.func @transform_0(%arg0: i32, %arg1: i32) -> (i32, i32, i32, i32, i32) {
    %c0_i32 = arith.constant 0 : i32
    %c0_i32_0 = arith.constant 0 : i32
    %c0_i32_1 = arith.constant 0 : i32
    %c0_i32_2 = arith.constant 0 : i32
    return %arg0, %arg1, %c0_i32, %c0_i32_0, %c0_i32_1 : i32, i32, i32, i32, i32
  }
  func.func @transform_1(%arg0: i32, %arg1: i32) -> (i32, i32) {
    %c0_i32 = arith.constant 0 : i32
    %c0_i32_0 = arith.constant 0 : i32
    %c0_i32_1 = arith.constant 0 : i32
    return %c0_i32, %c0_i32_0 : i32, i32
  }
  func.func @transform_2(%arg0: i32, %arg1: i32) -> (i32, i32) {
    %c0_i32 = arith.constant 0 : i32
    %c0_i32_0 = arith.constant 0 : i32
    %c0_i32_1 = arith.constant 0 : i32
    return %c0_i32, %c0_i32_0 : i32, i32
  }
  func.func @transform_3(%arg0: i32, %arg1: i32) -> (i32, i32) {
    %c0_i32 = arith.constant 0 : i32
    %c0_i32_0 = arith.constant 0 : i32
    %c0_i32_1 = arith.constant 0 : i32
    return %c0_i32, %c0_i32_0 : i32, i32
  }
  func.func @transform_4(%arg0: i32, %arg1: i32) -> (i32, i32, i32) {
    %c0_i32 = arith.constant 0 : i32
    %c0_i32_0 = arith.constant 0 : i32
    return %arg0, %c0_i32, %arg1 : i32, i32, i32
  }
}

</mosaic_0001>

<llo_original>
// kernel: conv_block_tanh.2
$region0: #{conv_block_tanh.2}
  #allocation0 [shape = 'u32[]', space=smem, size = 0x4, offset = 0x4, fixed_abs, tag = 'smem constant byte address 0x4 - core index']
  #allocation1 [shape = 'u32[144,128]{1,0:T(1,128)}', space=vmem, size = 0x12000, scoped, tag = 'internal scratch']
  %s0 = inlined_call_operand.vmem [shape: f32[2,1,18,18,4], index: 0, kind: input, shape index: {}]
  %s1 = inlined_call_operand.vmem [shape: f32[36,128], index: 1, kind: input, shape index: {}]
  %s2 = inlined_call_operand.vmem [shape: f32[2,1,2,128], index: 2, kind: output, shape index: {}]
  %s3 = sld [smem:[#allocation0]]
  $region41: #{conv_block_tanh.2} parent=0
    _
  %s5 = ssub.s32 1, %s3
  %s6 = scalar_select 0, %s5, %s3
  loop: start=0, step=1, limit=4
  $region2: #{conv_block_tanh.2} parent=0 // loop_pre_header
    _
  $region3: #{conv_block_tanh.2} parent=0 // loop_header
    %s8 = sphi 0, %s12
    %p9 = scmp.ge.s32.totalorder %s8, 4
    %s15 = sphi 0, %s27
    %s16 = sphi 0, %s23
    %s17 = sphi 0, %s15
    %s18 = sphi 0, %s16
    %s19 = sphi 0, %s17
    %s20 = sphi 0, %s18
    %s32 = sphi 0, %s34
    %s35 = sphi 0, %s32
    %s36 = sphi 0, %s35
    %s52 = sphi 0, %s36
    %s56 = sphi 0, %s56
    %s58 = sphi 0, %s56
    %s59 = sphi 0, %s58
    %s73 = sphi 0, %s59
    %s81 = sphi 0, %s83
    %s84 = sphi 0, %s81
    %s85 = sphi 0, %s84
    %s101 = sphi 0, %s85
  $region4: #{conv_block_tanh.2} parent=0 // loop_header_branch
    %11 = sbr.rel (%p9) target = $region8
  $region5: #{conv_block_tanh.2} parent=0 // loop_body
    %s13 = ssub.s32 %s8, 1
    %s14 = ssub.s32 %s8, 2
    %s21 = sadd.s32 1, %s16
    %p22 = scmp.ge.s32.totalorder %s21, 1
    %s23 = scalar_select %p22, 0, %s21
    %s24 = sadd.s32 1, %s15
    %s25 = scalar_select %p22, %s24, %s15
    %p26 = scmp.ge.s32.totalorder %s25, 2
    %s27 = scalar_select %p26, 0, %s25
    %s28 = ssub.s32 %s15, %s27
    %s29 = ssub.s32 %s16, %s23
    %s30 = sor.u32 %s28, %s29
    %p31 = scmp.eq.s32.totalorder %s30, 0
    %s33 = sadd.s32 %s32, 1
    %s34 = scalar_select %p31, %s32, %s33
    %p37 = pneg %p31
    %p38 = scmp.eq.s32.totalorder %s8, 1
    %p39 = por %p37, %p38
    %p40 = scmp.ne.s32.totalorder %s32, %s35
    %p41 = scmp.eq.s32.totalorder %s8, 0
    %p42 = por %p40, %p41
    %p43 = scmp.ne.s32.totalorder %s32, %s35
    %p44 = scmp.eq.s32.totalorder %s13, 1
    %p45 = por %p43, %p44
    %p46 = scmp.ne.s32.totalorder %s35, %s36
    %p47 = scmp.eq.s32.totalorder %s13, 0
    %p48 = por %p46, %p47
    %p49 = scmp.ne.s32.totalorder %s35, %s36
    %p50 = scmp.eq.s32.totalorder %s14, 1
    %p51 = por %p49, %p50
    %p53 = scmp.ne.s32.totalorder %s36, %s52
    %p54 = scmp.eq.s32.totalorder %s14, 0
    %p55 = por %p53, %p54
    %s57 = sadd.s32 %s56, 1
    %p60 = scmp.eq.s32.totalorder %s8, 1
    %p61 = scmp.ne.s32.totalorder %s56, %s58
    %p62 = scmp.eq.s32.totalorder %s8, 0
    %p63 = por %p61, %p62
    %p64 = scmp.ne.s32.totalorder %s56, %s58
    %p65 = scmp.eq.s32.totalorder %s13, 1
    %p66 = por %p64, %p65
    %p67 = scmp.ne.s32.totalorder %s58, %s59
    %p68 = scmp.eq.s32.totalorder %s13, 0
    %p69 = por %p67, %p68
    %p70 = scmp.ne.s32.totalorder %s58, %s59
    %p71 = scmp.eq.s32.totalorder %s14, 1
    %p72 = por %p70, %p71
    %p74 = scmp.ne.s32.totalorder %s59, %s73
    %p75 = scmp.eq.s32.totalorder %s14, 0
    %p76 = por %p74, %p75
    %s77 = ssub.s32 %s15, %s27
    %s78 = ssub.s32 %s16, %s23
    %s79 = sor.u32 %s77, %s78
    %p80 = scmp.eq.s32.totalorder %s79, 0
    %s82 = sadd.s32 %s81, 1
    %s83 = scalar_select %p80, %s81, %s82
    %p86 = pneg %p80
    %p87 = scmp.eq.s32.totalorder %s8, 1
    %p88 = por %p86, %p87
    %p89 = scmp.ne.s32.totalorder %s81, %s84
    %p90 = scmp.eq.s32.totalorder %s8, 0
    %p91 = por %p89, %p90
    %p92 = scmp.ne.s32.totalorder %s81, %s84
    %p93 = scmp.eq.s32.totalorder %s13, 1
    %p94 = por %p92, %p93
    %p95 = scmp.ne.s32.totalorder %s84, %s85
    %p96 = scmp.eq.s32.totalorder %s13, 0
    %p97 = por %p95, %p96
    %p98 = scmp.ne.s32.totalorder %s84, %s85
    %p99 = scmp.eq.s32.totalorder %s14, 1
    %p100 = por %p98, %p99
    %p102 = scmp.ne.s32.totalorder %s85, %s101
    %p103 = scmp.eq.s32.totalorder %s14, 0
    %p104 = por %p102, %p103
    %p105 = scmp.le.s32.totalorder 1, %s8
    %p106 = scmp.lt.s32.totalorder %s8, 3
    %p107 = pnand %p105, %p106
    %p108 = pneg %p107
    // Predicated region
    $region9: #{conv_block_tanh.2} parent=5 // pred_check
      _
    $region10: #{conv_block_tanh.2} parent=5 // pred_check_branch
      %110 = sbr.rel (%p107) target = $region12
    $region11: #{conv_block_tanh.2} parent=5 // pred_region
      %s111 = ssub.s32 %s8, 1
      // Predicated region
      $region13: #{conv_block_tanh.2} parent=11 // pred_check
        %p112 = pneg %p69
      $region14: #{conv_block_tanh.2} parent=11 // pred_check_branch
        %114 = sbr.rel (%p112) target = $region16
      $region15: #{conv_block_tanh.2} parent=11 // pred_region
        _
      $region16: #{conv_block_tanh.2} parent=11 // pred_fallthru
        _
    $region12: #{conv_block_tanh.2} parent=5 // pred_fallthru
      _
    %p115 = scmp.lt.s32.totalorder %s8, 2
    // Predicated region
    $region17: #{conv_block_tanh.2} parent=5 // pred_check
      %p116 = pneg %p115
    $region18: #{conv_block_tanh.2} parent=5 // pred_check_branch
      %118 = sbr.rel (%p116) target = $region20
    $region19: #{conv_block_tanh.2} parent=5 // pred_region
      // Predicated region
      $region21: #{conv_block_tanh.2} parent=19 // pred_check
        %p119 = pneg %p42
      $region22: #{conv_block_tanh.2} parent=19 // pred_check_branch
        %121 = sbr.rel (%p119) target = $region24
      $region23: #{conv_block_tanh.2} parent=19 // pred_region
        %p122 = scmp.lt.s32.totalorder %s15, 1
        %s123 = scalar_select %p122, %s15, 1
        %p124 = scmp.lt.s32.totalorder %s16, 0
        %s125 = scalar_select %p124, %s16, 0
        %s126 = smul.addr %s125, 54
        %s127 = smul.addr %s123, 54
        %s128 = sadd.s32 %s126, %s127
        %s129 = smul.addr %s128, 8
        %s130 = scalar_lea.vmem %s0, %s129
      $region24: #{conv_block_tanh.2} parent=19 // pred_fallthru
        _
    $region20: #{conv_block_tanh.2} parent=5 // pred_fallthru
      _
    %p131 = scmp.le.s32.totalorder 1, %s8
    %p132 = scmp.lt.s32.totalorder %s8, 3
    %p133 = pnand %p131, %p132
    %p134 = pneg %p133
    // Predicated region
    $region25: #{conv_block_tanh.2} parent=5 // pred_check
      _
    $region26: #{conv_block_tanh.2} parent=5 // pred_check_branch
      %136 = sbr.rel (%p133) target = $region28
    $region27: #{conv_block_tanh.2} parent=5 // pred_region
      %s137 = ssub.s32 %s8, 1
      %p138 = scmp.lt.s32.totalorder %s17, 1
      %s139 = scalar_select %p138, %s17, 1
      %p140 = scmp.lt.s32.totalorder %s18, 0
      %s141 = scalar_select %p140, %s18, 0
      %s142 = smul.addr %s141, 54
      %s143 = smul.addr %s139, 54
      %s144 = sadd.s32 %s142, %s143
      %s145 = smul.addr %s144, 8
      %s146 = scalar_lea.vmem %s0, %s145
      %p147 = pneg %p48
      %p148 = pneg %p45
      %p149 = pneg %p69
      %p150 = pneg %p66
      %p151 = pneg %p97
      %p152 = pneg %p94
      %p153 = scmp.lt.s32.totalorder %s17, 1
      %s154 = scalar_select %p153, %s17, 1
      %p155 = scmp.lt.s32.totalorder %s18, 0
      %s156 = scalar_select %p155, %s18, 0
      %s157 = sadd.s32 %s156, %s154
      %s158 = smul.addr %s157, 2
      %s159 = scalar_lea.vmem %s2, %s158
      %p160 = scmp.lt.s32.totalorder %s17, 1
      %s161 = scalar_select %p160, %s17, 1
      %p162 = scmp.lt.s32.totalorder %s18, 0
      %s163 = scalar_select %p162, %s18, 0
      %s164 = smul.addr %s163, 54
      %s165 = smul.addr %s161, 54
      %s166 = sadd.s32 %s164, %s165
      %s167 = smul.addr %s166, 8
      %s168 = scalar_lea.vmem %s0, %s167
      %p169 = scmp.lt.s32.totalorder %s17, 1
      %s170 = scalar_select %p169, %s17, 1
      %p171 = scmp.lt.s32.totalorder %s18, 0
      %s172 = scalar_select %p171, %s18, 0
      %s173 = sadd.s32 %s172, %s170
      %s174 = smul.addr %s173, 2
      %s175 = scalar_lea.vmem %s2, %s174
      %v176 = vld [vmem:[%s168] sm:$0xff]
      %v177 = vld [vmem:[%s168 + $0x8] sm:$0xff]
      %v178 = vld [vmem:[%s168 + $0x10] sm:$0x3]
      %v179 = vld [vmem:[%s168 + $0x18] sm:$0xff]
      %v180 = vld [vmem:[%s168 + $0x20] sm:$0xff]
      %v181 = vld [vmem:[%s168 + $0x28] sm:$0x3]
      %v182 = vld [vmem:[%s168 + $0x30] sm:$0xff]
      %v183 = vld [vmem:[%s168 + $0x38] sm:$0xff]
      %v184 = vld [vmem:[%s168 + $0x40] sm:$0x3]
      %v185 = vld [vmem:[%s168 + $0x48] sm:$0xff]
      %v186 = vld [vmem:[%s168 + $0x50] sm:$0xff]
      %v187 = vld [vmem:[%s168 + $0x58] sm:$0x3]
      %v188 = vld [vmem:[%s168 + $0x60] sm:$0xff]
      %v189 = vld [vmem:[%s168 + $0x68] sm:$0xff]
      %v190 = vld [vmem:[%s168 + $0x70] sm:$0x3]
      %v191 = vld [vmem:[%s168 + $0x78] sm:$0xff]
      %v192 = vld [vmem:[%s168 + $0x80] sm:$0xff]
      %v193 = vld [vmem:[%s168 + $0x88] sm:$0x3]
      %v194 = vld [vmem:[%s168 + $0x90] sm:$0xff]
      %v195 = vld [vmem:[%s168 + $0x98] sm:$0xff]
      %v196 = vld [vmem:[%s168 + $0xa0] sm:$0x3]
      %v197 = vld [vmem:[%s168 + $0xa8] sm:$0xff]
      %v198 = vld [vmem:[%s168 + $0xb0] sm:$0xff]
      %v199 = vld [vmem:[%s168 + $0xb8] sm:$0x3]
      %v200 = vld [vmem:[%s168 + $0xc0] sm:$0xff]
      %v201 = vld [vmem:[%s168 + $0xc8] sm:$0xff]
      %v202 = vld [vmem:[%s168 + $0xd0] sm:$0x3]
      %v203 = vld [vmem:[%s168 + $0xd8] sm:$0xff]
      %v204 = vld [vmem:[%s168 + $0xe0] sm:$0xff]
      %v205 = vld [vmem:[%s168 + $0xe8] sm:$0x3]
      %v206 = vld [vmem:[%s168 + $0xf0] sm:$0xff]
      %v207 = vld [vmem:[%s168 + $0xf8] sm:$0xff]
      %v208 = vld [vmem:[%s168 + $0x100] sm:$0x3]
      %v209 = vld [vmem:[%s168 + $0x108] sm:$0xff]
      %v210 = vld [vmem:[%s168 + $0x110] sm:$0xff]
      %v211 = vld [vmem:[%s168 + $0x118] sm:$0x3]
      %v212 = vld [vmem:[%s168 + $0x120] sm:$0xff]
      %v213 = vld [vmem:[%s168 + $0x128] sm:$0xff]
      %v214 = vld [vmem:[%s168 + $0x130] sm:$0x3]
      %v215 = vld [vmem:[%s168 + $0x138] sm:$0xff]
      %v216 = vld [vmem:[%s168 + $0x140] sm:$0xff]
      %v217 = vld [vmem:[%s168 + $0x148] sm:$0x3]
      %v218 = vld [vmem:[%s168 + $0x150] sm:$0xff]
      %v219 = vld [vmem:[%s168 + $0x158] sm:$0xff]
      %v220 = vld [vmem:[%s168 + $0x160] sm:$0x3]
      %v221 = vld [vmem:[%s168 + $0x168] sm:$0xff]
      %v222 = vld [vmem:[%s168 + $0x170] sm:$0xff]
      %v223 = vld [vmem:[%s168 + $0x178] sm:$0x3]
      %v224 = vld [vmem:[%s168 + $0x180] sm:$0xff]
      %v225 = vld [vmem:[%s168 + $0x188] sm:$0xff]
      %v226 = vld [vmem:[%s168 + $0x190] sm:$0x3]
      %v227 = vld [vmem:[%s168 + $0x198] sm:$0xff]
      %v228 = vld [vmem:[%s168 + $0x1a0] sm:$0xff]
      %v229 = vld [vmem:[%s168 + $0x1a8] sm:$0x3]
      %vm278 = vcmask 1046528
      %v279 = vrot.slane %v176, 1
      %v280 = vrot.slane %v177, 1
      %v281 = vsel %vm278, %v279, %v280
      %v282 = vrot.slane %v178, 1
      %v283 = vsel %vm278, %v280, %v282
      %v284 = vrot.slane %v179, 1
      %v285 = vrot.slane %v180, 1
      %v286 = vsel %vm278, %v284, %v285
      %v287 = vrot.slane %v181, 1
      %v288 = vsel %vm278, %v285, %v287
      %v289 = vrot.slane %v182, 1
      %v290 = vrot.slane %v183, 1
      %v291 = vsel %vm278, %v289, %v290
      %v292 = vrot.slane %v184, 1
      %v293 = vsel %vm278, %v290, %v292
      %v294 = vrot.slane %v185, 1
      %v295 = vrot.slane %v186, 1
      %v296 = vsel %vm278, %v294, %v295
      %v297 = vrot.slane %v187, 1
      %v298 = vsel %vm278, %v295, %v297
      %v299 = vrot.slane %v188, 1
      %v300 = vrot.slane %v189, 1
      %v301 = vsel %vm278, %v299, %v300
      %v302 = vrot.slane %v190, 1
      %v303 = vsel %vm278, %v300, %v302
      %v304 = vrot.slane %v191, 1
      %v305 = vrot.slane %v192, 1
      %v306 = vsel %vm278, %v304, %v305
      %v307 = vrot.slane %v193, 1
      %v308 = vsel %vm278, %v305, %v307
      %v309 = vrot.slane %v194, 1
      %v310 = vrot.slane %v195, 1
      %v311 = vsel %vm278, %v309, %v310
      %v312 = vrot.slane %v196, 1
      %v313 = vsel %vm278, %v310, %v312
      %v314 = vrot.slane %v197, 1
      %v315 = vrot.slane %v198, 1
      %v316 = vsel %vm278, %v314, %v315
      %v317 = vrot.slane %v199, 1
      %v318 = vsel %vm278, %v315, %v317
      %v319 = vrot.slane %v200, 1
      %v320 = vrot.slane %v201, 1
      %v321 = vsel %vm278, %v319, %v320
      %v322 = vrot.slane %v202, 1
      %v323 = vsel %vm278, %v320, %v322
      %v324 = vrot.slane %v203, 1
      %v325 = vrot.slane %v204, 1
      %v326 = vsel %vm278, %v324, %v325
      %v327 = vrot.slane %v205, 1
      %v328 = vsel %vm278, %v325, %v327
      %v329 = vrot.slane %v206, 1
      %v330 = vrot.slane %v207, 1
      %v331 = vsel %vm278, %v329, %v330
      %v332 = vrot.slane %v208, 1
      %v333 = vsel %vm278, %v330, %v332
      %v334 = vrot.slane %v209, 1
      %v335 = vrot.slane %v210, 1
      %v336 = vsel %vm278, %v334, %v335
      %v337 = vrot.slane %v211, 1
      %v338 = vsel %vm278, %v335, %v337
      %v339 = vrot.slane %v212, 1
      %v340 = vrot.slane %v213, 1
      %v341 = vsel %vm278, %v339, %v340
      %v342 = vrot.slane %v214, 1
      %v343 = vsel %vm278, %v340, %v342
      %v344 = vrot.slane %v215, 1
      %v345 = vrot.slane %v216, 1
      %v346 = vsel %vm278, %v344, %v345
      %v347 = vrot.slane %v217, 1
      %v348 = vsel %vm278, %v345, %v347
      %v349 = vrot.slane %v218, 1
      %v350 = vrot.slane %v219, 1
      %v351 = vsel %vm278, %v349, %v350
      %v352 = vrot.slane %v220, 1
      %v353 = vsel %vm278, %v350, %v352
      %v354 = vrot.slane %v221, 1
      %v355 = vrot.slane %v222, 1
      %v356 = vsel %vm278, %v354, %v355
      %v357 = vrot.slane %v223, 1
      %v358 = vsel %vm278, %v355, %v357
      %vm359 = vcmask 1045504
      %v360 = vrot.slane %v176, 2
      %v361 = vrot.slane %v177, 2
      %v362 = vsel %vm359, %v360, %v361
      %v363 = vrot.slane %v178, 2
      %v364 = vsel %vm359, %v361, %v363
      %v365 = vrot.slane %v179, 2
      %v366 = vrot.slane %v180, 2
      %v367 = vsel %vm359, %v365, %v366
      %v368 = vrot.slane %v181, 2
      %v369 = vsel %vm359, %v366, %v368
      %v370 = vrot.slane %v182, 2
      %v371 = vrot.slane %v183, 2
      %v372 = vsel %vm359, %v370, %v371
      %v373 = vrot.slane %v184, 2
      %v374 = vsel %vm359, %v371, %v373
      %v375 = vrot.slane %v185, 2
      %v376 = vrot.slane %v186, 2
      %v377 = vsel %vm359, %v375, %v376
      %v378 = vrot.slane %v187, 2
      %v379 = vsel %vm359, %v376, %v378
      %v380 = vrot.slane %v188, 2
      %v381 = vrot.slane %v189, 2
      %v382 = vsel %vm359, %v380, %v381
      %v383 = vrot.slane %v190, 2
      %v384 = vsel %vm359, %v381, %v383
      %v385 = vrot.slane %v191, 2
      %v386 = vrot.slane %v192, 2
      %v387 = vsel %vm359, %v385, %v386
      %v388 = vrot.slane %v193, 2
      %v389 = vsel %vm359, %v386, %v388
      %v390 = vrot.slane %v194, 2
      %v391 = vrot.slane %v195, 2
      %v392 = vsel %vm359, %v390, %v391
      %v393 = vrot.slane %v196, 2
      %v394 = vsel %vm359, %v391, %v393
      %v395 = vrot.slane %v197, 2
      %v396 = vrot.slane %v198, 2
      %v397 = vsel %vm359, %v395, %v396
      %v398 = vrot.slane %v199, 2
      %v399 = vsel %vm359, %v396, %v398
      %v400 = vrot.slane %v200, 2
      %v401 = vrot.slane %v201, 2
      %v402 = vsel %vm359, %v400, %v401
      %v403 = vrot.slane %v202, 2
      %v404 = vsel %vm359, %v401, %v403
      %v405 = vrot.slane %v203, 2
      %v406 = vrot.slane %v204, 2
      %v407 = vsel %vm359, %v405, %v406
      %v408 = vrot.slane %v205, 2
      %v409 = vsel %vm359, %v406, %v408
      %v410 = vrot.slane %v206, 2
      %v411 = vrot.slane %v207, 2
      %v412 = vsel %vm359, %v410, %v411
      %v413 = vrot.slane %v208, 2
      %v414 = vsel %vm359, %v411, %v413
      %v415 = vrot.slane %v209, 2
      %v416 = vrot.slane %v210, 2
      %v417 = vsel %vm359, %v415, %v416
      %v418 = vrot.slane %v211, 2
      %v419 = vsel %vm359, %v416, %v418
      %v420 = vrot.slane %v212, 2
      %v421 = vrot.slane %v213, 2
      %v422 = vsel %vm359, %v420, %v421
      %v423 = vrot.slane %v214, 2
      %v424 = vsel %vm359, %v421, %v423
      %v425 = vrot.slane %v215, 2
      %v426 = vrot.slane %v216, 2
      %v427 = vsel %vm359, %v425, %v426
      %v428 = vrot.slane %v217, 2
      %v429 = vsel %vm359, %v426, %v428
      %v430 = vrot.slane %v218, 2
      %v431 = vrot.slane %v219, 2
      %v432 = vsel %vm359, %v430, %v431
      %v433 = vrot.slane %v220, 2
      %v434 = vsel %vm359, %v431, %v433
      %v435 = vrot.slane %v221, 2
      %v436 = vrot.slane %v222, 2
      %v437 = vsel %vm359, %v435, %v436
      %v438 = vrot.slane %v223, 2
      %v439 = vsel %vm359, %v436, %v438
      %v443 = vrot.slane %v224, 1
      %v444 = vrot.slane %v225, 1
      %v445 = vsel %vm278, %v443, %v444
      %v446 = vrot.slane %v226, 1
      %v447 = vsel %vm278, %v444, %v446
      %v448 = vrot.slane %v224, 2
      %v449 = vrot.slane %v225, 2
      %v450 = vsel %vm359, %v448, %v449
      %v451 = vrot.slane %v226, 2
      %v452 = vsel %vm359, %v449, %v451
      %v456 = vrot.slane %v227, 1
      %v457 = vrot.slane %v228, 1
      %v458 = vsel %vm278, %v456, %v457
      %v459 = vrot.slane %v229, 1
      %v460 = vsel %vm278, %v457, %v459
      %v461 = vrot.slane %v227, 2
      %v462 = vrot.slane %v228, 2
      %v463 = vsel %vm359, %v461, %v462
      %v464 = vrot.slane %v229, 2
      %v465 = vsel %vm359, %v462, %v464
      %466 = vrot.lane.b32.xlu0 %v281, 4
      %v467 = vpop.permute.xlu0 %466
      %468 = vrot.lane.b32.xlu0 %v283, 4
      %v469 = vpop.permute.xlu0 %468
      %470 = vrot.lane.b32.xlu0 %v286, 4
      %v471 = vpop.permute.xlu0 %470
      %472 = vrot.lane.b32.xlu0 %v288, 4
      %v473 = vpop.permute.xlu0 %472
      %474 = vrot.lane.b32.xlu0 %v291, 4
      %v475 = vpop.permute.xlu0 %474
      %476 = vrot.lane.b32.xlu0 %v293, 4
      %v477 = vpop.permute.xlu0 %476
      %478 = vrot.lane.b32.xlu0 %v296, 4
      %v479 = vpop.permute.xlu0 %478
      %480 = vrot.lane.b32.xlu0 %v298, 4
      %v481 = vpop.permute.xlu0 %480
      %482 = vrot.lane.b32.xlu0 %v301, 4
      %v483 = vpop.permute.xlu0 %482
      %484 = vrot.lane.b32.xlu0 %v303, 4
      %v485 = vpop.permute.xlu0 %484
      %486 = vrot.lane.b32.xlu0 %v306, 4
      %v487 = vpop.permute.xlu0 %486
      %488 = vrot.lane.b32.xlu0 %v308, 4
      %v489 = vpop.permute.xlu0 %488
      %490 = vrot.lane.b32.xlu0 %v311, 4
      %v491 = vpop.permute.xlu0 %490
      %492 = vrot.lane.b32.xlu0 %v313, 4
      %v493 = vpop.permute.xlu0 %492
      %494 = vrot.lane.b32.xlu0 %v316, 4
      %v495 = vpop.permute.xlu0 %494
      %496 = vrot.lane.b32.xlu0 %v318, 4
      %v497 = vpop.permute.xlu0 %496
      %498 = vrot.lane.b32.xlu0 %v321, 4
      %v499 = vpop.permute.xlu0 %498
      %500 = vrot.lane.b32.xlu0 %v323, 4
      %v501 = vpop.permute.xlu0 %500
      %502 = vrot.lane.b32.xlu0 %v326, 4
      %v503 = vpop.permute.xlu0 %502
      %504 = vrot.lane.b32.xlu0 %v328, 4
      %v505 = vpop.permute.xlu0 %504
      %506 = vrot.lane.b32.xlu0 %v331, 4
      %v507 = vpop.permute.xlu0 %506
      %508 = vrot.lane.b32.xlu0 %v333, 4
      %v509 = vpop.permute.xlu0 %508
      %510 = vrot.lane.b32.xlu0 %v336, 4
      %v511 = vpop.permute.xlu0 %510
      %512 = vrot.lane.b32.xlu0 %v338, 4
      %v513 = vpop.permute.xlu0 %512
      %514 = vrot.lane.b32.xlu0 %v341, 4
      %v515 = vpop.permute.xlu0 %514
      %516 = vrot.lane.b32.xlu0 %v343, 4
      %v517 = vpop.permute.xlu0 %516
      %518 = vrot.lane.b32.xlu0 %v346, 4
      %v519 = vpop.permute.xlu0 %518
      %520 = vrot.lane.b32.xlu0 %v348, 4
      %v521 = vpop.permute.xlu0 %520
      %522 = vrot.lane.b32.xlu0 %v351, 4
      %v523 = vpop.permute.xlu0 %522
      %524 = vrot.lane.b32.xlu0 %v353, 4
      %v525 = vpop.permute.xlu0 %524
      %526 = vrot.lane.b32.xlu0 %v356, 4
      %v527 = vpop.permute.xlu0 %526
      %528 = vrot.lane.b32.xlu0 %v358, 4
      %v529 = vpop.permute.xlu0 %528
      %562 = vrot.lane.b32.xlu0 %v362, 8
      %v563 = vpop.permute.xlu0 %562
      %564 = vrot.lane.b32.xlu0 %v364, 8
      %v565 = vpop.permute.xlu0 %564
      %566 = vrot.lane.b32.xlu0 %v367, 8
      %v567 = vpop.permute.xlu0 %566
      %568 = vrot.lane.b32.xlu0 %v369, 8
      %v569 = vpop.permute.xlu0 %568
      %570 = vrot.lane.b32.xlu0 %v372, 8
      %v571 = vpop.permute.xlu0 %570
      %572 = vrot.lane.b32.xlu0 %v374, 8
      %v573 = vpop.permute.xlu0 %572
      %574 = vrot.lane.b32.xlu0 %v377, 8
      %v575 = vpop.permute.xlu0 %574
      %576 = vrot.lane.b32.xlu0 %v379, 8
      %v577 = vpop.permute.xlu0 %576
      %578 = vrot.lane.b32.xlu0 %v382, 8
      %v579 = vpop.permute.xlu0 %578
      %580 = vrot.lane.b32.xlu0 %v384, 8
      %v581 = vpop.permute.xlu0 %580
      %582 = vrot.lane.b32.xlu0 %v387, 8
      %v583 = vpop.permute.xlu0 %582
      %584 = vrot.lane.b32.xlu0 %v389, 8
      %v585 = vpop.permute.xlu0 %584
      %586 = vrot.lane.b32.xlu0 %v392, 8
      %v587 = vpop.permute.xlu0 %586
      %588 = vrot.lane.b32.xlu0 %v394, 8
      %v589 = vpop.permute.xlu0 %588
      %590 = vrot.lane.b32.xlu0 %v397, 8
      %v591 = vpop.permute.xlu0 %590
      %592 = vrot.lane.b32.xlu0 %v399, 8
      %v593 = vpop.permute.xlu0 %592
      %594 = vrot.lane.b32.xlu0 %v402, 8
      %v595 = vpop.permute.xlu0 %594
      %596 = vrot.lane.b32.xlu0 %v404, 8
      %v597 = vpop.permute.xlu0 %596
      %598 = vrot.lane.b32.xlu0 %v407, 8
      %v599 = vpop.permute.xlu0 %598
      %600 = vrot.lane.b32.xlu0 %v409, 8
      %v601 = vpop.permute.xlu0 %600
      %602 = vrot.lane.b32.xlu0 %v412, 8
      %v603 = vpop.permute.xlu0 %602
      %604 = vrot.lane.b32.xlu0 %v414, 8
      %v605 = vpop.permute.xlu0 %604
      %606 = vrot.lane.b32.xlu0 %v417, 8
      %v607 = vpop.permute.xlu0 %606
      %608 = vrot.lane.b32.xlu0 %v419, 8
      %v609 = vpop.permute.xlu0 %608
      %610 = vrot.lane.b32.xlu0 %v422, 8
      %v611 = vpop.permute.xlu0 %610
      %612 = vrot.lane.b32.xlu0 %v424, 8
      %v613 = vpop.permute.xlu0 %612
      %614 = vrot.lane.b32.xlu0 %v427, 8
      %v615 = vpop.permute.xlu0 %614
      %616 = vrot.lane.b32.xlu0 %v429, 8
      %v617 = vpop.permute.xlu0 %616
      %618 = vrot.lane.b32.xlu0 %v432, 8
      %v619 = vpop.permute.xlu0 %618
      %620 = vrot.lane.b32.xlu0 %v434, 8
      %v621 = vpop.permute.xlu0 %620
      %622 = vrot.lane.b32.xlu0 %v437, 8
      %v623 = vpop.permute.xlu0 %622
      %624 = vrot.lane.b32.xlu0 %v439, 8
      %v625 = vpop.permute.xlu0 %624
      %658 = vrot.lane.b32.xlu0 %v179, 12
      %v659 = vpop.permute.xlu0 %658
      %660 = vrot.lane.b32.xlu0 %v180, 12
      %v661 = vpop.permute.xlu0 %660
      %662 = vrot.lane.b32.xlu0 %v182, 12
      %v663 = vpop.permute.xlu0 %662
      %664 = vrot.lane.b32.xlu0 %v183, 12
      %v665 = vpop.permute.xlu0 %664
      %666 = vrot.lane.b32.xlu0 %v185, 12
      %v667 = vpop.permute.xlu0 %666
      %668 = vrot.lane.b32.xlu0 %v186, 12
      %v669 = vpop.permute.xlu0 %668
      %670 = vrot.lane.b32.xlu0 %v188, 12
      %v671 = vpop.permute.xlu0 %670
      %672 = vrot.lane.b32.xlu0 %v189, 12
      %v673 = vpop.permute.xlu0 %672
      %674 = vrot.lane.b32.xlu0 %v191, 12
      %v675 = vpop.permute.xlu0 %674
      %676 = vrot.lane.b32.xlu0 %v192, 12
      %v677 = vpop.permute.xlu0 %676
      %678 = vrot.lane.b32.xlu0 %v194, 12
      %v679 = vpop.permute.xlu0 %678
      %680 = vrot.lane.b32.xlu0 %v195, 12
      %v681 = vpop.permute.xlu0 %680
      %682 = vrot.lane.b32.xlu0 %v197, 12
      %v683 = vpop.permute.xlu0 %682
      %684 = vrot.lane.b32.xlu0 %v198, 12
      %v685 = vpop.permute.xlu0 %684
      %686 = vrot.lane.b32.xlu0 %v200, 12
      %v687 = vpop.permute.xlu0 %686
      %688 = vrot.lane.b32.xlu0 %v201, 12
      %v689 = vpop.permute.xlu0 %688
      %690 = vrot.lane.b32.xlu0 %v203, 12
      %v691 = vpop.permute.xlu0 %690
      %692 = vrot.lane.b32.xlu0 %v204, 12
      %v693 = vpop.permute.xlu0 %692
      %694 = vrot.lane.b32.xlu0 %v206, 12
      %v695 = vpop.permute.xlu0 %694
      %696 = vrot.lane.b32.xlu0 %v207, 12
      %v697 = vpop.permute.xlu0 %696
      %698 = vrot.lane.b32.xlu0 %v209, 12
      %v699 = vpop.permute.xlu0 %698
      %700 = vrot.lane.b32.xlu0 %v210, 12
      %v701 = vpop.permute.xlu0 %700
      %702 = vrot.lane.b32.xlu0 %v212, 12
      %v703 = vpop.permute.xlu0 %702
      %704 = vrot.lane.b32.xlu0 %v213, 12
      %v705 = vpop.permute.xlu0 %704
      %706 = vrot.lane.b32.xlu0 %v215, 12
      %v707 = vpop.permute.xlu0 %706
      %708 = vrot.lane.b32.xlu0 %v216, 12
      %v709 = vpop.permute.xlu0 %708
      %710 = vrot.lane.b32.xlu0 %v218, 12
      %v711 = vpop.permute.xlu0 %710
      %712 = vrot.lane.b32.xlu0 %v219, 12
      %v713 = vpop.permute.xlu0 %712
      %714 = vrot.lane.b32.xlu0 %v221, 12
      %v715 = vpop.permute.xlu0 %714
      %716 = vrot.lane.b32.xlu0 %v222, 12
      %v717 = vpop.permute.xlu0 %716
      %718 = vrot.lane.b32.xlu0 %v224, 12
      %v719 = vpop.permute.xlu0 %718
      %720 = vrot.lane.b32.xlu0 %v225, 12
      %v721 = vpop.permute.xlu0 %720
      %754 = vrot.lane.b32.xlu0 %v286, 16
      %v755 = vpop.permute.xlu0 %754
      %756 = vrot.lane.b32.xlu0 %v288, 16
      %v757 = vpop.permute.xlu0 %756
      %758 = vrot.lane.b32.xlu0 %v291, 16
      %v759 = vpop.permute.xlu0 %758
      %760 = vrot.lane.b32.xlu0 %v293, 16
      %v761 = vpop.permute.xlu0 %760
      %762 = vrot.lane.b32.xlu0 %v296, 16
      %v763 = vpop.permute.xlu0 %762
      %764 = vrot.lane.b32.xlu0 %v298, 16
      %v765 = vpop.permute.xlu0 %764
      %766 = vrot.lane.b32.xlu0 %v301, 16
      %v767 = vpop.permute.xlu0 %766
      %768 = vrot.lane.b32.xlu0 %v303, 16
      %v769 = vpop.permute.xlu0 %768
      %770 = vrot.lane.b32.xlu0 %v306, 16
      %v771 = vpop.permute.xlu0 %770
      %772 = vrot.lane.b32.xlu0 %v308, 16
      %v773 = vpop.permute.xlu0 %772
      %774 = vrot.lane.b32.xlu0 %v311, 16
      %v775 = vpop.permute.xlu0 %774
      %776 = vrot.lane.b32.xlu0 %v313, 16
      %v777 = vpop.permute.xlu0 %776
      %778 = vrot.lane.b32.xlu0 %v316, 16
      %v779 = vpop.permute.xlu0 %778
      %780 = vrot.lane.b32.xlu0 %v318, 16
      %v781 = vpop.permute.xlu0 %780
      %782 = vrot.lane.b32.xlu0 %v321, 16
      %v783 = vpop.permute.xlu0 %782
      %784 = vrot.lane.b32.xlu0 %v323, 16
      %v785 = vpop.permute.xlu0 %784
      %786 = vrot.lane.b32.xlu0 %v326, 16
      %v787 = vpop.permute.xlu0 %786
      %788 = vrot.lane.b32.xlu0 %v328, 16
      %v789 = vpop.permute.xlu0 %788
      %790 = vrot.lane.b32.xlu0 %v331, 16
      %v791 = vpop.permute.xlu0 %790
      %792 = vrot.lane.b32.xlu0 %v333, 16
      %v793 = vpop.permute.xlu0 %792
      %794 = vrot.lane.b32.xlu0 %v336, 16
      %v795 = vpop.permute.xlu0 %794
      %796 = vrot.lane.b32.xlu0 %v338, 16
      %v797 = vpop.permute.xlu0 %796
      %798 = vrot.lane.b32.xlu0 %v341, 16
      %v799 = vpop.permute.xlu0 %798
      %800 = vrot.lane.b32.xlu0 %v343, 16
      %v801 = vpop.permute.xlu0 %800
      %802 = vrot.lane.b32.xlu0 %v346, 16
      %v803 = vpop.permute.xlu0 %802
      %804 = vrot.lane.b32.xlu0 %v348, 16
      %v805 = vpop.permute.xlu0 %804
      %806 = vrot.lane.b32.xlu0 %v351, 16
      %v807 = vpop.permute.xlu0 %806
      %808 = vrot.lane.b32.xlu0 %v353, 16
      %v809 = vpop.permute.xlu0 %808
      %810 = vrot.lane.b32.xlu0 %v356, 16
      %v811 = vpop.permute.xlu0 %810
      %812 = vrot.lane.b32.xlu0 %v358, 16
      %v813 = vpop.permute.xlu0 %812
      %814 = vrot.lane.b32.xlu0 %v445, 16
      %v815 = vpop.permute.xlu0 %814
      %816 = vrot.lane.b32.xlu0 %v447, 16
      %v817 = vpop.permute.xlu0 %816
      %850 = vrot.lane.b32.xlu0 %v367, 20
      %v851 = vpop.permute.xlu0 %850
      %852 = vrot.lane.b32.xlu0 %v369, 20
      %v853 = vpop.permute.xlu0 %852
      %854 = vrot.lane.b32.xlu0 %v372, 20
      %v855 = vpop.permute.xlu0 %854
      %856 = vrot.lane.b32.xlu0 %v374, 20
      %v857 = vpop.permute.xlu0 %856
      %858 = vrot.lane.b32.xlu0 %v377, 20
      %v859 = vpop.permute.xlu0 %858
      %860 = vrot.lane.b32.xlu0 %v379, 20
      %v861 = vpop.permute.xlu0 %860
      %862 = vrot.lane.b32.xlu0 %v382, 20
      %v863 = vpop.permute.xlu0 %862
      %864 = vrot.lane.b32.xlu0 %v384, 20
      %v865 = vpop.permute.xlu0 %864
      %866 = vrot.lane.b32.xlu0 %v387, 20
      %v867 = vpop.permute.xlu0 %866
      %868 = vrot.lane.b32.xlu0 %v389, 20
      %v869 = vpop.permute.xlu0 %868
      %870 = vrot.lane.b32.xlu0 %v392, 20
      %v871 = vpop.permute.xlu0 %870
      %872 = vrot.lane.b32.xlu0 %v394, 20
      %v873 = vpop.permute.xlu0 %872
      %874 = vrot.lane.b32.xlu0 %v397, 20
      %v875 = vpop.permute.xlu0 %874
      %876 = vrot.lane.b32.xlu0 %v399, 20
      %v877 = vpop.permute.xlu0 %876
      %878 = vrot.lane.b32.xlu0 %v402, 20
      %v879 = vpop.permute.xlu0 %878
      %880 = vrot.lane.b32.xlu0 %v404, 20
      %v881 = vpop.permute.xlu0 %880
      %882 = vrot.lane.b32.xlu0 %v407, 20
      %v883 = vpop.permute.xlu0 %882
      %884 = vrot.lane.b32.xlu0 %v409, 20
      %v885 = vpop.permute.xlu0 %884
      %886 = vrot.lane.b32.xlu0 %v412, 20
      %v887 = vpop.permute.xlu0 %886
      %888 = vrot.lane.b32.xlu0 %v414, 20
      %v889 = vpop.permute.xlu0 %888
      %890 = vrot.lane.b32.xlu0 %v417, 20
      %v891 = vpop.permute.xlu0 %890
      %892 = vrot.lane.b32.xlu0 %v419, 20
      %v893 = vpop.permute.xlu0 %892
      %894 = vrot.lane.b32.xlu0 %v422, 20
      %v895 = vpop.permute.xlu0 %894
      %896 = vrot.lane.b32.xlu0 %v424, 20
      %v897 = vpop.permute.xlu0 %896
      %898 = vrot.lane.b32.xlu0 %v427, 20
      %v899 = vpop.permute.xlu0 %898
      %900 = vrot.lane.b32.xlu0 %v429, 20
      %v901 = vpop.permute.xlu0 %900
      %902 = vrot.lane.b32.xlu0 %v432, 20
      %v903 = vpop.permute.xlu0 %902
      %904 = vrot.lane.b32.xlu0 %v434, 20
      %v905 = vpop.permute.xlu0 %904
      %906 = vrot.lane.b32.xlu0 %v437, 20
      %v907 = vpop.permute.xlu0 %906
      %908 = vrot.lane.b32.xlu0 %v439, 20
      %v909 = vpop.permute.xlu0 %908
      %910 = vrot.lane.b32.xlu0 %v450, 20
      %v911 = vpop.permute.xlu0 %910
      %912 = vrot.lane.b32.xlu0 %v452, 20
      %v913 = vpop.permute.xlu0 %912
      %946 = vrot.lane.b32.xlu0 %v182, 24
      %v947 = vpop.permute.xlu0 %946
      %948 = vrot.lane.b32.xlu0 %v183, 24
      %v949 = vpop.permute.xlu0 %948
      %950 = vrot.lane.b32.xlu0 %v185, 24
      %v951 = vpop.permute.xlu0 %950
      %952 = vrot.lane.b32.xlu0 %v186, 24
      %v953 = vpop.permute.xlu0 %952
      %954 = vrot.lane.b32.xlu0 %v188, 24
      %v955 = vpop.permute.xlu0 %954
      %956 = vrot.lane.b32.xlu0 %v189, 24
      %v957 = vpop.permute.xlu0 %956
      %958 = vrot.lane.b32.xlu0 %v191, 24
      %v959 = vpop.permute.xlu0 %958
      %960 = vrot.lane.b32.xlu0 %v192, 24
      %v961 = vpop.permute.xlu0 %960
      %962 = vrot.lane.b32.xlu0 %v194, 24
      %v963 = vpop.permute.xlu0 %962
      %964 = vrot.lane.b32.xlu0 %v195, 24
      %v965 = vpop.permute.xlu0 %964
      %966 = vrot.lane.b32.xlu0 %v197, 24
      %v967 = vpop.permute.xlu0 %966
      %968 = vrot.lane.b32.xlu0 %v198, 24
      %v969 = vpop.permute.xlu0 %968
      %970 = vrot.lane.b32.xlu0 %v200, 24
      %v971 = vpop.permute.xlu0 %970
      %972 = vrot.lane.b32.xlu0 %v201, 24
      %v973 = vpop.permute.xlu0 %972
      %974 = vrot.lane.b32.xlu0 %v203, 24
      %v975 = vpop.permute.xlu0 %974
      %976 = vrot.lane.b32.xlu0 %v204, 24
      %v977 = vpop.permute.xlu0 %976
      %978 = vrot.lane.b32.xlu0 %v206, 24
      %v979 = vpop.permute.xlu0 %978
      %980 = vrot.lane.b32.xlu0 %v207, 24
      %v981 = vpop.permute.xlu0 %980
      %982 = vrot.lane.b32.xlu0 %v209, 24
      %v983 = vpop.permute.xlu0 %982
      %984 = vrot.lane.b32.xlu0 %v210, 24
      %v985 = vpop.permute.xlu0 %984
      %986 = vrot.lane.b32.xlu0 %v212, 24
      %v987 = vpop.permute.xlu0 %986
      %988 = vrot.lane.b32.xlu0 %v213, 24
      %v989 = vpop.permute.xlu0 %988
      %990 = vrot.lane.b32.xlu0 %v215, 24
      %v991 = vpop.permute.xlu0 %990
      %992 = vrot.lane.b32.xlu0 %v216, 24
      %v993 = vpop.permute.xlu0 %992
      %994 = vrot.lane.b32.xlu0 %v218, 24
      %v995 = vpop.permute.xlu0 %994
      %996 = vrot.lane.b32.xlu0 %v219, 24
      %v997 = vpop.permute.xlu0 %996
      %998 = vrot.lane.b32.xlu0 %v221, 24
      %v999 = vpop.permute.xlu0 %998
      %1000 = vrot.lane.b32.xlu0 %v222, 24
      %v1001 = vpop.permute.xlu0 %1000
      %1002 = vrot.lane.b32.xlu0 %v224, 24
      %v1003 = vpop.permute.xlu0 %1002
      %1004 = vrot.lane.b32.xlu0 %v225, 24
      %v1005 = vpop.permute.xlu0 %1004
      %1006 = vrot.lane.b32.xlu0 %v227, 24
      %v1007 = vpop.permute.xlu0 %1006
      %1008 = vrot.lane.b32.xlu0 %v228, 24
      %v1009 = vpop.permute.xlu0 %1008
      %1042 = vrot.lane.b32.xlu0 %v291, 28
      %v1043 = vpop.permute.xlu0 %1042
      %1044 = vrot.lane.b32.xlu0 %v293, 28
      %v1045 = vpop.permute.xlu0 %1044
      %1046 = vrot.lane.b32.xlu0 %v296, 28
      %v1047 = vpop.permute.xlu0 %1046
      %1048 = vrot.lane.b32.xlu0 %v298, 28
      %v1049 = vpop.permute.xlu0 %1048
      %1050 = vrot.lane.b32.xlu0 %v301, 28
      %v1051 = vpop.permute.xlu0 %1050
      %1052 = vrot.lane.b32.xlu0 %v303, 28
      %v1053 = vpop.permute.xlu0 %1052
      %1054 = vrot.lane.b32.xlu0 %v306, 28
      %v1055 = vpop.permute.xlu0 %1054
      %1056 = vrot.lane.b32.xlu0 %v308, 28
      %v1057 = vpop.permute.xlu0 %1056
      %1058 = vrot.lane.b32.xlu0 %v311, 28
      %v1059 = vpop.permute.xlu0 %1058
      %1060 = vrot.lane.b32.xlu0 %v313, 28
      %v1061 = vpop.permute.xlu0 %1060
      %1062 = vrot.lane.b32.xlu0 %v316, 28
      %v1063 = vpop.permute.xlu0 %1062
      %1064 = vrot.lane.b32.xlu0 %v318, 28
      %v1065 = vpop.permute.xlu0 %1064
      %1066 = vrot.lane.b32.xlu0 %v321, 28
      %v1067 = vpop.permute.xlu0 %1066
      %1068 = vrot.lane.b32.xlu0 %v323, 28
      %v1069 = vpop.permute.xlu0 %1068
      %1070 = vrot.lane.b32.xlu0 %v326, 28
      %v1071 = vpop.permute.xlu0 %1070
      %1072 = vrot.lane.b32.xlu0 %v328, 28
      %v1073 = vpop.permute.xlu0 %1072
      %1074 = vrot.lane.b32.xlu0 %v331, 28
      %v1075 = vpop.permute.xlu0 %1074
      %1076 = vrot.lane.b32.xlu0 %v333, 28
      %v1077 = vpop.permute.xlu0 %1076
      %1078 = vrot.lane.b32.xlu0 %v336, 28
      %v1079 = vpop.permute.xlu0 %1078
      %1080 = vrot.lane.b32.xlu0 %v338, 28
      %v1081 = vpop.permute.xlu0 %1080
      %1082 = vrot.lane.b32.xlu0 %v341, 28
      %v1083 = vpop.permute.xlu0 %1082
      %1084 = vrot.lane.b32.xlu0 %v343, 28
      %v1085 = vpop.permute.xlu0 %1084
      %1086 = vrot.lane.b32.xlu0 %v346, 28
      %v1087 = vpop.permute.xlu0 %1086
      %1088 = vrot.lane.b32.xlu0 %v348, 28
      %v1089 = vpop.permute.xlu0 %1088
      %1090 = vrot.lane.b32.xlu0 %v351, 28
      %v1091 = vpop.permute.xlu0 %1090
      %1092 = vrot.lane.b32.xlu0 %v353, 28
      %v1093 = vpop.permute.xlu0 %1092
      %1094 = vrot.lane.b32.xlu0 %v356, 28
      %v1095 = vpop.permute.xlu0 %1094
      %1096 = vrot.lane.b32.xlu0 %v358, 28
      %v1097 = vpop.permute.xlu0 %1096
      %1098 = vrot.lane.b32.xlu0 %v445, 28
      %v1099 = vpop.permute.xlu0 %1098
      %1100 = vrot.lane.b32.xlu0 %v447, 28
      %v1101 = vpop.permute.xlu0 %1100
      %1102 = vrot.lane.b32.xlu0 %v458, 28
      %v1103 = vpop.permute.xlu0 %1102
      %1104 = vrot.lane.b32.xlu0 %v460, 28
      %v1105 = vpop.permute.xlu0 %1104
      %1138 = vrot.lane.b32.xlu0 %v372, 32
      %v1139 = vpop.permute.xlu0 %1138
      %1140 = vrot.lane.b32.xlu0 %v374, 32
      %v1141 = vpop.permute.xlu0 %1140
      %1142 = vrot.lane.b32.xlu0 %v377, 32
      %v1143 = vpop.permute.xlu0 %1142
      %1144 = vrot.lane.b32.xlu0 %v379, 32
      %v1145 = vpop.permute.xlu0 %1144
      %1146 = vrot.lane.b32.xlu0 %v382, 32
      %v1147 = vpop.permute.xlu0 %1146
      %1148 = vrot.lane.b32.xlu0 %v384, 32
      %v1149 = vpop.permute.xlu0 %1148
      %1150 = vrot.lane.b32.xlu0 %v387, 32
      %v1151 = vpop.permute.xlu0 %1150
      %1152 = vrot.lane.b32.xlu0 %v389, 32
      %v1153 = vpop.permute.xlu0 %1152
      %1154 = vrot.lane.b32.xlu0 %v392, 32
      %v1155 = vpop.permute.xlu0 %1154
      %1156 = vrot.lane.b32.xlu0 %v394, 32
      %v1157 = vpop.permute.xlu0 %1156
      %1158 = vrot.lane.b32.xlu0 %v397, 32
      %v1159 = vpop.permute.xlu0 %1158
      %1160 = vrot.lane.b32.xlu0 %v399, 32
      %v1161 = vpop.permute.xlu0 %1160
      %1162 = vrot.lane.b32.xlu0 %v402, 32
      %v1163 = vpop.permute.xlu0 %1162
      %1164 = vrot.lane.b32.xlu0 %v404, 32
      %v1165 = vpop.permute.xlu0 %1164
      %1166 = vrot.lane.b32.xlu0 %v407, 32
      %v1167 = vpop.permute.xlu0 %1166
      %1168 = vrot.lane.b32.xlu0 %v409, 32
      %v1169 = vpop.permute.xlu0 %1168
      %1170 = vrot.lane.b32.xlu0 %v412, 32
      %v1171 = vpop.permute.xlu0 %1170
      %1172 = vrot.lane.b32.xlu0 %v414, 32
      %v1173 = vpop.permute.xlu0 %1172
      %1174 = vrot.lane.b32.xlu0 %v417, 32
      %v1175 = vpop.permute.xlu0 %1174
      %1176 = vrot.lane.b32.xlu0 %v419, 32
      %v1177 = vpop.permute.xlu0 %1176
      %1178 = vrot.lane.b32.xlu0 %v422, 32
      %v1179 = vpop.permute.xlu0 %1178
      %1180 = vrot.lane.b32.xlu0 %v424, 32
      %v1181 = vpop.permute.xlu0 %1180
      %1182 = vrot.lane.b32.xlu0 %v427, 32
      %v1183 = vpop.permute.xlu0 %1182
      %1184 = vrot.lane.b32.xlu0 %v429, 32
      %v1185 = vpop.permute.xlu0 %1184
      %1186 = vrot.lane.b32.xlu0 %v432, 32
      %v1187 = vpop.permute.xlu0 %1186
      %1188 = vrot.lane.b32.xlu0 %v434, 32
      %v1189 = vpop.permute.xlu0 %1188
      %1190 = vrot.lane.b32.xlu0 %v437, 32
      %v1191 = vpop.permute.xlu0 %1190
      %1192 = vrot.lane.b32.xlu0 %v439, 32
      %v1193 = vpop.permute.xlu0 %1192
      %1194 = vrot.lane.b32.xlu0 %v450, 32
      %v1195 = vpop.permute.xlu0 %1194
      %1196 = vrot.lane.b32.xlu0 %v452, 32
      %v1197 = vpop.permute.xlu0 %1196
      %1198 = vrot.lane.b32.xlu0 %v463, 32
      %v1199 = vpop.permute.xlu0 %1198
      %1200 = vrot.lane.b32.xlu0 %v465, 32
      %v1201 = vpop.permute.xlu0 %1200
      %vm1234 = vcmask 31744
      %v1235 = vsel %vm1234, %v176, %v467
      %v1236 = vsel %vm1234, %v177, %v469
      %v1237 = vsel %vm1234, %v179, %v471
      %v1238 = vsel %vm1234, %v180, %v473
      %v1239 = vsel %vm1234, %v182, %v475
      %v1240 = vsel %vm1234, %v183, %v477
      %v1241 = vsel %vm1234, %v185, %v479
      %v1242 = vsel %vm1234, %v186, %v481
      %v1243 = vsel %vm1234, %v188, %v483
      %v1244 = vsel %vm1234, %v189, %v485
      %v1245 = vsel %vm1234, %v191, %v487
      %v1246 = vsel %vm1234, %v192, %v489
      %v1247 = vsel %vm1234, %v194, %v491
      %v1248 = vsel %vm1234, %v195, %v493
      %v1249 = vsel %vm1234, %v197, %v495
      %v1250 = vsel %vm1234, %v198, %v497
      %v1251 = vsel %vm1234, %v200, %v499
      %v1252 = vsel %vm1234, %v201, %v501
      %v1253 = vsel %vm1234, %v203, %v503
      %v1254 = vsel %vm1234, %v204, %v505
      %v1255 = vsel %vm1234, %v206, %v507
      %v1256 = vsel %vm1234, %v207, %v509
      %v1257 = vsel %vm1234, %v209, %v511
      %v1258 = vsel %vm1234, %v210, %v513
      %v1259 = vsel %vm1234, %v212, %v515
      %v1260 = vsel %vm1234, %v213, %v517
      %v1261 = vsel %vm1234, %v215, %v519
      %v1262 = vsel %vm1234, %v216, %v521
      %v1263 = vsel %vm1234, %v218, %v523
      %v1264 = vsel %vm1234, %v219, %v525
      %v1265 = vsel %vm1234, %v221, %v527
      %v1266 = vsel %vm1234, %v222, %v529
      %vm1267 = vcmask 64512
      %v1268 = vsel %vm1267, %v1235, %v563
      %v1269 = vsel %vm1267, %v1236, %v565
      %v1270 = vsel %vm1267, %v1237, %v567
      %v1271 = vsel %vm1267, %v1238, %v569
      %v1272 = vsel %vm1267, %v1239, %v571
      %v1273 = vsel %vm1267, %v1240, %v573
      %v1274 = vsel %vm1267, %v1241, %v575
      %v1275 = vsel %vm1267, %v1242, %v577
      %v1276 = vsel %vm1267, %v1243, %v579
      %v1277 = vsel %vm1267, %v1244, %v581
      %v1278 = vsel %vm1267, %v1245, %v583
      %v1279 = vsel %vm1267, %v1246, %v585
      %v1280 = vsel %vm1267, %v1247, %v587
      %v1281 = vsel %vm1267, %v1248, %v589
      %v1282 = vsel %vm1267, %v1249, %v591
      %v1283 = vsel %vm1267, %v1250, %v593
      %v1284 = vsel %vm1267, %v1251, %v595
      %v1285 = vsel %vm1267, %v1252, %v597
      %v1286 = vsel %vm1267, %v1253, %v599
      %v1287 = vsel %vm1267, %v1254, %v601
      %v1288 = vsel %vm1267, %v1255, %v603
      %v1289 = vsel %vm1267, %v1256, %v605
      %v1290 = vsel %vm1267, %v1257, %v607
      %v1291 = vsel %vm1267, %v1258, %v609
      %v1292 = vsel %vm1267, %v1259, %v611
      %v1293 = vsel %vm1267, %v1260, %v613
      %v1294 = vsel %vm1267, %v1261, %v615
      %v1295 = vsel %vm1267, %v1262, %v617
      %v1296 = vsel %vm1267, %v1263, %v619
      %v1297 = vsel %vm1267, %v1264, %v621
      %v1298 = vsel %vm1267, %v1265, %v623
      %v1299 = vsel %vm1267, %v1266, %v625
      %vm1300 = vcmask 97280
      %v1301 = vsel %vm1300, %v1268, %v659
      %v1302 = vsel %vm1300, %v1269, %v661
      %v1303 = vsel %vm1300, %v1270, %v663
      %v1304 = vsel %vm1300, %v1271, %v665
      %v1305 = vsel %vm1300, %v1272, %v667
      %v1306 = vsel %vm1300, %v1273, %v669
      %v1307 = vsel %vm1300, %v1274, %v671
      %v1308 = vsel %vm1300, %v1275, %v673
      %v1309 = vsel %vm1300, %v1276, %v675
      %v1310 = vsel %vm1300, %v1277, %v677
      %v1311 = vsel %vm1300, %v1278, %v679
      %v1312 = vsel %vm1300, %v1279, %v681
      %v1313 = vsel %vm1300, %v1280, %v683
      %v1314 = vsel %vm1300, %v1281, %v685
      %v1315 = vsel %vm1300, %v1282, %v687
      %v1316 = vsel %vm1300, %v1283, %v689
      %v1317 = vsel %vm1300, %v1284, %v691
      %v1318 = vsel %vm1300, %v1285, %v693
      %v1319 = vsel %vm1300, %v1286, %v695
      %v1320 = vsel %vm1300, %v1287, %v697
      %v1321 = vsel %vm1300, %v1288, %v699
      %v1322 = vsel %vm1300, %v1289, %v701
      %v1323 = vsel %vm1300, %v1290, %v703
      %v1324 = vsel %vm1300, %v1291, %v705
      %v1325 = vsel %vm1300, %v1292, %v707
      %v1326 = vsel %vm1300, %v1293, %v709
      %v1327 = vsel %vm1300, %v1294, %v711
      %v1328 = vsel %vm1300, %v1295, %v713
      %v1329 = vsel %vm1300, %v1296, %v715
      %v1330 = vsel %vm1300, %v1297, %v717
      %v1331 = vsel %vm1300, %v1298, %v719
      %v1332 = vsel %vm1300, %v1299, %v721
      %vm1333 = vcmask 130048
      %v1334 = vsel %vm1333, %v1301, %v755
      %v1335 = vsel %vm1333, %v1302, %v757
      %v1336 = vsel %vm1333, %v1303, %v759
      %v1337 = vsel %vm1333, %v1304, %v761
      %v1338 = vsel %vm1333, %v1305, %v763
      %v1339 = vsel %vm1333, %v1306, %v765
      %v1340 = vsel %vm1333, %v1307, %v767
      %v1341 = vsel %vm1333, %v1308, %v769
      %v1342 = vsel %vm1333, %v1309, %v771
      %v1343 = vsel %vm1333, %v1310, %v773
      %v1344 = vsel %vm1333, %v1311, %v775
      %v1345 = vsel %vm1333, %v1312, %v777
      %v1346 = vsel %vm1333, %v1313, %v779
      %v1347 = vsel %vm1333, %v1314, %v781
      %v1348 = vsel %vm1333, %v1315, %v783
      %v1349 = vsel %vm1333, %v1316, %v785
      %v1350 = vsel %vm1333, %v1317, %v787
      %v1351 = vsel %vm1333, %v1318, %v789
      %v1352 = vsel %vm1333, %v1319, %v791
      %v1353 = vsel %vm1333, %v1320, %v793
      %v1354 = vsel %vm1333, %v1321, %v795
      %v1355 = vsel %vm1333, %v1322, %v797
      %v1356 = vsel %vm1333, %v1323, %v799
      %v1357 = vsel %vm1333, %v1324, %v801
      %v1358 = vsel %vm1333, %v1325, %v803
      %v1359 = vsel %vm1333, %v1326, %v805
      %v1360 = vsel %vm1333, %v1327, %v807
      %v1361 = vsel %vm1333, %v1328, %v809
      %v1362 = vsel %vm1333, %v1329, %v811
      %v1363 = vsel %vm1333, %v1330, %v813
      %v1364 = vsel %vm1333, %v1331, %v815
      %v1365 = vsel %vm1333, %v1332, %v817
      %vm1366 = vcmask 162816
      %v1367 = vsel %vm1366, %v1334, %v851
      %v1368 = vsel %vm1366, %v1335, %v853
      %v1369 = vsel %vm1366, %v1336, %v855
      %v1370 = vsel %vm1366, %v1337, %v857
      %v1371 = vsel %vm1366, %v1338, %v859
      %v1372 = vsel %vm1366, %v1339, %v861
      %v1373 = vsel %vm1366, %v1340, %v863
      %v1374 = vsel %vm1366, %v1341, %v865
      %v1375 = vsel %vm1366, %v1342, %v867
      %v1376 = vsel %vm1366, %v1343, %v869
      %v1377 = vsel %vm1366, %v1344, %v871
      %v1378 = vsel %vm1366, %v1345, %v873
      %v1379 = vsel %vm1366, %v1346, %v875
      %v1380 = vsel %vm1366, %v1347, %v877
      %v1381 = vsel %vm1366, %v1348, %v879
      %v1382 = vsel %vm1366, %v1349, %v881
      %v1383 = vsel %vm1366, %v1350, %v883
      %v1384 = vsel %vm1366, %v1351, %v885
      %v1385 = vsel %vm1366, %v1352, %v887
      %v1386 = vsel %vm1366, %v1353, %v889
      %v1387 = vsel %vm1366, %v1354, %v891
      %v1388 = vsel %vm1366, %v1355, %v893
      %v1389 = vsel %vm1366, %v1356, %v895
      %v1390 = vsel %vm1366, %v1357, %v897
      %v1391 = vsel %vm1366, %v1358, %v899
      %v1392 = vsel %vm1366, %v1359, %v901
      %v1393 = vsel %vm1366, %v1360, %v903
      %v1394 = vsel %vm1366, %v1361, %v905
      %v1395 = vsel %vm1366, %v1362, %v907
      %v1396 = vsel %vm1366, %v1363, %v909
      %v1397 = vsel %vm1366, %v1364, %v911
      %v1398 = vsel %vm1366, %v1365, %v913
      %vm1399 = vcmask 195584
      %v1400 = vsel %vm1399, %v1367, %v947
      %v1401 = vsel %vm1399, %v1368, %v949
      %v1402 = vsel %vm1399, %v1369, %v951
      %v1403 = vsel %vm1399, %v1370, %v953
      %v1404 = vsel %vm1399, %v1371, %v955
      %v1405 = vsel %vm1399, %v1372, %v957
      %v1406 = vsel %vm1399, %v1373, %v959
      %v1407 = vsel %vm1399, %v1374, %v961
      %v1408 = vsel %vm1399, %v1375, %v963
      %v1409 = vsel %vm1399, %v1376, %v965
      %v1410 = vsel %vm1399, %v1377, %v967
      %v1411 = vsel %vm1399, %v1378, %v969
      %v1412 = vsel %vm1399, %v1379, %v971
      %v1413 = vsel %vm1399, %v1380, %v973
      %v1414 = vsel %vm1399, %v1381, %v975
      %v1415 = vsel %vm1399, %v1382, %v977
      %v1416 = vsel %vm1399, %v1383, %v979
      %v1417 = vsel %vm1399, %v1384, %v981
      %v1418 = vsel %vm1399, %v1385, %v983
      %v1419 = vsel %vm1399, %v1386, %v985
      %v1420 = vsel %vm1399, %v1387, %v987
      %v1421 = vsel %vm1399, %v1388, %v989
      %v1422 = vsel %vm1399, %v1389, %v991
      %v1423 = vsel %vm1399, %v1390, %v993
      %v1424 = vsel %vm1399, %v1391, %v995
      %v1425 = vsel %vm1399, %v1392, %v997
      %v1426 = vsel %vm1399, %v1393, %v999
      %v1427 = vsel %vm1399, %v1394, %v1001
      %v1428 = vsel %vm1399, %v1395, %v1003
      %v1429 = vsel %vm1399, %v1396, %v1005
      %v1430 = vsel %vm1399, %v1397, %v1007
      %v1431 = vsel %vm1399, %v1398, %v1009
      %vm1432 = vcmask 228352
      %v1433 = vsel %vm1432, %v1400, %v1043
      %v1434 = vsel %vm1432, %v1401, %v1045
      %v1435 = vsel %vm1432, %v1402, %v1047
      %v1436 = vsel %vm1432, %v1403, %v1049
      %v1437 = vsel %vm1432, %v1404, %v1051
      %v1438 = vsel %vm1432, %v1405, %v1053
      %v1439 = vsel %vm1432, %v1406, %v1055
      %v1440 = vsel %vm1432, %v1407, %v1057
      %v1441 = vsel %vm1432, %v1408, %v1059
      %v1442 = vsel %vm1432, %v1409, %v1061
      %v1443 = vsel %vm1432, %v1410, %v1063
      %v1444 = vsel %vm1432, %v1411, %v1065
      %v1445 = vsel %vm1432, %v1412, %v1067
      %v1446 = vsel %vm1432, %v1413, %v1069
      %v1447 = vsel %vm1432, %v1414, %v1071
      %v1448 = vsel %vm1432, %v1415, %v1073
      %v1449 = vsel %vm1432, %v1416, %v1075
      %v1450 = vsel %vm1432, %v1417, %v1077
      %v1451 = vsel %vm1432, %v1418, %v1079
      %v1452 = vsel %vm1432, %v1419, %v1081
      %v1453 = vsel %vm1432, %v1420, %v1083
      %v1454 = vsel %vm1432, %v1421, %v1085
      %v1455 = vsel %vm1432, %v1422, %v1087
      %v1456 = vsel %vm1432, %v1423, %v1089
      %v1457 = vsel %vm1432, %v1424, %v1091
      %v1458 = vsel %vm1432, %v1425, %v1093
      %v1459 = vsel %vm1432, %v1426, %v1095
      %v1460 = vsel %vm1432, %v1427, %v1097
      %v1461 = vsel %vm1432, %v1428, %v1099
      %v1462 = vsel %vm1432, %v1429, %v1101
      %v1463 = vsel %vm1432, %v1430, %v1103
      %v1464 = vsel %vm1432, %v1431, %v1105
      %vm1465 = vcmask 261120
      %v1466 = vsel %vm1465, %v1433, %v1139
      %v1467 = vsel %vm1465, %v1434, %v1141
      %v1468 = vsel %vm1465, %v1435, %v1143
      %v1469 = vsel %vm1465, %v1436, %v1145
      %v1470 = vsel %vm1465, %v1437, %v1147
      %v1471 = vsel %vm1465, %v1438, %v1149
      %v1472 = vsel %vm1465, %v1439, %v1151
      %v1473 = vsel %vm1465, %v1440, %v1153
      %v1474 = vsel %vm1465, %v1441, %v1155
      %v1475 = vsel %vm1465, %v1442, %v1157
      %v1476 = vsel %vm1465, %v1443, %v1159
      %v1477 = vsel %vm1465, %v1444, %v1161
      %v1478 = vsel %vm1465, %v1445, %v1163
      %v1479 = vsel %vm1465, %v1446, %v1165
      %v1480 = vsel %vm1465, %v1447, %v1167
      %v1481 = vsel %vm1465, %v1448, %v1169
      %v1482 = vsel %vm1465, %v1449, %v1171
      %v1483 = vsel %vm1465, %v1450, %v1173
      %v1484 = vsel %vm1465, %v1451, %v1175
      %v1485 = vsel %vm1465, %v1452, %v1177
      %v1486 = vsel %vm1465, %v1453, %v1179
      %v1487 = vsel %vm1465, %v1454, %v1181
      %v1488 = vsel %vm1465, %v1455, %v1183
      %v1489 = vsel %vm1465, %v1456, %v1185
      %v1490 = vsel %vm1465, %v1457, %v1187
      %v1491 = vsel %vm1465, %v1458, %v1189
      %v1492 = vsel %vm1465, %v1459, %v1191
      %v1493 = vsel %vm1465, %v1460, %v1193
      %v1494 = vsel %vm1465, %v1461, %v1195
      %v1495 = vsel %vm1465, %v1462, %v1197
      %v1496 = vsel %vm1465, %v1463, %v1199
      %v1497 = vsel %vm1465, %v1464, %v1201
      %v1498 = vld [vmem:[%s1] sm:$0xff]
      %v1499 = vld [vmem:[%s1 + $0x8] sm:$0xff]
      %v1500 = vld [vmem:[%s1 + $0x10] sm:$0xff]
      %v1501 = vld [vmem:[%s1 + $0x18] sm:$0xff]
      %v1502 = vld [vmem:[%s1 + $0x20] sm:$0xf]
      %vm1503 = vcmask 293888
      %v1505 = vsel %vm1503, %v1466, 0
      %v1508 = vsel %vm1503, %v1467, 0
      %v1511 = vsel %vm1503, %v1468, 0
      %v1514 = vsel %vm1503, %v1469, 0
      %v1517 = vsel %vm1503, %v1470, 0
      %v1520 = vsel %vm1503, %v1471, 0
      %v1523 = vsel %vm1503, %v1472, 0
      %v1526 = vsel %vm1503, %v1473, 0
      %v1529 = vsel %vm1503, %v1474, 0
      %v1532 = vsel %vm1503, %v1475, 0
      %v1535 = vsel %vm1503, %v1476, 0
      %v1538 = vsel %vm1503, %v1477, 0
      %v1541 = vsel %vm1503, %v1478, 0
      %v1544 = vsel %vm1503, %v1479, 0
      %v1547 = vsel %vm1503, %v1480, 0
      %v1550 = vsel %vm1503, %v1481, 0
      %v1553 = vsel %vm1503, %v1482, 0
      %v1556 = vsel %vm1503, %v1483, 0
      %v1559 = vsel %vm1503, %v1484, 0
      %v1562 = vsel %vm1503, %v1485, 0
      %v1565 = vsel %vm1503, %v1486, 0
      %v1568 = vsel %vm1503, %v1487, 0
      %v1571 = vsel %vm1503, %v1488, 0
      %v1574 = vsel %vm1503, %v1489, 0
      %v1577 = vsel %vm1503, %v1490, 0
      %v1580 = vsel %vm1503, %v1491, 0
      %v1583 = vsel %vm1503, %v1492, 0
      %v1586 = vsel %vm1503, %v1493, 0
      %v1589 = vsel %vm1503, %v1494, 0
      %v1592 = vsel %vm1503, %v1495, 0
      %v1595 = vsel %vm1503, %v1496, 0
      %v1598 = vsel %vm1503, %v1497, 0
      %vm1600 = vcmask 1043456
      %v1602 = vsel %vm1600, %v1502, 0
      %1604 = vmatprep.subr.mxu0 0.0
      %1605 = vmatpush1.msra.mxu0 0.0
      %1606 = vmatprep.subr.mxu0 0.0
      %1607 = vmatpush1.msra.mxu0 0.0
      %1608 = vmatprep.subr.mxu0 0.0
      %1609 = vmatpush1.msra.mxu0 0.0
      %1610 = vmatprep.subr.mxu0 0.0
      %1611 = vmatpush1.msra.mxu0 0.0
      %1612 = vmatprep.subr.mxu0 0.0
      %1613 = vmatpush1.msra.mxu0 0.0
      %1614 = vmatprep.subr.mxu0 0.0
      %1615 = vmatpush1.msra.mxu0 0.0
      %1616 = vmatprep.subr.mxu0 0.0
      %1617 = vmatpush1.msra.mxu0 0.0
      %1618 = vmatprep.subr.mxu0 0.0
      %1619 = vmatpush1.msra.mxu0 0.0
      %1620 = vmatprep.subr.mxu0 0.0
      %1621 = vmatpush1.msra.mxu0 0.0
      %1622 = vmatprep.subr.mxu0 0.0
      %1623 = vmatpush1.msra.mxu0 0.0
      %1624 = vmatprep.subr.mxu0 0.0
      %1625 = vmatpush1.msra.mxu0 0.0
      %1626 = vmatprep.subr.mxu0 0.0
      %1627 = vmatpush1.msra.mxu0 %v1602
      %1628 = vmatprep.subr.mxu0 0.0
      %1629 = vmatpush1.msra.mxu0 %v1501
      %1630 = vmatprep.subr.mxu0 0.0
      %1631 = vmatpush1.msra.mxu0 %v1500
      %1632 = vmatprep.subr.mxu0 0.0
      %1633 = vmatpush1.msra.mxu0 %v1499
      %1634 = vmatprep.subr.mxu0 0.0
      %1635 = vmatpush1.msra.mxu0 %v1498
      %1636 = vmatprep.subr.mxu0 0.0
      %1637 = vmatpush2.msra.mxu0 0.0
      %1638 = vmatprep.subr.mxu0 0.0
      %1639 = vmatpush2.msra.mxu0 0.0
      %1640 = vmatprep.subr.mxu0 0.0
      %1641 = vmatpush2.msra.mxu0 0.0
      %1642 = vmatprep.subr.mxu0 0.0
      %1643 = vmatpush2.msra.mxu0 0.0
      %1644 = vmatprep.subr.mxu0 0.0
      %1645 = vmatpush2.msra.mxu0 0.0
      %1646 = vmatprep.subr.mxu0 0.0
      %1647 = vmatpush2.msra.mxu0 0.0
      %1648 = vmatprep.subr.mxu0 0.0
      %1649 = vmatpush2.msra.mxu0 0.0
      %1650 = vmatprep.subr.mxu0 0.0
      %1651 = vmatpush2.msra.mxu0 0.0
      %1652 = vmatprep.subr.mxu0 0.0
      %1653 = vmatpush2.msra.mxu0 0.0
      %1654 = vmatprep.subr.mxu0 0.0
      %1655 = vmatpush2.msra.mxu0 0.0
      %1656 = vmatprep.subr.mxu0 0.0
      %1657 = vmatpush2.msra.mxu0 0.0
      %1658 = vmatprep.subr.mxu0 0.0
      %1659 = vmatpush2.msra.mxu0 0.0
      %1660 = vmatprep.subr.mxu0 0.0
      %1661 = vmatpush2.msra.mxu0 0.0
      %1662 = vmatprep.subr.mxu0 0.0
      %1663 = vmatpush2.msra.mxu0 0.0
      %1664 = vmatprep.subr.mxu0 0.0
      %1665 = vmatpush2.msra.mxu0 0.0
      %1666 = vmatprep.subr.mxu0 0.0
      %1667 = vmatpush2.msra.mxu0 0.0
      %1668 = vmatprep.mubr.f32.mxu0 0.0
      %1669 = vmatmul.mubr.f32.gmra.mxu0 %v1505
      %v1670 = vpop.f32.mrf.mxu0
      %v1671 = vadd.f32 0.0, %v1670
      %v1672 = vpop.f32.mrf.mxu0
      %1673 = vmatprep.mubr.f32.mxu0 0.0
      %1674 = vmatmul.mubr.f32.gmra.mxu0 %v1508
      %v1675 = vpop.f32.mrf.mxu0
      %v1676 = vadd.f32 0.0, %v1675
      %v1677 = vpop.f32.mrf.mxu0
      %1678 = vmatprep.mubr.f32.mxu0 0.0
      %1679 = vmatmul.mubr.f32.gmra.mxu0 %v1511
      %v1680 = vpop.f32.mrf.mxu0
      %v1681 = vadd.f32 0.0, %v1680
      %v1682 = vpop.f32.mrf.mxu0
      %1683 = vmatprep.mubr.f32.mxu0 0.0
      %1684 = vmatmul.mubr.f32.gmra.mxu0 %v1514
      %v1685 = vpop.f32.mrf.mxu0
      %v1686 = vadd.f32 0.0, %v1685
      %v1687 = vpop.f32.mrf.mxu0
      %1688 = vmatprep.mubr.f32.mxu0 0.0
      %1689 = vmatmul.mubr.f32.gmra.mxu0 %v1517
      %v1690 = vpop.f32.mrf.mxu0
      %v1691 = vadd.f32 0.0, %v1690
      %v1692 = vpop.f32.mrf.mxu0
      %1693 = vmatprep.mubr.f32.mxu0 0.0
      %1694 = vmatmul.mubr.f32.gmra.mxu0 %v1520
      %v1695 = vpop.f32.mrf.mxu0
      %v1696 = vadd.f32 0.0, %v1695
      %v1697 = vpop.f32.mrf.mxu0
      %1698 = vmatprep.mubr.f32.mxu0 0.0
      %1699 = vmatmul.mubr.f32.gmra.mxu0 %v1523
      %v1700 = vpop.f32.mrf.mxu0
      %v1701 = vadd.f32 0.0, %v1700
      %v1702 = vpop.f32.mrf.mxu0
      %1703 = vmatprep.mubr.f32.mxu0 0.0
      %1704 = vmatmul.mubr.f32.gmra.mxu0 %v1526
      %v1705 = vpop.f32.mrf.mxu0
      %v1706 = vadd.f32 0.0, %v1705
      %v1707 = vpop.f32.mrf.mxu0
      %1708 = vmatprep.mubr.f32.mxu0 0.0
      %1709 = vmatmul.mubr.f32.gmra.mxu0 %v1529
      %v1710 = vpop.f32.mrf.mxu0
      %v1711 = vadd.f32 0.0, %v1710
      %v1712 = vpop.f32.mrf.mxu0
      %1713 = vmatprep.mubr.f32.mxu0 0.0
      %1714 = vmatmul.mubr.f32.gmra.mxu0 %v1532
      %v1715 = vpop.f32.mrf.mxu0
      %v1716 = vadd.f32 0.0, %v1715
      %v1717 = vpop.f32.mrf.mxu0
      %1718 = vmatprep.mubr.f32.mxu0 0.0
      %1719 = vmatmul.mubr.f32.gmra.mxu0 %v1535
      %v1720 = vpop.f32.mrf.mxu0
      %v1721 = vadd.f32 0.0, %v1720
      %v1722 = vpop.f32.mrf.mxu0
      %1723 = vmatprep.mubr.f32.mxu0 0.0
      %1724 = vmatmul.mubr.f32.gmra.mxu0 %v1538
      %v1725 = vpop.f32.mrf.mxu0
      %v1726 = vadd.f32 0.0, %v1725
      %v1727 = vpop.f32.mrf.mxu0
      %1728 = vmatprep.mubr.f32.mxu0 0.0
      %1729 = vmatmul.mubr.f32.gmra.mxu0 %v1541
      %v1730 = vpop.f32.mrf.mxu0
      %v1731 = vadd.f32 0.0, %v1730
      %v1732 = vpop.f32.mrf.mxu0
      %1733 = vmatprep.mubr.f32.mxu0 0.0
      %1734 = vmatmul.mubr.f32.gmra.mxu0 %v1544
      %v1735 = vpop.f32.mrf.mxu0
      %v1736 = vadd.f32 0.0, %v1735
      %v1737 = vpop.f32.mrf.mxu0
      %1738 = vmatprep.mubr.f32.mxu0 0.0
      %1739 = vmatmul.mubr.f32.gmra.mxu0 %v1547
      %v1740 = vpop.f32.mrf.mxu0
      %v1741 = vadd.f32 0.0, %v1740
      %v1742 = vpop.f32.mrf.mxu0
      %1743 = vmatprep.mubr.f32.mxu0 0.0
      %1744 = vmatmul.mubr.f32.gmra.mxu0 %v1550
      %v1745 = vpop.f32.mrf.mxu0
      %v1746 = vadd.f32 0.0, %v1745
      %v1747 = vpop.f32.mrf.mxu0
      %1748 = vmatprep.mubr.f32.mxu0 0.0
      %1749 = vmatmul.mubr.f32.gmra.mxu0 %v1553
      %v1750 = vpop.f32.mrf.mxu0
      %v1751 = vadd.f32 0.0, %v1750
      %v1752 = vpop.f32.mrf.mxu0
      %1753 = vmatprep.mubr.f32.mxu0 0.0
      %1754 = vmatmul.mubr.f32.gmra.mxu0 %v1556
      %v1755 = vpop.f32.mrf.mxu0
      %v1756 = vadd.f32 0.0, %v1755
      %v1757 = vpop.f32.mrf.mxu0
      %1758 = vmatprep.mubr.f32.mxu0 0.0
      %1759 = vmatmul.mubr.f32.gmra.mxu0 %v1559
      %v1760 = vpop.f32.mrf.mxu0
      %v1761 = vadd.f32 0.0, %v1760
      %v1762 = vpop.f32.mrf.mxu0
      %1763 = vmatprep.mubr.f32.mxu0 0.0
      %1764 = vmatmul.mubr.f32.gmra.mxu0 %v1562
      %v1765 = vpop.f32.mrf.mxu0
      %v1766 = vadd.f32 0.0, %v1765
      %v1767 = vpop.f32.mrf.mxu0
      %1768 = vmatprep.mubr.f32.mxu0 0.0
      %1769 = vmatmul.mubr.f32.gmra.mxu0 %v1565
      %v1770 = vpop.f32.mrf.mxu0
      %v1771 = vadd.f32 0.0, %v1770
      %v1772 = vpop.f32.mrf.mxu0
      %1773 = vmatprep.mubr.f32.mxu0 0.0
      %1774 = vmatmul.mubr.f32.gmra.mxu0 %v1568
      %v1775 = vpop.f32.mrf.mxu0
      %v1776 = vadd.f32 0.0, %v1775
      %v1777 = vpop.f32.mrf.mxu0
      %1778 = vmatprep.mubr.f32.mxu0 0.0
      %1779 = vmatmul.mubr.f32.gmra.mxu0 %v1571
      %v1780 = vpop.f32.mrf.mxu0
      %v1781 = vadd.f32 0.0, %v1780
      %v1782 = vpop.f32.mrf.mxu0
      %1783 = vmatprep.mubr.f32.mxu0 0.0
      %1784 = vmatmul.mubr.f32.gmra.mxu0 %v1574
      %v1785 = vpop.f32.mrf.mxu0
      %v1786 = vadd.f32 0.0, %v1785
      %v1787 = vpop.f32.mrf.mxu0
      %1788 = vmatprep.mubr.f32.mxu0 0.0
      %1789 = vmatmul.mubr.f32.gmra.mxu0 %v1577
      %v1790 = vpop.f32.mrf.mxu0
      %v1791 = vadd.f32 0.0, %v1790
      %v1792 = vpop.f32.mrf.mxu0
      %1793 = vmatprep.mubr.f32.mxu0 0.0
      %1794 = vmatmul.mubr.f32.gmra.mxu0 %v1580
      %v1795 = vpop.f32.mrf.mxu0
      %v1796 = vadd.f32 0.0, %v1795
      %v1797 = vpop.f32.mrf.mxu0
      %1798 = vmatprep.mubr.f32.mxu0 0.0
      %1799 = vmatmul.mubr.f32.gmra.mxu0 %v1583
      %v1800 = vpop.f32.mrf.mxu0
      %v1801 = vadd.f32 0.0, %v1800
      %v1802 = vpop.f32.mrf.mxu0
      %1803 = vmatprep.mubr.f32.mxu0 0.0
      %1804 = vmatmul.mubr.f32.gmra.mxu0 %v1586
      %v1805 = vpop.f32.mrf.mxu0
      %v1806 = vadd.f32 0.0, %v1805
      %v1807 = vpop.f32.mrf.mxu0
      %1808 = vmatprep.mubr.f32.mxu0 0.0
      %1809 = vmatmul.mubr.f32.gmra.mxu0 %v1589
      %v1810 = vpop.f32.mrf.mxu0
      %v1811 = vadd.f32 0.0, %v1810
      %v1812 = vpop.f32.mrf.mxu0
      %1813 = vmatprep.mubr.f32.mxu0 0.0
      %1814 = vmatmul.mubr.f32.gmra.mxu0 %v1592
      %v1815 = vpop.f32.mrf.mxu0
      %v1816 = vadd.f32 0.0, %v1815
      %v1817 = vpop.f32.mrf.mxu0
      %1818 = vmatprep.mubr.f32.mxu0 0.0
      %1819 = vmatmul.mubr.f32.gmra.mxu0 %v1595
      %v1820 = vpop.f32.mrf.mxu0
      %v1821 = vadd.f32 0.0, %v1820
      %v1822 = vpop.f32.mrf.mxu0
      %1823 = vmatprep.mubr.f32.mxu0 0.0
      %1824 = vmatmul.mubr.f32.gmra.mxu0 %v1598
      %v1825 = vpop.f32.mrf.mxu0
      %v1826 = vadd.f32 0.0, %v1825
      %v1827 = vpop.f32.mrf.mxu0
      %1828 = vdwg.mxu0
      %v1829 = vadd.f32 %v1671, %v1676
      %v1830 = vadd.f32 %v1829, %v1681
      %v1831 = vadd.f32 %v1830, %v1686
      %v1832 = vadd.f32 %v1831, %v1691
      %v1833 = vadd.f32 %v1832, %v1696
      %v1834 = vadd.f32 %v1833, %v1701
      %v1835 = vadd.f32 %v1834, %v1706
      %v1836 = vadd.f32 %v1835, %v1711
      %v1837 = vadd.f32 %v1836, %v1716
      %v1838 = vadd.f32 %v1837, %v1721
      %v1839 = vadd.f32 %v1838, %v1726
      %v1840 = vadd.f32 %v1839, %v1731
      %v1841 = vadd.f32 %v1840, %v1736
      %v1842 = vadd.f32 %v1841, %v1741
      %v1843 = vadd.f32 %v1842, %v1746
      %v1844 = vadd.f32 %v1843, %v1751
      %v1845 = vadd.f32 %v1844, %v1756
      %v1846 = vadd.f32 %v1845, %v1761
      %v1847 = vadd.f32 %v1846, %v1766
      %v1848 = vadd.f32 %v1847, %v1771
      %v1849 = vadd.f32 %v1848, %v1776
      %v1850 = vadd.f32 %v1849, %v1781
      %v1851 = vadd.f32 %v1850, %v1786
      %v1852 = vadd.f32 %v1851, %v1791
      %v1853 = vadd.f32 %v1852, %v1796
      %v1854 = vadd.f32 %v1853, %v1801
      %v1855 = vadd.f32 %v1854, %v1806
      %v1856 = vadd.f32 %v1855, %v1811
      %v1857 = vadd.f32 %v1856, %v1816
      %v1858 = vadd.f32 %v1857, %v1821
      %v1859 = vadd.f32 %v1858, %v1826
      %v1860 = vrot.slane %v1859, 4
      %v1861 = vadd.f32 %v1859, %v1860
      %v1862 = vrot.slane %v1861, 2
      %v1863 = vadd.f32 %v1861, %v1862
      %v1864 = vrot.slane %v1863, 1
      %v1865 = vadd.f32 %v1863, %v1864
      %v1866 = vmul.f32 %v1671, %v1671
      %v1867 = vmul.f32 %v1676, %v1676
      %v1868 = vmul.f32 %v1681, %v1681
      %v1869 = vmul.f32 %v1686, %v1686
      %v1870 = vmul.f32 %v1691, %v1691
      %v1871 = vmul.f32 %v1696, %v1696
      %v1872 = vmul.f32 %v1701, %v1701
      %v1873 = vmul.f32 %v1706, %v1706
      %v1874 = vmul.f32 %v1711, %v1711
      %v1875 = vmul.f32 %v1716, %v1716
      %v1876 = vmul.f32 %v1721, %v1721
      %v1877 = vmul.f32 %v1726, %v1726
      %v1878 = vmul.f32 %v1731, %v1731
      %v1879 = vmul.f32 %v1736, %v1736
      %v1880 = vmul.f32 %v1741, %v1741
      %v1881 = vmul.f32 %v1746, %v1746
      %v1882 = vmul.f32 %v1751, %v1751
      %v1883 = vmul.f32 %v1756, %v1756
      %v1884 = vmul.f32 %v1761, %v1761
      %v1885 = vmul.f32 %v1766, %v1766
      %v1886 = vmul.f32 %v1771, %v1771
      %v1887 = vmul.f32 %v1776, %v1776
      %v1888 = vmul.f32 %v1781, %v1781
      %v1889 = vmul.f32 %v1786, %v1786
      %v1890 = vmul.f32 %v1791, %v1791
      %v1891 = vmul.f32 %v1796, %v1796
      %v1892 = vmul.f32 %v1801, %v1801
      %v1893 = vmul.f32 %v1806, %v1806
      %v1894 = vmul.f32 %v1811, %v1811
      %v1895 = vmul.f32 %v1816, %v1816
      %v1896 = vmul.f32 %v1821, %v1821
      %v1897 = vmul.f32 %v1826, %v1826
      %v1898 = vadd.f32 %v1866, %v1867
      %v1899 = vadd.f32 %v1898, %v1868
      %v1900 = vadd.f32 %v1899, %v1869
      %v1901 = vadd.f32 %v1900, %v1870
      %v1902 = vadd.f32 %v1901, %v1871
      %v1903 = vadd.f32 %v1902, %v1872
      %v1904 = vadd.f32 %v1903, %v1873
      %v1905 = vadd.f32 %v1904, %v1874
      %v1906 = vadd.f32 %v1905, %v1875
      %v1907 = vadd.f32 %v1906, %v1876
      %v1908 = vadd.f32 %v1907, %v1877
      %v1909 = vadd.f32 %v1908, %v1878
      %v1910 = vadd.f32 %v1909, %v1879
      %v1911 = vadd.f32 %v1910, %v1880
      %v1912 = vadd.f32 %v1911, %v1881
      %v1913 = vadd.f32 %v1912, %v1882
      %v1914 = vadd.f32 %v1913, %v1883
      %v1915 = vadd.f32 %v1914, %v1884
      %v1916 = vadd.f32 %v1915, %v1885
      %v1917 = vadd.f32 %v1916, %v1886
      %v1918 = vadd.f32 %v1917, %v1887
      %v1919 = vadd.f32 %v1918, %v1888
      %v1920 = vadd.f32 %v1919, %v1889
      %v1921 = vadd.f32 %v1920, %v1890
      %v1922 = vadd.f32 %v1921, %v1891
      %v1923 = vadd.f32 %v1922, %v1892
      %v1924 = vadd.f32 %v1923, %v1893
      %v1925 = vadd.f32 %v1924, %v1894
      %v1926 = vadd.f32 %v1925, %v1895
      %v1927 = vadd.f32 %v1926, %v1896
      %v1928 = vadd.f32 %v1927, %v1897
      %v1929 = vrot.slane %v1928, 4
      %v1930 = vadd.f32 %v1928, %v1929
      %v1931 = vrot.slane %v1930, 2
      %v1932 = vadd.f32 %v1930, %v1931
      %v1933 = vrot.slane %v1932, 1
      %v1934 = vadd.f32 %v1932, %v1933
      %vm1935 = vcmask 1040384
      %v1936 = vsel %vm1935, %v1865, %v1934
      %1937 = vst [vmem:[%s175] sm:$0x3] %v1936
      %p1938 = scmp.lt.s32.totalorder %s17, 1
      %s1939 = scalar_select %p1938, %s17, 1
      %p1940 = scmp.lt.s32.totalorder %s18, 0
      %s1941 = scalar_select %p1940, %s18, 0
      %s1942 = sadd.s32 %s1941, %s1939
      %s1943 = smul.addr %s1942, 2
      %s1944 = scalar_lea.vmem %s2, %s1943
      // Predicated region
      $region29: #{conv_block_tanh.2} parent=27 // pred_check
        %p1945 = pneg %p94
      $region30: #{conv_block_tanh.2} parent=27 // pred_check_branch
        %1947 = sbr.rel (%p1945) target = $region32
      $region31: #{conv_block_tanh.2} parent=27 // pred_region
        _
      $region32: #{conv_block_tanh.2} parent=27 // pred_fallthru
        _
    $region28: #{conv_block_tanh.2} parent=5 // pred_fallthru
      _
    %p1948 = scmp.le.s32.totalorder 2, %s8
    // Predicated region
    $region33: #{conv_block_tanh.2} parent=5 // pred_check
      %p1949 = pneg %p1948
    $region34: #{conv_block_tanh.2} parent=5 // pred_check_branch
      %1951 = sbr.rel (%p1949) target = $region36
    $region35: #{conv_block_tanh.2} parent=5 // pred_region
      %s1952 = ssub.s32 %s8, 2
      // Predicated region
      $region37: #{conv_block_tanh.2} parent=35 // pred_check
        %p1953 = pneg %p100
      $region38: #{conv_block_tanh.2} parent=35 // pred_check_branch
        %1955 = sbr.rel (%p1953) target = $region40
      $region39: #{conv_block_tanh.2} parent=35 // pred_region
        %p1956 = scmp.lt.s32.totalorder %s19, 1
        %s1957 = scalar_select %p1956, %s19, 1
        %p1958 = scmp.lt.s32.totalorder %s20, 0
        %s1959 = scalar_select %p1958, %s20, 0
        %s1960 = sadd.s32 %s1959, %s1957
        %s1961 = smul.addr %s1960, 2
        %s1962 = scalar_lea.vmem %s2, %s1961
      $region40: #{conv_block_tanh.2} parent=35 // pred_fallthru
        _
    $region36: #{conv_block_tanh.2} parent=5 // pred_fallthru
      _
  $region6: #{conv_block_tanh.2} parent=0 // loop_footer
    %s12 = sadd.s32 1, %s8
  $region7: #{conv_block_tanh.2} parent=0 // loop_footer_branch
    %7 = sbr.rel target = $region3
  $region8: #{conv_block_tanh.2} parent=0 // loop_exit
    _

// kernel: conv_block_tanh.3
$region0: #{conv_block_tanh.3}
  #allocation0 [shape = 'u32[]', space=smem, size = 0x4, offset = 0x4, fixed_abs, tag = 'smem constant byte address 0x4 - core index']
  #allocation1 [shape = 'u32[144,128]{1,0:T(1,128)}', space=vmem, size = 0x12000, scoped, tag = 'internal scratch']
  %s0 = inlined_call_operand.vmem [shape: f32[2,1,18,18,4], index: 0, kind: input, shape index: {}]
  %s1 = inlined_call_operand.vmem [shape: f32[36,128], index: 1, kind: input, shape index: {}]
  %s2 = inlined_call_operand.vmem [shape: f32[8,1], index: 2, kind: input, shape index: {}]
  %s3 = inlined_call_operand.vmem [shape: f32[8,1], index: 3, kind: input, shape index: {}]
  %s4 = inlined_call_operand.vmem [shape: f32[2,8,256], index: 4, kind: output, shape index: {}]
  %s5 = sld [smem:[#allocation0]]
  $region49: #{conv_block_tanh.3} parent=0
    _
  %s7 = ssub.s32 1, %s5
  %s8 = scalar_select 0, %s7, %s5
  loop: start=0, step=1, limit=4
  $region2: #{conv_block_tanh.3} parent=0 // loop_pre_header
    _
  $region3: #{conv_block_tanh.3} parent=0 // loop_header
    %s10 = sphi 0, %s14
    %p11 = scmp.ge.s32.totalorder %s10, 4
    %s17 = sphi 0, %s29
    %s18 = sphi 0, %s25
    %s19 = sphi 0, %s17
    %s20 = sphi 0, %s18
    %s21 = sphi 0, %s19
    %s22 = sphi 0, %s20
    %s34 = sphi 0, %s36
    %s37 = sphi 0, %s34
    %s38 = sphi 0, %s37
    %s54 = sphi 0, %s38
    %s58 = sphi 0, %s58
    %s60 = sphi 0, %s58
    %s61 = sphi 0, %s60
    %s75 = sphi 0, %s61
    %s79 = sphi 0, %s79
    %s81 = sphi 0, %s79
    %s82 = sphi 0, %s81
    %s96 = sphi 0, %s82
    %s100 = sphi 0, %s100
    %s102 = sphi 0, %s100
    %s103 = sphi 0, %s102
    %s117 = sphi 0, %s103
    %s125 = sphi 0, %s127
    %s128 = sphi 0, %s125
    %s129 = sphi 0, %s128
    %s145 = sphi 0, %s129
  $region4: #{conv_block_tanh.3} parent=0 // loop_header_branch
    %13 = sbr.rel (%p11) target = $region8
  $region5: #{conv_block_tanh.3} parent=0 // loop_body
    %s15 = ssub.s32 %s10, 1
    %s16 = ssub.s32 %s10, 2
    %s23 = sadd.s32 1, %s18
    %p24 = scmp.ge.s32.totalorder %s23, 1
    %s25 = scalar_select %p24, 0, %s23
    %s26 = sadd.s32 1, %s17
    %s27 = scalar_select %p24, %s26, %s17
    %p28 = scmp.ge.s32.totalorder %s27, 2
    %s29 = scalar_select %p28, 0, %s27
    %s30 = ssub.s32 %s17, %s29
    %s31 = ssub.s32 %s18, %s25
    %s32 = sor.u32 %s30, %s31
    %p33 = scmp.eq.s32.totalorder %s32, 0
    %s35 = sadd.s32 %s34, 1
    %s36 = scalar_select %p33, %s34, %s35
    %p39 = pneg %p33
    %p40 = scmp.eq.s32.totalorder %s10, 1
    %p41 = por %p39, %p40
    %p42 = scmp.ne.s32.totalorder %s34, %s37
    %p43 = scmp.eq.s32.totalorder %s10, 0
    %p44 = por %p42, %p43
    %p45 = scmp.ne.s32.totalorder %s34, %s37
    %p46 = scmp.eq.s32.totalorder %s15, 1
    %p47 = por %p45, %p46
    %p48 = scmp.ne.s32.totalorder %s37, %s38
    %p49 = scmp.eq.s32.totalorder %s15, 0
    %p50 = por %p48, %p49
    %p51 = scmp.ne.s32.totalorder %s37, %s38
    %p52 = scmp.eq.s32.totalorder %s16, 1
    %p53 = por %p51, %p52
    %p55 = scmp.ne.s32.totalorder %s38, %s54
    %p56 = scmp.eq.s32.totalorder %s16, 0
    %p57 = por %p55, %p56
    %s59 = sadd.s32 %s58, 1
    %p62 = scmp.eq.s32.totalorder %s10, 1
    %p63 = scmp.ne.s32.totalorder %s58, %s60
    %p64 = scmp.eq.s32.totalorder %s10, 0
    %p65 = por %p63, %p64
    %p66 = scmp.ne.s32.totalorder %s58, %s60
    %p67 = scmp.eq.s32.totalorder %s15, 1
    %p68 = por %p66, %p67
    %p69 = scmp.ne.s32.totalorder %s60, %s61
    %p70 = scmp.eq.s32.totalorder %s15, 0
    %p71 = por %p69, %p70
    %p72 = scmp.ne.s32.totalorder %s60, %s61
    %p73 = scmp.eq.s32.totalorder %s16, 1
    %p74 = por %p72, %p73
    %p76 = scmp.ne.s32.totalorder %s61, %s75
    %p77 = scmp.eq.s32.totalorder %s16, 0
    %p78 = por %p76, %p77
    %s80 = sadd.s32 %s79, 1
    %p83 = scmp.eq.s32.totalorder %s10, 1
    %p84 = scmp.ne.s32.totalorder %s79, %s81
    %p85 = scmp.eq.s32.totalorder %s10, 0
    %p86 = por %p84, %p85
    %p87 = scmp.ne.s32.totalorder %s79, %s81
    %p88 = scmp.eq.s32.totalorder %s15, 1
    %p89 = por %p87, %p88
    %p90 = scmp.ne.s32.totalorder %s81, %s82
    %p91 = scmp.eq.s32.totalorder %s15, 0
    %p92 = por %p90, %p91
    %p93 = scmp.ne.s32.totalorder %s81, %s82
    %p94 = scmp.eq.s32.totalorder %s16, 1
    %p95 = por %p93, %p94
    %p97 = scmp.ne.s32.totalorder %s82, %s96
    %p98 = scmp.eq.s32.totalorder %s16, 0
    %p99 = por %p97, %p98
    %s101 = sadd.s32 %s100, 1
    %p104 = scmp.eq.s32.totalorder %s10, 1
    %p105 = scmp.ne.s32.totalorder %s100, %s102
    %p106 = scmp.eq.s32.totalorder %s10, 0
    %p107 = por %p105, %p106
    %p108 = scmp.ne.s32.totalorder %s100, %s102
    %p109 = scmp.eq.s32.totalorder %s15, 1
    %p110 = por %p108, %p109
    %p111 = scmp.ne.s32.totalorder %s102, %s103
    %p112 = scmp.eq.s32.totalorder %s15, 0
    %p113 = por %p111, %p112
    %p114 = scmp.ne.s32.totalorder %s102, %s103
    %p115 = scmp.eq.s32.totalorder %s16, 1
    %p116 = por %p114, %p115
    %p118 = scmp.ne.s32.totalorder %s103, %s117
    %p119 = scmp.eq.s32.totalorder %s16, 0
    %p120 = por %p118, %p119
    %s121 = ssub.s32 %s17, %s29
    %s122 = ssub.s32 %s18, %s25
    %s123 = sor.u32 %s121, %s122
    %p124 = scmp.eq.s32.totalorder %s123, 0
    %s126 = sadd.s32 %s125, 1
    %s127 = scalar_select %p124, %s125, %s126
    %p130 = pneg %p124
    %p131 = scmp.eq.s32.totalorder %s10, 1
    %p132 = por %p130, %p131
    %p133 = scmp.ne.s32.totalorder %s125, %s128
    %p134 = scmp.eq.s32.totalorder %s10, 0
    %p135 = por %p133, %p134
    %p136 = scmp.ne.s32.totalorder %s125, %s128
    %p137 = scmp.eq.s32.totalorder %s15, 1
    %p138 = por %p136, %p137
    %p139 = scmp.ne.s32.totalorder %s128, %s129
    %p140 = scmp.eq.s32.totalorder %s15, 0
    %p141 = por %p139, %p140
    %p142 = scmp.ne.s32.totalorder %s128, %s129
    %p143 = scmp.eq.s32.totalorder %s16, 1
    %p144 = por %p142, %p143
    %p146 = scmp.ne.s32.totalorder %s129, %s145
    %p147 = scmp.eq.s32.totalorder %s16, 0
    %p148 = por %p146, %p147
    %p149 = scmp.le.s32.totalorder 1, %s10
    %p150 = scmp.lt.s32.totalorder %s10, 3
    %p151 = pnand %p149, %p150
    %p152 = pneg %p151
    // Predicated region
    $region9: #{conv_block_tanh.3} parent=5 // pred_check
      _
    $region10: #{conv_block_tanh.3} parent=5 // pred_check_branch
      %154 = sbr.rel (%p151) target = $region12
    $region11: #{conv_block_tanh.3} parent=5 // pred_region
      %s155 = ssub.s32 %s10, 1
      // Predicated region
      $region13: #{conv_block_tanh.3} parent=11 // pred_check
        %p156 = pneg %p71
      $region14: #{conv_block_tanh.3} parent=11 // pred_check_branch
        %158 = sbr.rel (%p156) target = $region16
      $region15: #{conv_block_tanh.3} parent=11 // pred_region
        _
      $region16: #{conv_block_tanh.3} parent=11 // pred_fallthru
        _
      // Predicated region
      $region17: #{conv_block_tanh.3} parent=11 // pred_check
        %p159 = pneg %p92
      $region18: #{conv_block_tanh.3} parent=11 // pred_check_branch
        %161 = sbr.rel (%p159) target = $region20
      $region19: #{conv_block_tanh.3} parent=11 // pred_region
        _
      $region20: #{conv_block_tanh.3} parent=11 // pred_fallthru
        _
      // Predicated region
      $region21: #{conv_block_tanh.3} parent=11 // pred_check
        %p162 = pneg %p113
      $region22: #{conv_block_tanh.3} parent=11 // pred_check_branch
        %164 = sbr.rel (%p162) target = $region24
      $region23: #{conv_block_tanh.3} parent=11 // pred_region
        _
      $region24: #{conv_block_tanh.3} parent=11 // pred_fallthru
        _
    $region12: #{conv_block_tanh.3} parent=5 // pred_fallthru
      _
    %p165 = scmp.lt.s32.totalorder %s10, 2
    // Predicated region
    $region25: #{conv_block_tanh.3} parent=5 // pred_check
      %p166 = pneg %p165
    $region26: #{conv_block_tanh.3} parent=5 // pred_check_branch
      %168 = sbr.rel (%p166) target = $region28
    $region27: #{conv_block_tanh.3} parent=5 // pred_region
      // Predicated region
      $region29: #{conv_block_tanh.3} parent=27 // pred_check
        %p169 = pneg %p44
      $region30: #{conv_block_tanh.3} parent=27 // pred_check_branch
        %171 = sbr.rel (%p169) target = $region32
      $region31: #{conv_block_tanh.3} parent=27 // pred_region
        %p172 = scmp.lt.s32.totalorder %s17, 1
        %s173 = scalar_select %p172, %s17, 1
        %p174 = scmp.lt.s32.totalorder %s18, 0
        %s175 = scalar_select %p174, %s18, 0
        %s176 = smul.addr %s175, 54
        %s177 = smul.addr %s173, 54
        %s178 = sadd.s32 %s176, %s177
        %s179 = smul.addr %s178, 8
        %s180 = scalar_lea.vmem %s0, %s179
      $region32: #{conv_block_tanh.3} parent=27 // pred_fallthru
        _
    $region28: #{conv_block_tanh.3} parent=5 // pred_fallthru
      _
    %p181 = scmp.le.s32.totalorder 1, %s10
    %p182 = scmp.lt.s32.totalorder %s10, 3
    %p183 = pnand %p181, %p182
    %p184 = pneg %p183
    // Predicated region
    $region33: #{conv_block_tanh.3} parent=5 // pred_check
      _
    $region34: #{conv_block_tanh.3} parent=5 // pred_check_branch
      %186 = sbr.rel (%p183) target = $region36
    $region35: #{conv_block_tanh.3} parent=5 // pred_region
      %s187 = ssub.s32 %s10, 1
      %p188 = scmp.lt.s32.totalorder %s19, 1
      %s189 = scalar_select %p188, %s19, 1
      %p190 = scmp.lt.s32.totalorder %s20, 0
      %s191 = scalar_select %p190, %s20, 0
      %s192 = smul.addr %s191, 54
      %s193 = smul.addr %s189, 54
      %s194 = sadd.s32 %s192, %s193
      %s195 = smul.addr %s194, 8
      %s196 = scalar_lea.vmem %s0, %s195
      %p197 = pneg %p50
      %p198 = pneg %p47
      %p199 = pneg %p71
      %p200 = pneg %p68
      %p201 = pneg %p92
      %p202 = pneg %p89
      %p203 = pneg %p113
      %p204 = pneg %p110
      %p205 = pneg %p141
      %p206 = pneg %p138
      %s207 = smul.u32 2, %s20
      %p208 = scmp.lt.s32.totalorder %s19, 1
      %s209 = scalar_select %p208, %s19, 1
      %p210 = scmp.lt.s32.totalorder %s207, 1
      %s211 = scalar_select %p210, %s207, 1
      %s212 = smul.addr %s209, 2
      %s213 = sadd.s32 %s211, %s212
      %s214 = smul.addr %s213, 8
      %s215 = scalar_lea.vmem %s4, %s214
      %p216 = scmp.lt.s32.totalorder %s19, 1
      %s217 = scalar_select %p216, %s19, 1
      %p218 = scmp.lt.s32.totalorder %s20, 0
      %s219 = scalar_select %p218, %s20, 0
      %s220 = smul.addr %s219, 54
      %s221 = smul.addr %s217, 54
      %s222 = sadd.s32 %s220, %s221
      %s223 = smul.addr %s222, 8
      %s224 = scalar_lea.vmem %s0, %s223
      %s225 = smul.u32 2, %s20
      %p226 = scmp.lt.s32.totalorder %s19, 1
      %s227 = scalar_select %p226, %s19, 1
      %p228 = scmp.lt.s32.totalorder %s225, 1
      %s229 = scalar_select %p228, %s225, 1
      %s230 = smul.addr %s227, 2
      %s231 = sadd.s32 %s229, %s230
      %s232 = smul.addr %s231, 8
      %s233 = scalar_lea.vmem %s4, %s232
      %s234 = smul.u32 2, %s20
      %v235 = vld [vmem:[%s224] sm:$0xff]
      %v236 = vld [vmem:[%s224 + $0x8] sm:$0xff]
      %v237 = vld [vmem:[%s224 + $0x10] sm:$0x3]
      %v238 = vld [vmem:[%s224 + $0x18] sm:$0xff]
      %v239 = vld [vmem:[%s224 + $0x20] sm:$0xff]
      %v240 = vld [vmem:[%s224 + $0x28] sm:$0x3]
      %v241 = vld [vmem:[%s224 + $0x30] sm:$0xff]
      %v242 = vld [vmem:[%s224 + $0x38] sm:$0xff]
      %v243 = vld [vmem:[%s224 + $0x40] sm:$0x3]
      %v244 = vld [vmem:[%s224 + $0x48] sm:$0xff]
      %v245 = vld [vmem:[%s224 + $0x50] sm:$0xff]
      %v246 = vld [vmem:[%s224 + $0x58] sm:$0x3]
      %v247 = vld [vmem:[%s224 + $0x60] sm:$0xff]
      %v248 = vld [vmem:[%s224 + $0x68] sm:$0xff]
      %v249 = vld [vmem:[%s224 + $0x70] sm:$0x3]
      %v250 = vld [vmem:[%s224 + $0x78] sm:$0xff]
      %v251 = vld [vmem:[%s224 + $0x80] sm:$0xff]
      %v252 = vld [vmem:[%s224 + $0x88] sm:$0x3]
      %v253 = vld [vmem:[%s224 + $0x90] sm:$0xff]
      %v254 = vld [vmem:[%s224 + $0x98] sm:$0xff]
      %v255 = vld [vmem:[%s224 + $0xa0] sm:$0x3]
      %v256 = vld [vmem:[%s224 + $0xa8] sm:$0xff]
      %v257 = vld [vmem:[%s224 + $0xb0] sm:$0xff]
      %v258 = vld [vmem:[%s224 + $0xb8] sm:$0x3]
      %v259 = vld [vmem:[%s224 + $0xc0] sm:$0xff]
      %v260 = vld [vmem:[%s224 + $0xc8] sm:$0xff]
      %v261 = vld [vmem:[%s224 + $0xd0] sm:$0x3]
      %v262 = vld [vmem:[%s224 + $0xd8] sm:$0xff]
      %v263 = vld [vmem:[%s224 + $0xe0] sm:$0xff]
      %v264 = vld [vmem:[%s224 + $0xe8] sm:$0x3]
      %v265 = vld [vmem:[%s224 + $0xf0] sm:$0xff]
      %v266 = vld [vmem:[%s224 + $0xf8] sm:$0xff]
      %v267 = vld [vmem:[%s224 + $0x100] sm:$0x3]
      %v268 = vld [vmem:[%s224 + $0x108] sm:$0xff]
      %v269 = vld [vmem:[%s224 + $0x110] sm:$0xff]
      %v270 = vld [vmem:[%s224 + $0x118] sm:$0x3]
      %v271 = vld [vmem:[%s224 + $0x120] sm:$0xff]
      %v272 = vld [vmem:[%s224 + $0x128] sm:$0xff]
      %v273 = vld [vmem:[%s224 + $0x130] sm:$0x3]
      %v274 = vld [vmem:[%s224 + $0x138] sm:$0xff]
      %v275 = vld [vmem:[%s224 + $0x140] sm:$0xff]
      %v276 = vld [vmem:[%s224 + $0x148] sm:$0x3]
      %v277 = vld [vmem:[%s224 + $0x150] sm:$0xff]
      %v278 = vld [vmem:[%s224 + $0x158] sm:$0xff]
      %v279 = vld [vmem:[%s224 + $0x160] sm:$0x3]
      %v280 = vld [vmem:[%s224 + $0x168] sm:$0xff]
      %v281 = vld [vmem:[%s224 + $0x170] sm:$0xff]
      %v282 = vld [vmem:[%s224 + $0x178] sm:$0x3]
      %v283 = vld [vmem:[%s224 + $0x180] sm:$0xff]
      %v284 = vld [vmem:[%s224 + $0x188] sm:$0xff]
      %v285 = vld [vmem:[%s224 + $0x190] sm:$0x3]
      %v286 = vld [vmem:[%s224 + $0x198] sm:$0xff]
      %v287 = vld [vmem:[%s224 + $0x1a0] sm:$0xff]
      %v288 = vld [vmem:[%s224 + $0x1a8] sm:$0x3]
      %vm337 = vcmask 1046528
      %v338 = vrot.slane %v235, 1
      %v339 = vrot.slane %v236, 1
      %v340 = vsel %vm337, %v338, %v339
      %v341 = vrot.slane %v237, 1
      %v342 = vsel %vm337, %v339, %v341
      %v343 = vrot.slane %v238, 1
      %v344 = vrot.slane %v239, 1
      %v345 = vsel %vm337, %v343, %v344
      %v346 = vrot.slane %v240, 1
      %v347 = vsel %vm337, %v344, %v346
      %v348 = vrot.slane %v241, 1
      %v349 = vrot.slane %v242, 1
      %v350 = vsel %vm337, %v348, %v349
      %v351 = vrot.slane %v243, 1
      %v352 = vsel %vm337, %v349, %v351
      %v353 = vrot.slane %v244, 1
      %v354 = vrot.slane %v245, 1
      %v355 = vsel %vm337, %v353, %v354
      %v356 = vrot.slane %v246, 1
      %v357 = vsel %vm337, %v354, %v356
      %v358 = vrot.slane %v247, 1
      %v359 = vrot.slane %v248, 1
      %v360 = vsel %vm337, %v358, %v359
      %v361 = vrot.slane %v249, 1
      %v362 = vsel %vm337, %v359, %v361
      %v363 = vrot.slane %v250, 1
      %v364 = vrot.slane %v251, 1
      %v365 = vsel %vm337, %v363, %v364
      %v366 = vrot.slane %v252, 1
      %v367 = vsel %vm337, %v364, %v366
      %v368 = vrot.slane %v253, 1
      %v369 = vrot.slane %v254, 1
      %v370 = vsel %vm337, %v368, %v369
      %v371 = vrot.slane %v255, 1
      %v372 = vsel %vm337, %v369, %v371
      %v373 = vrot.slane %v256, 1
      %v374 = vrot.slane %v257, 1
      %v375 = vsel %vm337, %v373, %v374
      %v376 = vrot.slane %v258, 1
      %v377 = vsel %vm337, %v374, %v376
      %v378 = vrot.slane %v259, 1
      %v379 = vrot.slane %v260, 1
      %v380 = vsel %vm337, %v378, %v379
      %v381 = vrot.slane %v261, 1
      %v382 = vsel %vm337, %v379, %v381
      %v383 = vrot.slane %v262, 1
      %v384 = vrot.slane %v263, 1
      %v385 = vsel %vm337, %v383, %v384
      %v386 = vrot.slane %v264, 1
      %v387 = vsel %vm337, %v384, %v386
      %v388 = vrot.slane %v265, 1
      %v389 = vrot.slane %v266, 1
      %v390 = vsel %vm337, %v388, %v389
      %v391 = vrot.slane %v267, 1
      %v392 = vsel %vm337, %v389, %v391
      %v393 = vrot.slane %v268, 1
      %v394 = vrot.slane %v269, 1
      %v395 = vsel %vm337, %v393, %v394
      %v396 = vrot.slane %v270, 1
      %v397 = vsel %vm337, %v394, %v396
      %v398 = vrot.slane %v271, 1
      %v399 = vrot.slane %v272, 1
      %v400 = vsel %vm337, %v398, %v399
      %v401 = vrot.slane %v273, 1
      %v402 = vsel %vm337, %v399, %v401
      %v403 = vrot.slane %v274, 1
      %v404 = vrot.slane %v275, 1
      %v405 = vsel %vm337, %v403, %v404
      %v406 = vrot.slane %v276, 1
      %v407 = vsel %vm337, %v404, %v406
      %v408 = vrot.slane %v277, 1
      %v409 = vrot.slane %v278, 1
      %v410 = vsel %vm337, %v408, %v409
      %v411 = vrot.slane %v279, 1
      %v412 = vsel %vm337, %v409, %v411
      %v413 = vrot.slane %v280, 1
      %v414 = vrot.slane %v281, 1
      %v415 = vsel %vm337, %v413, %v414
      %v416 = vrot.slane %v282, 1
      %v417 = vsel %vm337, %v414, %v416
      %vm418 = vcmask 1045504
      %v419 = vrot.slane %v235, 2
      %v420 = vrot.slane %v236, 2
      %v421 = vsel %vm418, %v419, %v420
      %v422 = vrot.slane %v237, 2
      %v423 = vsel %vm418, %v420, %v422
      %v424 = vrot.slane %v238, 2
      %v425 = vrot.slane %v239, 2
      %v426 = vsel %vm418, %v424, %v425
      %v427 = vrot.slane %v240, 2
      %v428 = vsel %vm418, %v425, %v427
      %v429 = vrot.slane %v241, 2
      %v430 = vrot.slane %v242, 2
      %v431 = vsel %vm418, %v429, %v430
      %v432 = vrot.slane %v243, 2
      %v433 = vsel %vm418, %v430, %v432
      %v434 = vrot.slane %v244, 2
      %v435 = vrot.slane %v245, 2
      %v436 = vsel %vm418, %v434, %v435
      %v437 = vrot.slane %v246, 2
      %v438 = vsel %vm418, %v435, %v437
      %v439 = vrot.slane %v247, 2
      %v440 = vrot.slane %v248, 2
      %v441 = vsel %vm418, %v439, %v440
      %v442 = vrot.slane %v249, 2
      %v443 = vsel %vm418, %v440, %v442
      %v444 = vrot.slane %v250, 2
      %v445 = vrot.slane %v251, 2
      %v446 = vsel %vm418, %v444, %v445
      %v447 = vrot.slane %v252, 2
      %v448 = vsel %vm418, %v445, %v447
      %v449 = vrot.slane %v253, 2
      %v450 = vrot.slane %v254, 2
      %v451 = vsel %vm418, %v449, %v450
      %v452 = vrot.slane %v255, 2
      %v453 = vsel %vm418, %v450, %v452
      %v454 = vrot.slane %v256, 2
      %v455 = vrot.slane %v257, 2
      %v456 = vsel %vm418, %v454, %v455
      %v457 = vrot.slane %v258, 2
      %v458 = vsel %vm418, %v455, %v457
      %v459 = vrot.slane %v259, 2
      %v460 = vrot.slane %v260, 2
      %v461 = vsel %vm418, %v459, %v460
      %v462 = vrot.slane %v261, 2
      %v463 = vsel %vm418, %v460, %v462
      %v464 = vrot.slane %v262, 2
      %v465 = vrot.slane %v263, 2
      %v466 = vsel %vm418, %v464, %v465
      %v467 = vrot.slane %v264, 2
      %v468 = vsel %vm418, %v465, %v467
      %v469 = vrot.slane %v265, 2
      %v470 = vrot.slane %v266, 2
      %v471 = vsel %vm418, %v469, %v470
      %v472 = vrot.slane %v267, 2
      %v473 = vsel %vm418, %v470, %v472
      %v474 = vrot.slane %v268, 2
      %v475 = vrot.slane %v269, 2
      %v476 = vsel %vm418, %v474, %v475
      %v477 = vrot.slane %v270, 2
      %v478 = vsel %vm418, %v475, %v477
      %v479 = vrot.slane %v271, 2
      %v480 = vrot.slane %v272, 2
      %v481 = vsel %vm418, %v479, %v480
      %v482 = vrot.slane %v273, 2
      %v483 = vsel %vm418, %v480, %v482
      %v484 = vrot.slane %v274, 2
      %v485 = vrot.slane %v275, 2
      %v486 = vsel %vm418, %v484, %v485
      %v487 = vrot.slane %v276, 2
      %v488 = vsel %vm418, %v485, %v487
      %v489 = vrot.slane %v277, 2
      %v490 = vrot.slane %v278, 2
      %v491 = vsel %vm418, %v489, %v490
      %v492 = vrot.slane %v279, 2
      %v493 = vsel %vm418, %v490, %v492
      %v494 = vrot.slane %v280, 2
      %v495 = vrot.slane %v281, 2
      %v496 = vsel %vm418, %v494, %v495
      %v497 = vrot.slane %v282, 2
      %v498 = vsel %vm418, %v495, %v497
      %v502 = vrot.slane %v283, 1
      %v503 = vrot.slane %v284, 1
      %v504 = vsel %vm337, %v502, %v503
      %v505 = vrot.slane %v285, 1
      %v506 = vsel %vm337, %v503, %v505
      %v507 = vrot.slane %v283, 2
      %v508 = vrot.slane %v284, 2
      %v509 = vsel %vm418, %v507, %v508
      %v510 = vrot.slane %v285, 2
      %v511 = vsel %vm418, %v508, %v510
      %v515 = vrot.slane %v286, 1
      %v516 = vrot.slane %v287, 1
      %v517 = vsel %vm337, %v515, %v516
      %v518 = vrot.slane %v288, 1
      %v519 = vsel %vm337, %v516, %v518
      %v520 = vrot.slane %v286, 2
      %v521 = vrot.slane %v287, 2
      %v522 = vsel %vm418, %v520, %v521
      %v523 = vrot.slane %v288, 2
      %v524 = vsel %vm418, %v521, %v523
      %525 = vrot.lane.b32.xlu0 %v340, 4
      %v526 = vpop.permute.xlu0 %525
      %527 = vrot.lane.b32.xlu0 %v342, 4
      %v528 = vpop.permute.xlu0 %527
      %529 = vrot.lane.b32.xlu0 %v345, 4
      %v530 = vpop.permute.xlu0 %529
      %531 = vrot.lane.b32.xlu0 %v347, 4
      %v532 = vpop.permute.xlu0 %531
      %533 = vrot.lane.b32.xlu0 %v350, 4
      %v534 = vpop.permute.xlu0 %533
      %535 = vrot.lane.b32.xlu0 %v352, 4
      %v536 = vpop.permute.xlu0 %535
      %537 = vrot.lane.b32.xlu0 %v355, 4
      %v538 = vpop.permute.xlu0 %537
      %539 = vrot.lane.b32.xlu0 %v357, 4
      %v540 = vpop.permute.xlu0 %539
      %541 = vrot.lane.b32.xlu0 %v360, 4
      %v542 = vpop.permute.xlu0 %541
      %543 = vrot.lane.b32.xlu0 %v362, 4
      %v544 = vpop.permute.xlu0 %543
      %545 = vrot.lane.b32.xlu0 %v365, 4
      %v546 = vpop.permute.xlu0 %545
      %547 = vrot.lane.b32.xlu0 %v367, 4
      %v548 = vpop.permute.xlu0 %547
      %549 = vrot.lane.b32.xlu0 %v370, 4
      %v550 = vpop.permute.xlu0 %549
      %551 = vrot.lane.b32.xlu0 %v372, 4
      %v552 = vpop.permute.xlu0 %551
      %553 = vrot.lane.b32.xlu0 %v375, 4
      %v554 = vpop.permute.xlu0 %553
      %555 = vrot.lane.b32.xlu0 %v377, 4
      %v556 = vpop.permute.xlu0 %555
      %557 = vrot.lane.b32.xlu0 %v380, 4
      %v558 = vpop.permute.xlu0 %557
      %559 = vrot.lane.b32.xlu0 %v382, 4
      %v560 = vpop.permute.xlu0 %559
      %561 = vrot.lane.b32.xlu0 %v385, 4
      %v562 = vpop.permute.xlu0 %561
      %563 = vrot.lane.b32.xlu0 %v387, 4
      %v564 = vpop.permute.xlu0 %563
      %565 = vrot.lane.b32.xlu0 %v390, 4
      %v566 = vpop.permute.xlu0 %565
      %567 = vrot.lane.b32.xlu0 %v392, 4
      %v568 = vpop.permute.xlu0 %567
      %569 = vrot.lane.b32.xlu0 %v395, 4
      %v570 = vpop.permute.xlu0 %569
      %571 = vrot.lane.b32.xlu0 %v397, 4
      %v572 = vpop.permute.xlu0 %571
      %573 = vrot.lane.b32.xlu0 %v400, 4
      %v574 = vpop.permute.xlu0 %573
      %575 = vrot.lane.b32.xlu0 %v402, 4
      %v576 = vpop.permute.xlu0 %575
      %577 = vrot.lane.b32.xlu0 %v405, 4
      %v578 = vpop.permute.xlu0 %577
      %579 = vrot.lane.b32.xlu0 %v407, 4
      %v580 = vpop.permute.xlu0 %579
      %581 = vrot.lane.b32.xlu0 %v410, 4
      %v582 = vpop.permute.xlu0 %581
      %583 = vrot.lane.b32.xlu0 %v412, 4
      %v584 = vpop.permute.xlu0 %583
      %585 = vrot.lane.b32.xlu0 %v415, 4
      %v586 = vpop.permute.xlu0 %585
      %587 = vrot.lane.b32.xlu0 %v417, 4
      %v588 = vpop.permute.xlu0 %587
      %621 = vrot.lane.b32.xlu0 %v421, 8
      %v622 = vpop.permute.xlu0 %621
      %623 = vrot.lane.b32.xlu0 %v423, 8
      %v624 = vpop.permute.xlu0 %623
      %625 = vrot.lane.b32.xlu0 %v426, 8
      %v626 = vpop.permute.xlu0 %625
      %627 = vrot.lane.b32.xlu0 %v428, 8
      %v628 = vpop.permute.xlu0 %627
      %629 = vrot.lane.b32.xlu0 %v431, 8
      %v630 = vpop.permute.xlu0 %629
      %631 = vrot.lane.b32.xlu0 %v433, 8
      %v632 = vpop.permute.xlu0 %631
      %633 = vrot.lane.b32.xlu0 %v436, 8
      %v634 = vpop.permute.xlu0 %633
      %635 = vrot.lane.b32.xlu0 %v438, 8
      %v636 = vpop.permute.xlu0 %635
      %637 = vrot.lane.b32.xlu0 %v441, 8
      %v638 = vpop.permute.xlu0 %637
      %639 = vrot.lane.b32.xlu0 %v443, 8
      %v640 = vpop.permute.xlu0 %639
      %641 = vrot.lane.b32.xlu0 %v446, 8
      %v642 = vpop.permute.xlu0 %641
      %643 = vrot.lane.b32.xlu0 %v448, 8
      %v644 = vpop.permute.xlu0 %643
      %645 = vrot.lane.b32.xlu0 %v451, 8
      %v646 = vpop.permute.xlu0 %645
      %647 = vrot.lane.b32.xlu0 %v453, 8
      %v648 = vpop.permute.xlu0 %647
      %649 = vrot.lane.b32.xlu0 %v456, 8
      %v650 = vpop.permute.xlu0 %649
      %651 = vrot.lane.b32.xlu0 %v458, 8
      %v652 = vpop.permute.xlu0 %651
      %653 = vrot.lane.b32.xlu0 %v461, 8
      %v654 = vpop.permute.xlu0 %653
      %655 = vrot.lane.b32.xlu0 %v463, 8
      %v656 = vpop.permute.xlu0 %655
      %657 = vrot.lane.b32.xlu0 %v466, 8
      %v658 = vpop.permute.xlu0 %657
      %659 = vrot.lane.b32.xlu0 %v468, 8
      %v660 = vpop.permute.xlu0 %659
      %661 = vrot.lane.b32.xlu0 %v471, 8
      %v662 = vpop.permute.xlu0 %661
      %663 = vrot.lane.b32.xlu0 %v473, 8
      %v664 = vpop.permute.xlu0 %663
      %665 = vrot.lane.b32.xlu0 %v476, 8
      %v666 = vpop.permute.xlu0 %665
      %667 = vrot.lane.b32.xlu0 %v478, 8
      %v668 = vpop.permute.xlu0 %667
      %669 = vrot.lane.b32.xlu0 %v481, 8
      %v670 = vpop.permute.xlu0 %669
      %671 = vrot.lane.b32.xlu0 %v483, 8
      %v672 = vpop.permute.xlu0 %671
      %673 = vrot.lane.b32.xlu0 %v486, 8
      %v674 = vpop.permute.xlu0 %673
      %675 = vrot.lane.b32.xlu0 %v488, 8
      %v676 = vpop.permute.xlu0 %675
      %677 = vrot.lane.b32.xlu0 %v491, 8
      %v678 = vpop.permute.xlu0 %677
      %679 = vrot.lane.b32.xlu0 %v493, 8
      %v680 = vpop.permute.xlu0 %679
      %681 = vrot.lane.b32.xlu0 %v496, 8
      %v682 = vpop.permute.xlu0 %681
      %683 = vrot.lane.b32.xlu0 %v498, 8
      %v684 = vpop.permute.xlu0 %683
      %717 = vrot.lane.b32.xlu0 %v238, 12
      %v718 = vpop.permute.xlu0 %717
      %719 = vrot.lane.b32.xlu0 %v239, 12
      %v720 = vpop.permute.xlu0 %719
      %721 = vrot.lane.b32.xlu0 %v241, 12
      %v722 = vpop.permute.xlu0 %721
      %723 = vrot.lane.b32.xlu0 %v242, 12
      %v724 = vpop.permute.xlu0 %723
      %725 = vrot.lane.b32.xlu0 %v244, 12
      %v726 = vpop.permute.xlu0 %725
      %727 = vrot.lane.b32.xlu0 %v245, 12
      %v728 = vpop.permute.xlu0 %727
      %729 = vrot.lane.b32.xlu0 %v247, 12
      %v730 = vpop.permute.xlu0 %729
      %731 = vrot.lane.b32.xlu0 %v248, 12
      %v732 = vpop.permute.xlu0 %731
      %733 = vrot.lane.b32.xlu0 %v250, 12
      %v734 = vpop.permute.xlu0 %733
      %735 = vrot.lane.b32.xlu0 %v251, 12
      %v736 = vpop.permute.xlu0 %735
      %737 = vrot.lane.b32.xlu0 %v253, 12
      %v738 = vpop.permute.xlu0 %737
      %739 = vrot.lane.b32.xlu0 %v254, 12
      %v740 = vpop.permute.xlu0 %739
      %741 = vrot.lane.b32.xlu0 %v256, 12
      %v742 = vpop.permute.xlu0 %741
      %743 = vrot.lane.b32.xlu0 %v257, 12
      %v744 = vpop.permute.xlu0 %743
      %745 = vrot.lane.b32.xlu0 %v259, 12
      %v746 = vpop.permute.xlu0 %745
      %747 = vrot.lane.b32.xlu0 %v260, 12
      %v748 = vpop.permute.xlu0 %747
      %749 = vrot.lane.b32.xlu0 %v262, 12
      %v750 = vpop.permute.xlu0 %749
      %751 = vrot.lane.b32.xlu0 %v263, 12
      %v752 = vpop.permute.xlu0 %751
      %753 = vrot.lane.b32.xlu0 %v265, 12
      %v754 = vpop.permute.xlu0 %753
      %755 = vrot.lane.b32.xlu0 %v266, 12
      %v756 = vpop.permute.xlu0 %755
      %757 = vrot.lane.b32.xlu0 %v268, 12
      %v758 = vpop.permute.xlu0 %757
      %759 = vrot.lane.b32.xlu0 %v269, 12
      %v760 = vpop.permute.xlu0 %759
      %761 = vrot.lane.b32.xlu0 %v271, 12
      %v762 = vpop.permute.xlu0 %761
      %763 = vrot.lane.b32.xlu0 %v272, 12
      %v764 = vpop.permute.xlu0 %763
      %765 = vrot.lane.b32.xlu0 %v274, 12
      %v766 = vpop.permute.xlu0 %765
      %767 = vrot.lane.b32.xlu0 %v275, 12
      %v768 = vpop.permute.xlu0 %767
      %769 = vrot.lane.b32.xlu0 %v277, 12
      %v770 = vpop.permute.xlu0 %769
      %771 = vrot.lane.b32.xlu0 %v278, 12
      %v772 = vpop.permute.xlu0 %771
      %773 = vrot.lane.b32.xlu0 %v280, 12
      %v774 = vpop.permute.xlu0 %773
      %775 = vrot.lane.b32.xlu0 %v281, 12
      %v776 = vpop.permute.xlu0 %775
      %777 = vrot.lane.b32.xlu0 %v283, 12
      %v778 = vpop.permute.xlu0 %777
      %779 = vrot.lane.b32.xlu0 %v284, 12
      %v780 = vpop.permute.xlu0 %779
      %813 = vrot.lane.b32.xlu0 %v345, 16
      %v814 = vpop.permute.xlu0 %813
      %815 = vrot.lane.b32.xlu0 %v347, 16
      %v816 = vpop.permute.xlu0 %815
      %817 = vrot.lane.b32.xlu0 %v350, 16
      %v818 = vpop.permute.xlu0 %817
      %819 = vrot.lane.b32.xlu0 %v352, 16
      %v820 = vpop.permute.xlu0 %819
      %821 = vrot.lane.b32.xlu0 %v355, 16
      %v822 = vpop.permute.xlu0 %821
      %823 = vrot.lane.b32.xlu0 %v357, 16
      %v824 = vpop.permute.xlu0 %823
      %825 = vrot.lane.b32.xlu0 %v360, 16
      %v826 = vpop.permute.xlu0 %825
      %827 = vrot.lane.b32.xlu0 %v362, 16
      %v828 = vpop.permute.xlu0 %827
      %829 = vrot.lane.b32.xlu0 %v365, 16
      %v830 = vpop.permute.xlu0 %829
      %831 = vrot.lane.b32.xlu0 %v367, 16
      %v832 = vpop.permute.xlu0 %831
      %833 = vrot.lane.b32.xlu0 %v370, 16
      %v834 = vpop.permute.xlu0 %833
      %835 = vrot.lane.b32.xlu0 %v372, 16
      %v836 = vpop.permute.xlu0 %835
      %837 = vrot.lane.b32.xlu0 %v375, 16
      %v838 = vpop.permute.xlu0 %837
      %839 = vrot.lane.b32.xlu0 %v377, 16
      %v840 = vpop.permute.xlu0 %839
      %841 = vrot.lane.b32.xlu0 %v380, 16
      %v842 = vpop.permute.xlu0 %841
      %843 = vrot.lane.b32.xlu0 %v382, 16
      %v844 = vpop.permute.xlu0 %843
      %845 = vrot.lane.b32.xlu0 %v385, 16
      %v846 = vpop.permute.xlu0 %845
      %847 = vrot.lane.b32.xlu0 %v387, 16
      %v848 = vpop.permute.xlu0 %847
      %849 = vrot.lane.b32.xlu0 %v390, 16
      %v850 = vpop.permute.xlu0 %849
      %851 = vrot.lane.b32.xlu0 %v392, 16
      %v852 = vpop.permute.xlu0 %851
      %853 = vrot.lane.b32.xlu0 %v395, 16
      %v854 = vpop.permute.xlu0 %853
      %855 = vrot.lane.b32.xlu0 %v397, 16
      %v856 = vpop.permute.xlu0 %855
      %857 = vrot.lane.b32.xlu0 %v400, 16
      %v858 = vpop.permute.xlu0 %857
      %859 = vrot.lane.b32.xlu0 %v402, 16
      %v860 = vpop.permute.xlu0 %859
      %861 = vrot.lane.b32.xlu0 %v405, 16
      %v862 = vpop.permute.xlu0 %861
      %863 = vrot.lane.b32.xlu0 %v407, 16
      %v864 = vpop.permute.xlu0 %863
      %865 = vrot.lane.b32.xlu0 %v410, 16
      %v866 = vpop.permute.xlu0 %865
      %867 = vrot.lane.b32.xlu0 %v412, 16
      %v868 = vpop.permute.xlu0 %867
      %869 = vrot.lane.b32.xlu0 %v415, 16
      %v870 = vpop.permute.xlu0 %869
      %871 = vrot.lane.b32.xlu0 %v417, 16
      %v872 = vpop.permute.xlu0 %871
      %873 = vrot.lane.b32.xlu0 %v504, 16
      %v874 = vpop.permute.xlu0 %873
      %875 = vrot.lane.b32.xlu0 %v506, 16
      %v876 = vpop.permute.xlu0 %875
      %909 = vrot.lane.b32.xlu0 %v426, 20
      %v910 = vpop.permute.xlu0 %909
      %911 = vrot.lane.b32.xlu0 %v428, 20
      %v912 = vpop.permute.xlu0 %911
      %913 = vrot.lane.b32.xlu0 %v431, 20
      %v914 = vpop.permute.xlu0 %913
      %915 = vrot.lane.b32.xlu0 %v433, 20
      %v916 = vpop.permute.xlu0 %915
      %917 = vrot.lane.b32.xlu0 %v436, 20
      %v918 = vpop.permute.xlu0 %917
      %919 = vrot.lane.b32.xlu0 %v438, 20
      %v920 = vpop.permute.xlu0 %919
      %921 = vrot.lane.b32.xlu0 %v441, 20
      %v922 = vpop.permute.xlu0 %921
      %923 = vrot.lane.b32.xlu0 %v443, 20
      %v924 = vpop.permute.xlu0 %923
      %925 = vrot.lane.b32.xlu0 %v446, 20
      %v926 = vpop.permute.xlu0 %925
      %927 = vrot.lane.b32.xlu0 %v448, 20
      %v928 = vpop.permute.xlu0 %927
      %929 = vrot.lane.b32.xlu0 %v451, 20
      %v930 = vpop.permute.xlu0 %929
      %931 = vrot.lane.b32.xlu0 %v453, 20
      %v932 = vpop.permute.xlu0 %931
      %933 = vrot.lane.b32.xlu0 %v456, 20
      %v934 = vpop.permute.xlu0 %933
      %935 = vrot.lane.b32.xlu0 %v458, 20
      %v936 = vpop.permute.xlu0 %935
      %937 = vrot.lane.b32.xlu0 %v461, 20
      %v938 = vpop.permute.xlu0 %937
      %939 = vrot.lane.b32.xlu0 %v463, 20
      %v940 = vpop.permute.xlu0 %939
      %941 = vrot.lane.b32.xlu0 %v466, 20
      %v942 = vpop.permute.xlu0 %941
      %943 = vrot.lane.b32.xlu0 %v468, 20
      %v944 = vpop.permute.xlu0 %943
      %945 = vrot.lane.b32.xlu0 %v471, 20
      %v946 = vpop.permute.xlu0 %945
      %947 = vrot.lane.b32.xlu0 %v473, 20
      %v948 = vpop.permute.xlu0 %947
      %949 = vrot.lane.b32.xlu0 %v476, 20
      %v950 = vpop.permute.xlu0 %949
      %951 = vrot.lane.b32.xlu0 %v478, 20
      %v952 = vpop.permute.xlu0 %951
      %953 = vrot.lane.b32.xlu0 %v481, 20
      %v954 = vpop.permute.xlu0 %953
      %955 = vrot.lane.b32.xlu0 %v483, 20
      %v956 = vpop.permute.xlu0 %955
      %957 = vrot.lane.b32.xlu0 %v486, 20
      %v958 = vpop.permute.xlu0 %957
      %959 = vrot.lane.b32.xlu0 %v488, 20
      %v960 = vpop.permute.xlu0 %959
      %961 = vrot.lane.b32.xlu0 %v491, 20
      %v962 = vpop.permute.xlu0 %961
      %963 = vrot.lane.b32.xlu0 %v493, 20
      %v964 = vpop.permute.xlu0 %963
      %965 = vrot.lane.b32.xlu0 %v496, 20
      %v966 = vpop.permute.xlu0 %965
      %967 = vrot.lane.b32.xlu0 %v498, 20
      %v968 = vpop.permute.xlu0 %967
      %969 = vrot.lane.b32.xlu0 %v509, 20
      %v970 = vpop.permute.xlu0 %969
      %971 = vrot.lane.b32.xlu0 %v511, 20
      %v972 = vpop.permute.xlu0 %971
      %1005 = vrot.lane.b32.xlu0 %v241, 24
      %v1006 = vpop.permute.xlu0 %1005
      %1007 = vrot.lane.b32.xlu0 %v242, 24
      %v1008 = vpop.permute.xlu0 %1007
      %1009 = vrot.lane.b32.xlu0 %v244, 24
      %v1010 = vpop.permute.xlu0 %1009
      %1011 = vrot.lane.b32.xlu0 %v245, 24
      %v1012 = vpop.permute.xlu0 %1011
      %1013 = vrot.lane.b32.xlu0 %v247, 24
      %v1014 = vpop.permute.xlu0 %1013
      %1015 = vrot.lane.b32.xlu0 %v248, 24
      %v1016 = vpop.permute.xlu0 %1015
      %1017 = vrot.lane.b32.xlu0 %v250, 24
      %v1018 = vpop.permute.xlu0 %1017
      %1019 = vrot.lane.b32.xlu0 %v251, 24
      %v1020 = vpop.permute.xlu0 %1019
      %1021 = vrot.lane.b32.xlu0 %v253, 24
      %v1022 = vpop.permute.xlu0 %1021
      %1023 = vrot.lane.b32.xlu0 %v254, 24
      %v1024 = vpop.permute.xlu0 %1023
      %1025 = vrot.lane.b32.xlu0 %v256, 24
      %v1026 = vpop.permute.xlu0 %1025
      %1027 = vrot.lane.b32.xlu0 %v257, 24
      %v1028 = vpop.permute.xlu0 %1027
      %1029 = vrot.lane.b32.xlu0 %v259, 24
      %v1030 = vpop.permute.xlu0 %1029
      %1031 = vrot.lane.b32.xlu0 %v260, 24
      %v1032 = vpop.permute.xlu0 %1031
      %1033 = vrot.lane.b32.xlu0 %v262, 24
      %v1034 = vpop.permute.xlu0 %1033
      %1035 = vrot.lane.b32.xlu0 %v263, 24
      %v1036 = vpop.permute.xlu0 %1035
      %1037 = vrot.lane.b32.xlu0 %v265, 24
      %v1038 = vpop.permute.xlu0 %1037
      %1039 = vrot.lane.b32.xlu0 %v266, 24
      %v1040 = vpop.permute.xlu0 %1039
      %1041 = vrot.lane.b32.xlu0 %v268, 24
      %v1042 = vpop.permute.xlu0 %1041
      %1043 = vrot.lane.b32.xlu0 %v269, 24
      %v1044 = vpop.permute.xlu0 %1043
      %1045 = vrot.lane.b32.xlu0 %v271, 24
      %v1046 = vpop.permute.xlu0 %1045
      %1047 = vrot.lane.b32.xlu0 %v272, 24
      %v1048 = vpop.permute.xlu0 %1047
      %1049 = vrot.lane.b32.xlu0 %v274, 24
      %v1050 = vpop.permute.xlu0 %1049
      %1051 = vrot.lane.b32.xlu0 %v275, 24
      %v1052 = vpop.permute.xlu0 %1051
      %1053 = vrot.lane.b32.xlu0 %v277, 24
      %v1054 = vpop.permute.xlu0 %1053
      %1055 = vrot.lane.b32.xlu0 %v278, 24
      %v1056 = vpop.permute.xlu0 %1055
      %1057 = vrot.lane.b32.xlu0 %v280, 24
      %v1058 = vpop.permute.xlu0 %1057
      %1059 = vrot.lane.b32.xlu0 %v281, 24
      %v1060 = vpop.permute.xlu0 %1059
      %1061 = vrot.lane.b32.xlu0 %v283, 24
      %v1062 = vpop.permute.xlu0 %1061
      %1063 = vrot.lane.b32.xlu0 %v284, 24
      %v1064 = vpop.permute.xlu0 %1063
      %1065 = vrot.lane.b32.xlu0 %v286, 24
      %v1066 = vpop.permute.xlu0 %1065
      %1067 = vrot.lane.b32.xlu0 %v287, 24
      %v1068 = vpop.permute.xlu0 %1067
      %1101 = vrot.lane.b32.xlu0 %v350, 28
      %v1102 = vpop.permute.xlu0 %1101
      %1103 = vrot.lane.b32.xlu0 %v352, 28
      %v1104 = vpop.permute.xlu0 %1103
      %1105 = vrot.lane.b32.xlu0 %v355, 28
      %v1106 = vpop.permute.xlu0 %1105
      %1107 = vrot.lane.b32.xlu0 %v357, 28
      %v1108 = vpop.permute.xlu0 %1107
      %1109 = vrot.lane.b32.xlu0 %v360, 28
      %v1110 = vpop.permute.xlu0 %1109
      %1111 = vrot.lane.b32.xlu0 %v362, 28
      %v1112 = vpop.permute.xlu0 %1111
      %1113 = vrot.lane.b32.xlu0 %v365, 28
      %v1114 = vpop.permute.xlu0 %1113
      %1115 = vrot.lane.b32.xlu0 %v367, 28
      %v1116 = vpop.permute.xlu0 %1115
      %1117 = vrot.lane.b32.xlu0 %v370, 28
      %v1118 = vpop.permute.xlu0 %1117
      %1119 = vrot.lane.b32.xlu0 %v372, 28
      %v1120 = vpop.permute.xlu0 %1119
      %1121 = vrot.lane.b32.xlu0 %v375, 28
      %v1122 = vpop.permute.xlu0 %1121
      %1123 = vrot.lane.b32.xlu0 %v377, 28
      %v1124 = vpop.permute.xlu0 %1123
      %1125 = vrot.lane.b32.xlu0 %v380, 28
      %v1126 = vpop.permute.xlu0 %1125
      %1127 = vrot.lane.b32.xlu0 %v382, 28
      %v1128 = vpop.permute.xlu0 %1127
      %1129 = vrot.lane.b32.xlu0 %v385, 28
      %v1130 = vpop.permute.xlu0 %1129
      %1131 = vrot.lane.b32.xlu0 %v387, 28
      %v1132 = vpop.permute.xlu0 %1131
      %1133 = vrot.lane.b32.xlu0 %v390, 28
      %v1134 = vpop.permute.xlu0 %1133
      %1135 = vrot.lane.b32.xlu0 %v392, 28
      %v1136 = vpop.permute.xlu0 %1135
      %1137 = vrot.lane.b32.xlu0 %v395, 28
      %v1138 = vpop.permute.xlu0 %1137
      %1139 = vrot.lane.b32.xlu0 %v397, 28
      %v1140 = vpop.permute.xlu0 %1139
      %1141 = vrot.lane.b32.xlu0 %v400, 28
      %v1142 = vpop.permute.xlu0 %1141
      %1143 = vrot.lane.b32.xlu0 %v402, 28
      %v1144 = vpop.permute.xlu0 %1143
      %1145 = vrot.lane.b32.xlu0 %v405, 28
      %v1146 = vpop.permute.xlu0 %1145
      %1147 = vrot.lane.b32.xlu0 %v407, 28
      %v1148 = vpop.permute.xlu0 %1147
      %1149 = vrot.lane.b32.xlu0 %v410, 28
      %v1150 = vpop.permute.xlu0 %1149
      %1151 = vrot.lane.b32.xlu0 %v412, 28
      %v1152 = vpop.permute.xlu0 %1151
      %1153 = vrot.lane.b32.xlu0 %v415, 28
      %v1154 = vpop.permute.xlu0 %1153
      %1155 = vrot.lane.b32.xlu0 %v417, 28
      %v1156 = vpop.permute.xlu0 %1155
      %1157 = vrot.lane.b32.xlu0 %v504, 28
      %v1158 = vpop.permute.xlu0 %1157
      %1159 = vrot.lane.b32.xlu0 %v506, 28
      %v1160 = vpop.permute.xlu0 %1159
      %1161 = vrot.lane.b32.xlu0 %v517, 28
      %v1162 = vpop.permute.xlu0 %1161
      %1163 = vrot.lane.b32.xlu0 %v519, 28
      %v1164 = vpop.permute.xlu0 %1163
      %1197 = vrot.lane.b32.xlu0 %v431, 32
      %v1198 = vpop.permute.xlu0 %1197
      %1199 = vrot.lane.b32.xlu0 %v433, 32
      %v1200 = vpop.permute.xlu0 %1199
      %1201 = vrot.lane.b32.xlu0 %v436, 32
      %v1202 = vpop.permute.xlu0 %1201
      %1203 = vrot.lane.b32.xlu0 %v438, 32
      %v1204 = vpop.permute.xlu0 %1203
      %1205 = vrot.lane.b32.xlu0 %v441, 32
      %v1206 = vpop.permute.xlu0 %1205
      %1207 = vrot.lane.b32.xlu0 %v443, 32
      %v1208 = vpop.permute.xlu0 %1207
      %1209 = vrot.lane.b32.xlu0 %v446, 32
      %v1210 = vpop.permute.xlu0 %1209
      %1211 = vrot.lane.b32.xlu0 %v448, 32
      %v1212 = vpop.permute.xlu0 %1211
      %1213 = vrot.lane.b32.xlu0 %v451, 32
      %v1214 = vpop.permute.xlu0 %1213
      %1215 = vrot.lane.b32.xlu0 %v453, 32
      %v1216 = vpop.permute.xlu0 %1215
      %1217 = vrot.lane.b32.xlu0 %v456, 32
      %v1218 = vpop.permute.xlu0 %1217
      %1219 = vrot.lane.b32.xlu0 %v458, 32
      %v1220 = vpop.permute.xlu0 %1219
      %1221 = vrot.lane.b32.xlu0 %v461, 32
      %v1222 = vpop.permute.xlu0 %1221
      %1223 = vrot.lane.b32.xlu0 %v463, 32
      %v1224 = vpop.permute.xlu0 %1223
      %1225 = vrot.lane.b32.xlu0 %v466, 32
      %v1226 = vpop.permute.xlu0 %1225
      %1227 = vrot.lane.b32.xlu0 %v468, 32
      %v1228 = vpop.permute.xlu0 %1227
      %1229 = vrot.lane.b32.xlu0 %v471, 32
      %v1230 = vpop.permute.xlu0 %1229
      %1231 = vrot.lane.b32.xlu0 %v473, 32
      %v1232 = vpop.permute.xlu0 %1231
      %1233 = vrot.lane.b32.xlu0 %v476, 32
      %v1234 = vpop.permute.xlu0 %1233
      %1235 = vrot.lane.b32.xlu0 %v478, 32
      %v1236 = vpop.permute.xlu0 %1235
      %1237 = vrot.lane.b32.xlu0 %v481, 32
      %v1238 = vpop.permute.xlu0 %1237
      %1239 = vrot.lane.b32.xlu0 %v483, 32
      %v1240 = vpop.permute.xlu0 %1239
      %1241 = vrot.lane.b32.xlu0 %v486, 32
      %v1242 = vpop.permute.xlu0 %1241
      %1243 = vrot.lane.b32.xlu0 %v488, 32
      %v1244 = vpop.permute.xlu0 %1243
      %1245 = vrot.lane.b32.xlu0 %v491, 32
      %v1246 = vpop.permute.xlu0 %1245
      %1247 = vrot.lane.b32.xlu0 %v493, 32
      %v1248 = vpop.permute.xlu0 %1247
      %1249 = vrot.lane.b32.xlu0 %v496, 32
      %v1250 = vpop.permute.xlu0 %1249
      %1251 = vrot.lane.b32.xlu0 %v498, 32
      %v1252 = vpop.permute.xlu0 %1251
      %1253 = vrot.lane.b32.xlu0 %v509, 32
      %v1254 = vpop.permute.xlu0 %1253
      %1255 = vrot.lane.b32.xlu0 %v511, 32
      %v1256 = vpop.permute.xlu0 %1255
      %1257 = vrot.lane.b32.xlu0 %v522, 32
      %v1258 = vpop.permute.xlu0 %1257
      %1259 = vrot.lane.b32.xlu0 %v524, 32
      %v1260 = vpop.permute.xlu0 %1259
      %vm1293 = vcmask 31744
      %v1294 = vsel %vm1293, %v235, %v526
      %v1295 = vsel %vm1293, %v236, %v528
      %v1296 = vsel %vm1293, %v238, %v530
      %v1297 = vsel %vm1293, %v239, %v532
      %v1298 = vsel %vm1293, %v241, %v534
      %v1299 = vsel %vm1293, %v242, %v536
      %v1300 = vsel %vm1293, %v244, %v538
      %v1301 = vsel %vm1293, %v245, %v540
      %v1302 = vsel %vm1293, %v247, %v542
      %v1303 = vsel %vm1293, %v248, %v544
      %v1304 = vsel %vm1293, %v250, %v546
      %v1305 = vsel %vm1293, %v251, %v548
      %v1306 = vsel %vm1293, %v253, %v550
      %v1307 = vsel %vm1293, %v254, %v552
      %v1308 = vsel %vm1293, %v256, %v554
      %v1309 = vsel %vm1293, %v257, %v556
      %v1310 = vsel %vm1293, %v259, %v558
      %v1311 = vsel %vm1293, %v260, %v560
      %v1312 = vsel %vm1293, %v262, %v562
      %v1313 = vsel %vm1293, %v263, %v564
      %v1314 = vsel %vm1293, %v265, %v566
      %v1315 = vsel %vm1293, %v266, %v568
      %v1316 = vsel %vm1293, %v268, %v570
      %v1317 = vsel %vm1293, %v269, %v572
      %v1318 = vsel %vm1293, %v271, %v574
      %v1319 = vsel %vm1293, %v272, %v576
      %v1320 = vsel %vm1293, %v274, %v578
      %v1321 = vsel %vm1293, %v275, %v580
      %v1322 = vsel %vm1293, %v277, %v582
      %v1323 = vsel %vm1293, %v278, %v584
      %v1324 = vsel %vm1293, %v280, %v586
      %v1325 = vsel %vm1293, %v281, %v588
      %vm1326 = vcmask 64512
      %v1327 = vsel %vm1326, %v1294, %v622
      %v1328 = vsel %vm1326, %v1295, %v624
      %v1329 = vsel %vm1326, %v1296, %v626
      %v1330 = vsel %vm1326, %v1297, %v628
      %v1331 = vsel %vm1326, %v1298, %v630
      %v1332 = vsel %vm1326, %v1299, %v632
      %v1333 = vsel %vm1326, %v1300, %v634
      %v1334 = vsel %vm1326, %v1301, %v636
      %v1335 = vsel %vm1326, %v1302, %v638
      %v1336 = vsel %vm1326, %v1303, %v640
      %v1337 = vsel %vm1326, %v1304, %v642
      %v1338 = vsel %vm1326, %v1305, %v644
      %v1339 = vsel %vm1326, %v1306, %v646
      %v1340 = vsel %vm1326, %v1307, %v648
      %v1341 = vsel %vm1326, %v1308, %v650
      %v1342 = vsel %vm1326, %v1309, %v652
      %v1343 = vsel %vm1326, %v1310, %v654
      %v1344 = vsel %vm1326, %v1311, %v656
      %v1345 = vsel %vm1326, %v1312, %v658
      %v1346 = vsel %vm1326, %v1313, %v660
      %v1347 = vsel %vm1326, %v1314, %v662
      %v1348 = vsel %vm1326, %v1315, %v664
      %v1349 = vsel %vm1326, %v1316, %v666
      %v1350 = vsel %vm1326, %v1317, %v668
      %v1351 = vsel %vm1326, %v1318, %v670
      %v1352 = vsel %vm1326, %v1319, %v672
      %v1353 = vsel %vm1326, %v1320, %v674
      %v1354 = vsel %vm1326, %v1321, %v676
      %v1355 = vsel %vm1326, %v1322, %v678
      %v1356 = vsel %vm1326, %v1323, %v680
      %v1357 = vsel %vm1326, %v1324, %v682
      %v1358 = vsel %vm1326, %v1325, %v684
      %vm1359 = vcmask 97280
      %v1360 = vsel %vm1359, %v1327, %v718
      %v1361 = vsel %vm1359, %v1328, %v720
      %v1362 = vsel %vm1359, %v1329, %v722
      %v1363 = vsel %vm1359, %v1330, %v724
      %v1364 = vsel %vm1359, %v1331, %v726
      %v1365 = vsel %vm1359, %v1332, %v728
      %v1366 = vsel %vm1359, %v1333, %v730
      %v1367 = vsel %vm1359, %v1334, %v732
      %v1368 = vsel %vm1359, %v1335, %v734
      %v1369 = vsel %vm1359, %v1336, %v736
      %v1370 = vsel %vm1359, %v1337, %v738
      %v1371 = vsel %vm1359, %v1338, %v740
      %v1372 = vsel %vm1359, %v1339, %v742
      %v1373 = vsel %vm1359, %v1340, %v744
      %v1374 = vsel %vm1359, %v1341, %v746
      %v1375 = vsel %vm1359, %v1342, %v748
      %v1376 = vsel %vm1359, %v1343, %v750
      %v1377 = vsel %vm1359, %v1344, %v752
      %v1378 = vsel %vm1359, %v1345, %v754
      %v1379 = vsel %vm1359, %v1346, %v756
      %v1380 = vsel %vm1359, %v1347, %v758
      %v1381 = vsel %vm1359, %v1348, %v760
      %v1382 = vsel %vm1359, %v1349, %v762
      %v1383 = vsel %vm1359, %v1350, %v764
      %v1384 = vsel %vm1359, %v1351, %v766
      %v1385 = vsel %vm1359, %v1352, %v768
      %v1386 = vsel %vm1359, %v1353, %v770
      %v1387 = vsel %vm1359, %v1354, %v772
      %v1388 = vsel %vm1359, %v1355, %v774
      %v1389 = vsel %vm1359, %v1356, %v776
      %v1390 = vsel %vm1359, %v1357, %v778
      %v1391 = vsel %vm1359, %v1358, %v780
      %vm1392 = vcmask 130048
      %v1393 = vsel %vm1392, %v1360, %v814
      %v1394 = vsel %vm1392, %v1361, %v816
      %v1395 = vsel %vm1392, %v1362, %v818
      %v1396 = vsel %vm1392, %v1363, %v820
      %v1397 = vsel %vm1392, %v1364, %v822
      %v1398 = vsel %vm1392, %v1365, %v824
      %v1399 = vsel %vm1392, %v1366, %v826
      %v1400 = vsel %vm1392, %v1367, %v828
      %v1401 = vsel %vm1392, %v1368, %v830
      %v1402 = vsel %vm1392, %v1369, %v832
      %v1403 = vsel %vm1392, %v1370, %v834
      %v1404 = vsel %vm1392, %v1371, %v836
      %v1405 = vsel %vm1392, %v1372, %v838
      %v1406 = vsel %vm1392, %v1373, %v840
      %v1407 = vsel %vm1392, %v1374, %v842
      %v1408 = vsel %vm1392, %v1375, %v844
      %v1409 = vsel %vm1392, %v1376, %v846
      %v1410 = vsel %vm1392, %v1377, %v848
      %v1411 = vsel %vm1392, %v1378, %v850
      %v1412 = vsel %vm1392, %v1379, %v852
      %v1413 = vsel %vm1392, %v1380, %v854
      %v1414 = vsel %vm1392, %v1381, %v856
      %v1415 = vsel %vm1392, %v1382, %v858
      %v1416 = vsel %vm1392, %v1383, %v860
      %v1417 = vsel %vm1392, %v1384, %v862
      %v1418 = vsel %vm1392, %v1385, %v864
      %v1419 = vsel %vm1392, %v1386, %v866
      %v1420 = vsel %vm1392, %v1387, %v868
      %v1421 = vsel %vm1392, %v1388, %v870
      %v1422 = vsel %vm1392, %v1389, %v872
      %v1423 = vsel %vm1392, %v1390, %v874
      %v1424 = vsel %vm1392, %v1391, %v876
      %vm1425 = vcmask 162816
      %v1426 = vsel %vm1425, %v1393, %v910
      %v1427 = vsel %vm1425, %v1394, %v912
      %v1428 = vsel %vm1425, %v1395, %v914
      %v1429 = vsel %vm1425, %v1396, %v916
      %v1430 = vsel %vm1425, %v1397, %v918
      %v1431 = vsel %vm1425, %v1398, %v920
      %v1432 = vsel %vm1425, %v1399, %v922
      %v1433 = vsel %vm1425, %v1400, %v924
      %v1434 = vsel %vm1425, %v1401, %v926
      %v1435 = vsel %vm1425, %v1402, %v928
      %v1436 = vsel %vm1425, %v1403, %v930
      %v1437 = vsel %vm1425, %v1404, %v932
      %v1438 = vsel %vm1425, %v1405, %v934
      %v1439 = vsel %vm1425, %v1406, %v936
      %v1440 = vsel %vm1425, %v1407, %v938
      %v1441 = vsel %vm1425, %v1408, %v940
      %v1442 = vsel %vm1425, %v1409, %v942
      %v1443 = vsel %vm1425, %v1410, %v944
      %v1444 = vsel %vm1425, %v1411, %v946
      %v1445 = vsel %vm1425, %v1412, %v948
      %v1446 = vsel %vm1425, %v1413, %v950
      %v1447 = vsel %vm1425, %v1414, %v952
      %v1448 = vsel %vm1425, %v1415, %v954
      %v1449 = vsel %vm1425, %v1416, %v956
      %v1450 = vsel %vm1425, %v1417, %v958
      %v1451 = vsel %vm1425, %v1418, %v960
      %v1452 = vsel %vm1425, %v1419, %v962
      %v1453 = vsel %vm1425, %v1420, %v964
      %v1454 = vsel %vm1425, %v1421, %v966
      %v1455 = vsel %vm1425, %v1422, %v968
      %v1456 = vsel %vm1425, %v1423, %v970
      %v1457 = vsel %vm1425, %v1424, %v972
      %vm1458 = vcmask 195584
      %v1459 = vsel %vm1458, %v1426, %v1006
      %v1460 = vsel %vm1458, %v1427, %v1008
      %v1461 = vsel %vm1458, %v1428, %v1010
      %v1462 = vsel %vm1458, %v1429, %v1012
      %v1463 = vsel %vm1458, %v1430, %v1014
      %v1464 = vsel %vm1458, %v1431, %v1016
      %v1465 = vsel %vm1458, %v1432, %v1018
      %v1466 = vsel %vm1458, %v1433, %v1020
      %v1467 = vsel %vm1458, %v1434, %v1022
      %v1468 = vsel %vm1458, %v1435, %v1024
      %v1469 = vsel %vm1458, %v1436, %v1026
      %v1470 = vsel %vm1458, %v1437, %v1028
      %v1471 = vsel %vm1458, %v1438, %v1030
      %v1472 = vsel %vm1458, %v1439, %v1032
      %v1473 = vsel %vm1458, %v1440, %v1034
      %v1474 = vsel %vm1458, %v1441, %v1036
      %v1475 = vsel %vm1458, %v1442, %v1038
      %v1476 = vsel %vm1458, %v1443, %v1040
      %v1477 = vsel %vm1458, %v1444, %v1042
      %v1478 = vsel %vm1458, %v1445, %v1044
      %v1479 = vsel %vm1458, %v1446, %v1046
      %v1480 = vsel %vm1458, %v1447, %v1048
      %v1481 = vsel %vm1458, %v1448, %v1050
      %v1482 = vsel %vm1458, %v1449, %v1052
      %v1483 = vsel %vm1458, %v1450, %v1054
      %v1484 = vsel %vm1458, %v1451, %v1056
      %v1485 = vsel %vm1458, %v1452, %v1058
      %v1486 = vsel %vm1458, %v1453, %v1060
      %v1487 = vsel %vm1458, %v1454, %v1062
      %v1488 = vsel %vm1458, %v1455, %v1064
      %v1489 = vsel %vm1458, %v1456, %v1066
      %v1490 = vsel %vm1458, %v1457, %v1068
      %vm1491 = vcmask 228352
      %v1492 = vsel %vm1491, %v1459, %v1102
      %v1493 = vsel %vm1491, %v1460, %v1104
      %v1494 = vsel %vm1491, %v1461, %v1106
      %v1495 = vsel %vm1491, %v1462, %v1108
      %v1496 = vsel %vm1491, %v1463, %v1110
      %v1497 = vsel %vm1491, %v1464, %v1112
      %v1498 = vsel %vm1491, %v1465, %v1114
      %v1499 = vsel %vm1491, %v1466, %v1116
      %v1500 = vsel %vm1491, %v1467, %v1118
      %v1501 = vsel %vm1491, %v1468, %v1120
      %v1502 = vsel %vm1491, %v1469, %v1122
      %v1503 = vsel %vm1491, %v1470, %v1124
      %v1504 = vsel %vm1491, %v1471, %v1126
      %v1505 = vsel %vm1491, %v1472, %v1128
      %v1506 = vsel %vm1491, %v1473, %v1130
      %v1507 = vsel %vm1491, %v1474, %v1132
      %v1508 = vsel %vm1491, %v1475, %v1134
      %v1509 = vsel %vm1491, %v1476, %v1136
      %v1510 = vsel %vm1491, %v1477, %v1138
      %v1511 = vsel %vm1491, %v1478, %v1140
      %v1512 = vsel %vm1491, %v1479, %v1142
      %v1513 = vsel %vm1491, %v1480, %v1144
      %v1514 = vsel %vm1491, %v1481, %v1146
      %v1515 = vsel %vm1491, %v1482, %v1148
      %v1516 = vsel %vm1491, %v1483, %v1150
      %v1517 = vsel %vm1491, %v1484, %v1152
      %v1518 = vsel %vm1491, %v1485, %v1154
      %v1519 = vsel %vm1491, %v1486, %v1156
      %v1520 = vsel %vm1491, %v1487, %v1158
      %v1521 = vsel %vm1491, %v1488, %v1160
      %v1522 = vsel %vm1491, %v1489, %v1162
      %v1523 = vsel %vm1491, %v1490, %v1164
      %vm1524 = vcmask 261120
      %v1525 = vsel %vm1524, %v1492, %v1198
      %v1526 = vsel %vm1524, %v1493, %v1200
      %v1527 = vsel %vm1524, %v1494, %v1202
      %v1528 = vsel %vm1524, %v1495, %v1204
      %v1529 = vsel %vm1524, %v1496, %v1206
      %v1530 = vsel %vm1524, %v1497, %v1208
      %v1531 = vsel %vm1524, %v1498, %v1210
      %v1532 = vsel %vm1524, %v1499, %v1212
      %v1533 = vsel %vm1524, %v1500, %v1214
      %v1534 = vsel %vm1524, %v1501, %v1216
      %v1535 = vsel %vm1524, %v1502, %v1218
      %v1536 = vsel %vm1524, %v1503, %v1220
      %v1537 = vsel %vm1524, %v1504, %v1222
      %v1538 = vsel %vm1524, %v1505, %v1224
      %v1539 = vsel %vm1524, %v1506, %v1226
      %v1540 = vsel %vm1524, %v1507, %v1228
      %v1541 = vsel %vm1524, %v1508, %v1230
      %v1542 = vsel %vm1524, %v1509, %v1232
      %v1543 = vsel %vm1524, %v1510, %v1234
      %v1544 = vsel %vm1524, %v1511, %v1236
      %v1545 = vsel %vm1524, %v1512, %v1238
      %v1546 = vsel %vm1524, %v1513, %v1240
      %v1547 = vsel %vm1524, %v1514, %v1242
      %v1548 = vsel %vm1524, %v1515, %v1244
      %v1549 = vsel %vm1524, %v1516, %v1246
      %v1550 = vsel %vm1524, %v1517, %v1248
      %v1551 = vsel %vm1524, %v1518, %v1250
      %v1552 = vsel %vm1524, %v1519, %v1252
      %v1553 = vsel %vm1524, %v1520, %v1254
      %v1554 = vsel %vm1524, %v1521, %v1256
      %v1555 = vsel %vm1524, %v1522, %v1258
      %v1556 = vsel %vm1524, %v1523, %v1260
      %v1557 = vld [vmem:[%s1] sm:$0xff]
      %v1558 = vld [vmem:[%s1 + $0x8] sm:$0xff]
      %v1559 = vld [vmem:[%s1 + $0x10] sm:$0xff]
      %v1560 = vld [vmem:[%s1 + $0x18] sm:$0xff]
      %v1561 = vld [vmem:[%s1 + $0x20] sm:$0xf]
      %vm1562 = vcmask 293888
      %v1564 = vsel %vm1562, %v1525, 0
      %v1567 = vsel %vm1562, %v1526, 0
      %v1570 = vsel %vm1562, %v1527, 0
      %v1573 = vsel %vm1562, %v1528, 0
      %v1576 = vsel %vm1562, %v1529, 0
      %v1579 = vsel %vm1562, %v1530, 0
      %v1582 = vsel %vm1562, %v1531, 0
      %v1585 = vsel %vm1562, %v1532, 0
      %v1588 = vsel %vm1562, %v1533, 0
      %v1591 = vsel %vm1562, %v1534, 0
      %v1594 = vsel %vm1562, %v1535, 0
      %v1597 = vsel %vm1562, %v1536, 0
      %v1600 = vsel %vm1562, %v1537, 0
      %v1603 = vsel %vm1562, %v1538, 0
      %v1606 = vsel %vm1562, %v1539, 0
      %v1609 = vsel %vm1562, %v1540, 0
      %v1612 = vsel %vm1562, %v1541, 0
      %v1615 = vsel %vm1562, %v1542, 0
      %v1618 = vsel %vm1562, %v1543, 0
      %v1621 = vsel %vm1562, %v1544, 0
      %v1624 = vsel %vm1562, %v1545, 0
      %v1627 = vsel %vm1562, %v1546, 0
      %v1630 = vsel %vm1562, %v1547, 0
      %v1633 = vsel %vm1562, %v1548, 0
      %v1636 = vsel %vm1562, %v1549, 0
      %v1639 = vsel %vm1562, %v1550, 0
      %v1642 = vsel %vm1562, %v1551, 0
      %v1645 = vsel %vm1562, %v1552, 0
      %v1648 = vsel %vm1562, %v1553, 0
      %v1651 = vsel %vm1562, %v1554, 0
      %v1654 = vsel %vm1562, %v1555, 0
      %v1657 = vsel %vm1562, %v1556, 0
      %vm1659 = vcmask 1043456
      %v1661 = vsel %vm1659, %v1561, 0
      %1663 = vmatprep.subr.mxu0 0.0
      %1664 = vmatpush1.msra.mxu0 0.0
      %1665 = vmatprep.subr.mxu0 0.0
      %1666 = vmatpush1.msra.mxu0 0.0
      %1667 = vmatprep.subr.mxu0 0.0
      %1668 = vmatpush1.msra.mxu0 0.0
      %1669 = vmatprep.subr.mxu0 0.0
      %1670 = vmatpush1.msra.mxu0 0.0
      %1671 = vmatprep.subr.mxu0 0.0
      %1672 = vmatpush1.msra.mxu0 0.0
      %1673 = vmatprep.subr.mxu0 0.0
      %1674 = vmatpush1.msra.mxu0 0.0
      %1675 = vmatprep.subr.mxu0 0.0
      %1676 = vmatpush1.msra.mxu0 0.0
      %1677 = vmatprep.subr.mxu0 0.0
      %1678 = vmatpush1.msra.mxu0 0.0
      %1679 = vmatprep.subr.mxu0 0.0
      %1680 = vmatpush1.msra.mxu0 0.0
      %1681 = vmatprep.subr.mxu0 0.0
      %1682 = vmatpush1.msra.mxu0 0.0
      %1683 = vmatprep.subr.mxu0 0.0
      %1684 = vmatpush1.msra.mxu0 0.0
      %1685 = vmatprep.subr.mxu0 0.0
      %1686 = vmatpush1.msra.mxu0 %v1661
      %1687 = vmatprep.subr.mxu0 0.0
      %1688 = vmatpush1.msra.mxu0 %v1560
      %1689 = vmatprep.subr.mxu0 0.0
      %1690 = vmatpush1.msra.mxu0 %v1559
      %1691 = vmatprep.subr.mxu0 0.0
      %1692 = vmatpush1.msra.mxu0 %v1558
      %1693 = vmatprep.subr.mxu0 0.0
      %1694 = vmatpush1.msra.mxu0 %v1557
      %1695 = vmatprep.subr.mxu0 0.0
      %1696 = vmatpush2.msra.mxu0 0.0
      %1697 = vmatprep.subr.mxu0 0.0
      %1698 = vmatpush2.msra.mxu0 0.0
      %1699 = vmatprep.subr.mxu0 0.0
      %1700 = vmatpush2.msra.mxu0 0.0
      %1701 = vmatprep.subr.mxu0 0.0
      %1702 = vmatpush2.msra.mxu0 0.0
      %1703 = vmatprep.subr.mxu0 0.0
      %1704 = vmatpush2.msra.mxu0 0.0
      %1705 = vmatprep.subr.mxu0 0.0
      %1706 = vmatpush2.msra.mxu0 0.0
      %1707 = vmatprep.subr.mxu0 0.0
      %1708 = vmatpush2.msra.mxu0 0.0
      %1709 = vmatprep.subr.mxu0 0.0
      %1710 = vmatpush2.msra.mxu0 0.0
      %1711 = vmatprep.subr.mxu0 0.0
      %1712 = vmatpush2.msra.mxu0 0.0
      %1713 = vmatprep.subr.mxu0 0.0
      %1714 = vmatpush2.msra.mxu0 0.0
      %1715 = vmatprep.subr.mxu0 0.0
      %1716 = vmatpush2.msra.mxu0 0.0
      %1717 = vmatprep.subr.mxu0 0.0
      %1718 = vmatpush2.msra.mxu0 0.0
      %1719 = vmatprep.subr.mxu0 0.0
      %1720 = vmatpush2.msra.mxu0 0.0
      %1721 = vmatprep.subr.mxu0 0.0
      %1722 = vmatpush2.msra.mxu0 0.0
      %1723 = vmatprep.subr.mxu0 0.0
      %1724 = vmatpush2.msra.mxu0 0.0
      %1725 = vmatprep.subr.mxu0 0.0
      %1726 = vmatpush2.msra.mxu0 0.0
      %1727 = vmatprep.mubr.f32.mxu0 0.0
      %1728 = vmatmul.mubr.f32.gmra.mxu0 %v1564
      %v1729 = vpop.f32.mrf.mxu0
      %v1730 = vadd.f32 0.0, %v1729
      %v1731 = vpop.f32.mrf.mxu0
      %1732 = vmatprep.mubr.f32.mxu0 0.0
      %1733 = vmatmul.mubr.f32.gmra.mxu0 %v1567
      %v1734 = vpop.f32.mrf.mxu0
      %v1735 = vadd.f32 0.0, %v1734
      %v1736 = vpop.f32.mrf.mxu0
      %1737 = vmatprep.mubr.f32.mxu0 0.0
      %1738 = vmatmul.mubr.f32.gmra.mxu0 %v1570
      %v1739 = vpop.f32.mrf.mxu0
      %v1740 = vadd.f32 0.0, %v1739
      %v1741 = vpop.f32.mrf.mxu0
      %1742 = vmatprep.mubr.f32.mxu0 0.0
      %1743 = vmatmul.mubr.f32.gmra.mxu0 %v1573
      %v1744 = vpop.f32.mrf.mxu0
      %v1745 = vadd.f32 0.0, %v1744
      %v1746 = vpop.f32.mrf.mxu0
      %1747 = vmatprep.mubr.f32.mxu0 0.0
      %1748 = vmatmul.mubr.f32.gmra.mxu0 %v1576
      %v1749 = vpop.f32.mrf.mxu0
      %v1750 = vadd.f32 0.0, %v1749
      %v1751 = vpop.f32.mrf.mxu0
      %1752 = vmatprep.mubr.f32.mxu0 0.0
      %1753 = vmatmul.mubr.f32.gmra.mxu0 %v1579
      %v1754 = vpop.f32.mrf.mxu0
      %v1755 = vadd.f32 0.0, %v1754
      %v1756 = vpop.f32.mrf.mxu0
      %1757 = vmatprep.mubr.f32.mxu0 0.0
      %1758 = vmatmul.mubr.f32.gmra.mxu0 %v1582
      %v1759 = vpop.f32.mrf.mxu0
      %v1760 = vadd.f32 0.0, %v1759
      %v1761 = vpop.f32.mrf.mxu0
      %1762 = vmatprep.mubr.f32.mxu0 0.0
      %1763 = vmatmul.mubr.f32.gmra.mxu0 %v1585
      %v1764 = vpop.f32.mrf.mxu0
      %v1765 = vadd.f32 0.0, %v1764
      %v1766 = vpop.f32.mrf.mxu0
      %1767 = vmatprep.mubr.f32.mxu0 0.0
      %1768 = vmatmul.mubr.f32.gmra.mxu0 %v1588
      %v1769 = vpop.f32.mrf.mxu0
      %v1770 = vadd.f32 0.0, %v1769
      %v1771 = vpop.f32.mrf.mxu0
      %1772 = vmatprep.mubr.f32.mxu0 0.0
      %1773 = vmatmul.mubr.f32.gmra.mxu0 %v1591
      %v1774 = vpop.f32.mrf.mxu0
      %v1775 = vadd.f32 0.0, %v1774
      %v1776 = vpop.f32.mrf.mxu0
      %1777 = vmatprep.mubr.f32.mxu0 0.0
      %1778 = vmatmul.mubr.f32.gmra.mxu0 %v1594
      %v1779 = vpop.f32.mrf.mxu0
      %v1780 = vadd.f32 0.0, %v1779
      %v1781 = vpop.f32.mrf.mxu0
      %1782 = vmatprep.mubr.f32.mxu0 0.0
      %1783 = vmatmul.mubr.f32.gmra.mxu0 %v1597
      %v1784 = vpop.f32.mrf.mxu0
      %v1785 = vadd.f32 0.0, %v1784
      %v1786 = vpop.f32.mrf.mxu0
      %1787 = vmatprep.mubr.f32.mxu0 0.0
      %1788 = vmatmul.mubr.f32.gmra.mxu0 %v1600
      %v1789 = vpop.f32.mrf.mxu0
      %v1790 = vadd.f32 0.0, %v1789
      %v1791 = vpop.f32.mrf.mxu0
      %1792 = vmatprep.mubr.f32.mxu0 0.0
      %1793 = vmatmul.mubr.f32.gmra.mxu0 %v1603
      %v1794 = vpop.f32.mrf.mxu0
      %v1795 = vadd.f32 0.0, %v1794
      %v1796 = vpop.f32.mrf.mxu0
      %1797 = vmatprep.mubr.f32.mxu0 0.0
      %1798 = vmatmul.mubr.f32.gmra.mxu0 %v1606
      %v1799 = vpop.f32.mrf.mxu0
      %v1800 = vadd.f32 0.0, %v1799
      %v1801 = vpop.f32.mrf.mxu0
      %1802 = vmatprep.mubr.f32.mxu0 0.0
      %1803 = vmatmul.mubr.f32.gmra.mxu0 %v1609
      %v1804 = vpop.f32.mrf.mxu0
      %v1805 = vadd.f32 0.0, %v1804
      %v1806 = vpop.f32.mrf.mxu0
      %1807 = vmatprep.mubr.f32.mxu0 0.0
      %1808 = vmatmul.mubr.f32.gmra.mxu0 %v1612
      %v1809 = vpop.f32.mrf.mxu0
      %v1810 = vadd.f32 0.0, %v1809
      %v1811 = vpop.f32.mrf.mxu0
      %1812 = vmatprep.mubr.f32.mxu0 0.0
      %1813 = vmatmul.mubr.f32.gmra.mxu0 %v1615
      %v1814 = vpop.f32.mrf.mxu0
      %v1815 = vadd.f32 0.0, %v1814
      %v1816 = vpop.f32.mrf.mxu0
      %1817 = vmatprep.mubr.f32.mxu0 0.0
      %1818 = vmatmul.mubr.f32.gmra.mxu0 %v1618
      %v1819 = vpop.f32.mrf.mxu0
      %v1820 = vadd.f32 0.0, %v1819
      %v1821 = vpop.f32.mrf.mxu0
      %1822 = vmatprep.mubr.f32.mxu0 0.0
      %1823 = vmatmul.mubr.f32.gmra.mxu0 %v1621
      %v1824 = vpop.f32.mrf.mxu0
      %v1825 = vadd.f32 0.0, %v1824
      %v1826 = vpop.f32.mrf.mxu0
      %1827 = vmatprep.mubr.f32.mxu0 0.0
      %1828 = vmatmul.mubr.f32.gmra.mxu0 %v1624
      %v1829 = vpop.f32.mrf.mxu0
      %v1830 = vadd.f32 0.0, %v1829
      %v1831 = vpop.f32.mrf.mxu0
      %1832 = vmatprep.mubr.f32.mxu0 0.0
      %1833 = vmatmul.mubr.f32.gmra.mxu0 %v1627
      %v1834 = vpop.f32.mrf.mxu0
      %v1835 = vadd.f32 0.0, %v1834
      %v1836 = vpop.f32.mrf.mxu0
      %1837 = vmatprep.mubr.f32.mxu0 0.0
      %1838 = vmatmul.mubr.f32.gmra.mxu0 %v1630
      %v1839 = vpop.f32.mrf.mxu0
      %v1840 = vadd.f32 0.0, %v1839
      %v1841 = vpop.f32.mrf.mxu0
      %1842 = vmatprep.mubr.f32.mxu0 0.0
      %1843 = vmatmul.mubr.f32.gmra.mxu0 %v1633
      %v1844 = vpop.f32.mrf.mxu0
      %v1845 = vadd.f32 0.0, %v1844
      %v1846 = vpop.f32.mrf.mxu0
      %1847 = vmatprep.mubr.f32.mxu0 0.0
      %1848 = vmatmul.mubr.f32.gmra.mxu0 %v1636
      %v1849 = vpop.f32.mrf.mxu0
      %v1850 = vadd.f32 0.0, %v1849
      %v1851 = vpop.f32.mrf.mxu0
      %1852 = vmatprep.mubr.f32.mxu0 0.0
      %1853 = vmatmul.mubr.f32.gmra.mxu0 %v1639
      %v1854 = vpop.f32.mrf.mxu0
      %v1855 = vadd.f32 0.0, %v1854
      %v1856 = vpop.f32.mrf.mxu0
      %1857 = vmatprep.mubr.f32.mxu0 0.0
      %1858 = vmatmul.mubr.f32.gmra.mxu0 %v1642
      %v1859 = vpop.f32.mrf.mxu0
      %v1860 = vadd.f32 0.0, %v1859
      %v1861 = vpop.f32.mrf.mxu0
      %1862 = vmatprep.mubr.f32.mxu0 0.0
      %1863 = vmatmul.mubr.f32.gmra.mxu0 %v1645
      %v1864 = vpop.f32.mrf.mxu0
      %v1865 = vadd.f32 0.0, %v1864
      %v1866 = vpop.f32.mrf.mxu0
      %1867 = vmatprep.mubr.f32.mxu0 0.0
      %1868 = vmatmul.mubr.f32.gmra.mxu0 %v1648
      %v1869 = vpop.f32.mrf.mxu0
      %v1870 = vadd.f32 0.0, %v1869
      %v1871 = vpop.f32.mrf.mxu0
      %1872 = vmatprep.mubr.f32.mxu0 0.0
      %1873 = vmatmul.mubr.f32.gmra.mxu0 %v1651
      %v1874 = vpop.f32.mrf.mxu0
      %v1875 = vadd.f32 0.0, %v1874
      %v1876 = vpop.f32.mrf.mxu0
      %1877 = vmatprep.mubr.f32.mxu0 0.0
      %1878 = vmatmul.mubr.f32.gmra.mxu0 %v1654
      %v1879 = vpop.f32.mrf.mxu0
      %v1880 = vadd.f32 0.0, %v1879
      %v1881 = vpop.f32.mrf.mxu0
      %1882 = vmatprep.mubr.f32.mxu0 0.0
      %1883 = vmatmul.mubr.f32.gmra.mxu0 %v1657
      %v1884 = vpop.f32.mrf.mxu0
      %v1885 = vadd.f32 0.0, %v1884
      %v1886 = vpop.f32.mrf.mxu0
      %1887 = vdwg.mxu0
      %1888 = vxpose.xlu0.b32.start [1/16] %v1730, 128
      %1889 = vxpose.xlu0.b32.cont [2/16] %v1735, 128
      %1890 = vxpose.xlu0.b32.cont [3/16] %v1740, 128
      %1891 = vxpose.xlu0.b32.cont [4/16] %v1745, 128
      %1892 = vxpose.xlu0.b32.cont [5/16] %v1750, 128
      %1893 = vxpose.xlu0.b32.cont [6/16] %v1755, 128
      %1894 = vxpose.xlu0.b32.cont [7/16] %v1760, 128
      %1895 = vxpose.xlu0.b32.cont [8/16] %v1765, 128
      %1896 = vxpose.xlu0.b32.cont [9/16] %v1770, 128
      %1897 = vxpose.xlu0.b32.cont [10/16] %v1775, 128
      %1898 = vxpose.xlu0.b32.cont [11/16] %v1780, 128
      %1899 = vxpose.xlu0.b32.cont [12/16] %v1785, 128
      %1900 = vxpose.xlu0.b32.cont [13/16] %v1790, 128
      %1901 = vxpose.xlu0.b32.cont [14/16] %v1795, 128
      %1902 = vxpose.xlu0.b32.cont [15/16] %v1800, 128
      %1903 = vxpose.xlu0.b32.end [16/16] %v1805, 128
      %v1904 = vpop.trf.xlu0
      %v1905 = vpop.trf.xlu0
      %v1906 = vpop.trf.xlu0
      %v1907 = vpop.trf.xlu0
      %v1908 = vpop.trf.xlu0
      %v1909 = vpop.trf.xlu0
      %v1910 = vpop.trf.xlu0
      %v1911 = vpop.trf.xlu0
      %v1912 = vpop.trf.xlu0
      %v1913 = vpop.trf.xlu0
      %v1914 = vpop.trf.xlu0
      %v1915 = vpop.trf.xlu0
      %v1916 = vpop.trf.xlu0
      %v1917 = vpop.trf.xlu0
      %v1918 = vpop.trf.xlu0
      %v1919 = vpop.trf.xlu0
      %1920 = vxpose.xlu0.b32.start [1/16] %v1810, 128
      %1921 = vxpose.xlu0.b32.cont [2/16] %v1815, 128
      %1922 = vxpose.xlu0.b32.cont [3/16] %v1820, 128
      %1923 = vxpose.xlu0.b32.cont [4/16] %v1825, 128
      %1924 = vxpose.xlu0.b32.cont [5/16] %v1830, 128
      %1925 = vxpose.xlu0.b32.cont [6/16] %v1835, 128
      %1926 = vxpose.xlu0.b32.cont [7/16] %v1840, 128
      %1927 = vxpose.xlu0.b32.cont [8/16] %v1845, 128
      %1928 = vxpose.xlu0.b32.cont [9/16] %v1850, 128
      %1929 = vxpose.xlu0.b32.cont [10/16] %v1855, 128
      %1930 = vxpose.xlu0.b32.cont [11/16] %v1860, 128
      %1931 = vxpose.xlu0.b32.cont [12/16] %v1865, 128
      %1932 = vxpose.xlu0.b32.cont [13/16] %v1870, 128
      %1933 = vxpose.xlu0.b32.cont [14/16] %v1875, 128
      %1934 = vxpose.xlu0.b32.cont [15/16] %v1880, 128
      %1935 = vxpose.xlu0.b32.end [16/16] %v1885, 128
      %v1936 = vpop.trf.xlu0
      %v1937 = vpop.trf.xlu0
      %v1938 = vpop.trf.xlu0
      %v1939 = vpop.trf.xlu0
      %v1940 = vpop.trf.xlu0
      %v1941 = vpop.trf.xlu0
      %v1942 = vpop.trf.xlu0
      %v1943 = vpop.trf.xlu0
      %v1944 = vpop.trf.xlu0
      %v1945 = vpop.trf.xlu0
      %v1946 = vpop.trf.xlu0
      %v1947 = vpop.trf.xlu0
      %v1948 = vpop.trf.xlu0
      %v1949 = vpop.trf.xlu0
      %v1950 = vpop.trf.xlu0
      %v1951 = vpop.trf.xlu0
      %v1952 = vld [vmem:[%s2] sm:$0xff]
      %1954 = vset.pattern.permute.xlu0 0
      %1955 = vperm.xlu0 %1954, %v1952
      %v1956 = vpop.permute.xlu0 %1955
      %v1958 = vmul.f32 %v1904, %v1956
      %v1959 = vmul.f32 %v1936, %v1956
      %v1960 = vld [vmem:[%s3] sm:$0xff]
      %1962 = vset.pattern.permute.xlu0 0
      %1963 = vperm.xlu0 %1962, %v1960
      %v1964 = vpop.permute.xlu0 %1963
      %v1966 = vadd.f32 %v1958, %v1964
      %v1967 = vadd.f32 %v1959, %v1964
      %v1968 = vtanh.pop %v1966
      %v1969 = vtanh.pop %v1967
      %1970 = vst [vmem:[%s233] sm:$0xff] %v1968
      %1971 = vst [vmem:[%s233 + $0x8] sm:$0xff] %v1969
      %s1972 = smul.u32 2, %s20
      %p1973 = scmp.lt.s32.totalorder %s19, 1
      %s1974 = scalar_select %p1973, %s19, 1
      %p1975 = scmp.lt.s32.totalorder %s1972, 1
      %s1976 = scalar_select %p1975, %s1972, 1
      %s1977 = smul.addr %s1974, 2
      %s1978 = sadd.s32 %s1976, %s1977
      %s1979 = smul.addr %s1978, 8
      %s1980 = scalar_lea.vmem %s4, %s1979
      // Predicated region
      $region37: #{conv_block_tanh.3} parent=35 // pred_check
        %p1981 = pneg %p138
      $region38: #{conv_block_tanh.3} parent=35 // pred_check_branch
        %1983 = sbr.rel (%p1981) target = $region40
      $region39: #{conv_block_tanh.3} parent=35 // pred_region
        %s1984 = smul.u32 2, %s20
      $region40: #{conv_block_tanh.3} parent=35 // pred_fallthru
        _
    $region36: #{conv_block_tanh.3} parent=5 // pred_fallthru
      _
    %p1985 = scmp.le.s32.totalorder 2, %s10
    // Predicated region
    $region41: #{conv_block_tanh.3} parent=5 // pred_check
      %p1986 = pneg %p1985
    $region42: #{conv_block_tanh.3} parent=5 // pred_check_branch
      %1988 = sbr.rel (%p1986) target = $region44
    $region43: #{conv_block_tanh.3} parent=5 // pred_region
      %s1989 = ssub.s32 %s10, 2
      // Predicated region
      $region45: #{conv_block_tanh.3} parent=43 // pred_check
        %p1990 = pneg %p144
      $region46: #{conv_block_tanh.3} parent=43 // pred_check_branch
        %1992 = sbr.rel (%p1990) target = $region48
      $region47: #{conv_block_tanh.3} parent=43 // pred_region
        %s1993 = smul.u32 2, %s22
        %p1994 = scmp.lt.s32.totalorder %s21, 1
        %s1995 = scalar_select %p1994, %s21, 1
        %p1996 = scmp.lt.s32.totalorder %s1993, 1
        %s1997 = scalar_select %p1996, %s1993, 1
        %s1998 = smul.addr %s1995, 2
        %s1999 = sadd.s32 %s1997, %s1998
        %s2000 = smul.addr %s1999, 8
        %s2001 = scalar_lea.vmem %s4, %s2000
      $region48: #{conv_block_tanh.3} parent=43 // pred_fallthru
        _
    $region44: #{conv_block_tanh.3} parent=5 // pred_fallthru
      _
  $region6: #{conv_block_tanh.3} parent=0 // loop_footer
    %s14 = sadd.s32 1, %s10
  $region7: #{conv_block_tanh.3} parent=0 // loop_footer_branch
    %9 = sbr.rel target = $region3
  $region8: #{conv_block_tanh.3} parent=0 // loop_exit
    _

</llo_original>
